<compile_context>
chip_gen: v7x
topology: tpu7x:2x2x1
jax: 0.10.0
libtpu: 0.0.40
codegen_flags: <defaults>
</compile_context>

<pallas_src>
import math

import numpy as np
import jax
import jax.numpy as jnp
from jax import lax
from jax.experimental import pallas as pl
from jax.experimental.pallas import tpu as pltpu

# ----------------------------- model hyper-parameters -----------------------------
VOCAB = 13
VOCAB_PAD = 128                     # lane-dense final projection; sliced to 13 outside
D_MODEL = 64
N_HEADS = 4
HEAD_DIM = D_MODEL // N_HEADS
FF_DIM = 128
ENC_DEPTH = 4
DEC_DEPTH = 2
NUM_PATCHES = 16
MAX_SEQ = 5
S_PAD = 8                           # decoder rows padded 5 -> 8 (unmasked sublane stores)
PATCH = 14
PATCH_DIM = PATCH * PATCH           # 196
PATCH_DIM_PAD = 256                 # lane-dense contraction dim for the patch matmul
LN_EPS = 1e-5
ATTN_SCALE = 1.0 / math.sqrt(HEAD_DIM)
NEG_INF = -1e9

# Order of the packed weight slabs handed to the fused kernel.
_WEIGHT_KEYS = (
    "w_patch", "misc64",
    # encoder, stacked over 4 layers
    "e_qkv_w", "e_qkv_b", "e_out_w", "e_ff1_w", "e_ff1_b", "e_ff2_w", "e_vec64",
    # decoder self-attn / cross-attn / FFN, stacked over 2 layers
    "d_qkv_w", "d_qkv_b", "d_out_w", "c_q_w", "c_kv_w", "c_kv_b", "c_out_w",
    "d_ff1_w", "d_ff1_b", "d_ff2_w", "d_vec64",
    # final vocab projection (padded to 128 lanes)
    "out_w", "out_b",
)


# --------------------------------- in-kernel helpers ---------------------------------
def _layernorm(x, g, b):
    mu = jnp.mean(x, axis=-1, keepdims=True)
    var = jnp.mean(jnp.square(x - mu), axis=-1, keepdims=True)
    return (x - mu) * lax.rsqrt(var + LN_EPS) * g + b


def _head_block_mask(mq, mk, causal):
    """Additive mask for head-major stacked rows: row r -> (head=r>>log2(m), tok=r&(m-1))."""
    nq, nk = N_HEADS * mq, N_HEADS * mk
    r = lax.broadcasted_iota(jnp.int32, (nq, nk), 0)
    c = lax.broadcasted_iota(jnp.int32, (nq, nk), 1)
    allowed = jnp.right_shift(r, int(math.log2(mq))) == jnp.right_shift(c, int(math.log2(mk)))
    if causal:
        allowed = jnp.logical_and(
            allowed, jnp.bitwise_and(c, mk - 1) <= jnp.bitwise_and(r, mq - 1))
    return jnp.where(allowed, 0.0, NEG_INF).astype(jnp.float32)


def _stack_heads(x):
    """(M, 64) -> (H*M, 16), head-major rows."""
    return jnp.concatenate(
        [x[:, h * HEAD_DIM:(h + 1) * HEAD_DIM] for h in range(N_HEADS)], axis=0)


def _split_qkv_stacked(qkv):
    """(M, 192) fused QKV -> three head-stacked (H*M, 16) arrays."""
    chunks = [qkv[:, c * HEAD_DIM:(c + 1) * HEAD_DIM] for c in range(3 * N_HEADS)]
    q = jnp.concatenate(chunks[0:N_HEADS], axis=0)
    k = jnp.concatenate(chunks[N_HEADS:2 * N_HEADS], axis=0)
    v = jnp.concatenate(chunks[2 * N_HEADS:3 * N_HEADS], axis=0)
    return q, k, v


def _attention_core(qs, ks, vs, mask, mq):
    """One scores matmul + one softmax + one PV for ALL heads (block-diag head mask)."""
    f32 = jnp.float32
    s = lax.dot_general(qs, ks, (((1,), (1,)), ((), ())),
                        preferred_element_type=f32) * ATTN_SCALE
    s = s + mask
    s = s - jnp.max(s, axis=-1, keepdims=True)
    p = jnp.exp(s)
    p = p / jnp.sum(p, axis=-1, keepdims=True)          # exact softmax (parity-safe)
    o = jnp.dot(p, vs, preferred_element_type=f32)      # (H*mq, 16)
    # concatenate heads back into 64 lanes
    return jnp.concatenate([o[h * mq:(h + 1) * mq, :] for h in range(N_HEADS)], axis=1)


# --------------------------------- fused Pallas kernel ---------------------------------
def _fused_forward_kernel(*refs):
    f32 = jnp.float32
    patches_ref, dec_in_ref = refs[0], refs[1]
    w = dict(zip(_WEIGHT_KEYS, refs[2:2 + len(_WEIGHT_KEYS)]))
    logits_ref = refs[2 + len(_WEIGHT_KEYS)]

    # Layer-invariant masks, built once per grid step (cheap VPU iota work, no HBM traffic).
    enc_mask = _head_block_mask(NUM_PATCHES, NUM_PATCHES, causal=False)    # (64, 64)
    dec_mask = _head_block_mask(S_PAD, S_PAD, causal=True)                 # (32, 32)
    cross_mask = _head_block_mask(S_PAD, NUM_PATCHES, causal=False)        # (32, 64)

    misc = w["misc64"][...]
    patch_b = misc[0:1]                              # (1, 64)
    enc_pos = misc[8:8 + NUM_PATCHES]                # (16, 64)

    # ---- patch embedding + learned positional embedding ----
    x = jnp.dot(patches_ref[0], w["w_patch"][...], preferred_element_type=f32)
    x = x + patch_b + enc_pos                                               # (16, 64)

    # ---- encoder: post-LN layers (fori_loop over stacked layer weights) ----
    def enc_layer(l, x):
        vec = w["e_vec64"][l]                                               # (8, 64)
        qkv = (jnp.dot(x, w["e_qkv_w"][l], preferred_element_type=f32)
               + w["e_qkv_b"][l])                                           # (16, 192)
        qs, ks, vs = _split_qkv_stacked(qkv)
        att = _attention_core(qs, ks, vs, enc_mask, NUM_PATCHES)            # (16, 64)
        att = jnp.dot(att, w["e_out_w"][l], preferred_element_type=f32) + vec[0:1]
        x = _layernorm(x + att, vec[1:2], vec[2:3])
        h = jnp.dot(x, w["e_ff1_w"][l], preferred_element_type=f32) + w["e_ff1_b"][l]
        h = jnp.maximum(h, 0.0)
        h = jnp.dot(h, w["e_ff2_w"][l], preferred_element_type=f32) + vec[3:4]
        return _layernorm(x + h, vec[4:5], vec[5:6])

    enc_out = lax.fori_loop(0, ENC_DEPTH, enc_layer, x)                     # (16, 64)

    # Cross-attention K/V for BOTH decoder layers in one lane-dense (64,256) matmul.
    ckv = (jnp.dot(enc_out, w["c_kv_w"][...], preferred_element_type=f32)
           + w["c_kv_b"][...])                                              # (16, 256)

    # ---- decoder: causal self-attn, cross-attn, FFN (2 layers, unrolled) ----
    y = dec_in_ref[0]                                                       # (8, 64)
    for l in range(DEC_DEPTH):
        vec = w["d_vec64"][l]                                               # (16, 64)

        qkv = (jnp.dot(y, w["d_qkv_w"][l], preferred_element_type=f32)
               + w["d_qkv_b"][l])                                           # (8, 192)
        qs, ks, vs = _split_qkv_stacked(qkv)
        sa = _attention_core(qs, ks, vs, dec_mask, S_PAD)                   # (8, 64)
        sa = jnp.dot(sa, w["d_out_w"][l], preferred_element_type=f32) + vec[0:1]
        y = _layernorm(y + sa, vec[1:2], vec[2:3])

        cq = jnp.dot(y, w["c_q_w"][l], preferred_element_type=f32) + vec[3:4]
        qs = _stack_heads(cq)
        ks = _stack_heads(ckv[:, l * 2 * D_MODEL:l * 2 * D_MODEL + D_MODEL])
        vs = _stack_heads(ckv[:, l * 2 * D_MODEL + D_MODEL:(l + 1) * 2 * D_MODEL])
        ca = _attention_core(qs, ks, vs, cross_mask, S_PAD)                 # (8, 64)
        ca = jnp.dot(ca, w["c_out_w"][l], preferred_element_type=f32) + vec[4:5]
        y = _layernorm(y + ca, vec[5:6], vec[6:7])

        h = jnp.dot(y, w["d_ff1_w"][l], preferred_element_type=f32) + w["d_ff1_b"][l]
        h = jnp.maximum(h, 0.0)
        h = jnp.dot(h, w["d_ff2_w"][l], preferred_element_type=f32) + vec[7:8]
        y = _layernorm(y + h, vec[8:9], vec[9:10])

    # ---- lane-dense final projection (vocab padded to 128, sliced in the wrapper) ----
    logits_ref[0] = (jnp.dot(y, w["out_w"][...], preferred_element_type=f32)
                     + w["out_b"][...])


def _fused_forward(packed, patches, dec_in):
    B = patches.shape[0]
    weights = [packed[k] for k in _WEIGHT_KEYS]

    def full_spec(arr):
        # Whole-array block, block index 0 on every grid step -> stays resident in VMEM.
        return pl.BlockSpec(arr.shape, lambda b, _nd=arr.ndim: (0,) * _nd)

    in_specs = ([pl.BlockSpec((1, NUM_PATCHES, PATCH_DIM_PAD), lambda b: (b, 0, 0)),
                 pl.BlockSpec((1, S_PAD, D_MODEL), lambda b: (b, 0, 0))]
                + [full_spec(a) for a in weights])
    out_specs = pl.BlockSpec((1, S_PAD, VOCAB_PAD), lambda b: (b, 0, 0))

    return pl.pallas_call(
        _fused_forward_kernel,
        out_shape=jax.ShapeDtypeStruct((B, S_PAD, VOCAB_PAD), jnp.float32),
        grid=(B,),
        in_specs=in_specs,
        out_specs=out_specs,
        compiler_params=pltpu.CompilerParams(
            dimension_semantics=("parallel",)),   # batch split across TCs on v7x megacore
    )(patches, dec_in, *weights)


# ------------------------------------- wrapper -------------------------------------
def forward(packed, image_tensor, decoder_input_ids):
    B = image_tensor.shape[0]
    S = decoder_input_ids.shape[1]

    # 14x14 patchify: (B,1,56,56) -> (B,16,196), zero-padded to 256 lanes.
    p = image_tensor.reshape(B, 1, 4, PATCH, 4, PATCH).transpose(0, 2, 4, 1, 3, 5)
    p = p.reshape(B, NUM_PATCHES, PATCH_DIM)
    patches = jnp.pad(p, ((0, 0), (0, 0), (0, PATCH_DIM_PAD - PATCH_DIM)))

    # decoder token + positional embedding (tiny XLA gather), rows padded 5 -> 8
    dec = (jnp.take(packed["dec_tok_emb"], decoder_input_ids, axis=0)
           + packed["dec_pos"][None, :S])
    dec_in = jnp.pad(dec, ((0, 0), (0, S_PAD - S), (0, 0)))

    logits = _fused_forward(packed, patches, dec_in)
    return logits[:, :S, :VOCAB]


# ------------------------------- deterministic init --------------------------------
def init_params(key):
    keys = iter(jax.random.split(key, 512))

    def w(shape, scale=0.02):
        return jax.random.normal(next(keys), shape, jnp.float32) * scale

    def zeros(shape):
        return jnp.zeros(shape, jnp.float32)

    def ones(shape):
        return jnp.ones(shape, jnp.float32)

    def attn_params():
        return {"wq": w((D_MODEL, D_MODEL)), "bq": zeros((D_MODEL,)),
                "wk": w((D_MODEL, D_MODEL)), "bk": zeros((D_MODEL,)),
                "wv": w((D_MODEL, D_MODEL)), "bv": zeros((D_MODEL,)),
                "wo": w((D_MODEL, D_MODEL)), "bo": zeros((D_MODEL,))}

    params = {
        "patch_w": w((PATCH_DIM, D_MODEL)), "patch_b": zeros((D_MODEL,)),
        "enc_pos": w((NUM_PATCHES, D_MODEL)),
        "enc_layers": [],
        "dec_tok_emb": w((VOCAB, D_MODEL)),
        "dec_pos": w((MAX_SEQ, D_MODEL)),
        "dec_layers": [],
        "out_w": w((D_MODEL, VOCAB)), "out_b": zeros((VOCAB,)),
    }
    for _ in range(ENC_DEPTH):
        params["enc_layers"].append({
            "attn": attn_params(),
            "ln1_g": ones((D_MODEL,)), "ln1_b": zeros((D_MODEL,)),
            "w1": w((D_MODEL, FF_DIM)), "b1": zeros((FF_DIM,)),
            "w2": w((FF_DIM, D_MODEL)), "b2": zeros((D_MODEL,)),
            "ln2_g": ones((D_MODEL,)), "ln2_b": zeros((D_MODEL,)),
        })
    for _ in range(DEC_DEPTH):
        params["dec_layers"].append({
            "self_attn": attn_params(),
            "ln1_g": ones((D_MODEL,)), "ln1_b": zeros((D_MODEL,)),
            "cross_attn": attn_params(),
            "ln2_g": ones((D_MODEL,)), "ln2_b": zeros((D_MODEL,)),
            "w1": w((D_MODEL, FF_DIM)), "b1": zeros((FF_DIM,)),
            "w2": w((FF_DIM, D_MODEL)), "b2": zeros((D_MODEL,)),
            "ln3_g": ones((D_MODEL,)), "ln3_b": zeros((D_MODEL,)),
        })
    return params


# --------------------------- pack weights for the fused kernel ---------------------------
def pack_params(params):
    enc = params["enc_layers"]
    dec = params["dec_layers"]

    def row(v):
        return v.reshape(1, -1)

    def qkv_w(a):   # fused (64, 192) = [Wq | Wk | Wv]
        return jnp.concatenate([a["wq"], a["wk"], a["wv"]], axis=1)

    def qkv_b(a):   # fused (1, 192)
        return jnp.concatenate([a["bq"], a["bk"], a["bv"]]).reshape(1, 3 * D_MODEL)

    e_vec = []
    for l in enc:   # rows: [bo, ln1g, ln1b, ff_b2, ln2g, ln2b, pad, pad]
        e_vec.append(jnp.concatenate([
            row(l["attn"]["bo"]), row(l["ln1_g"]), row(l["ln1_b"]),
            row(l["b2"]), row(l["ln2_g"]), row(l["ln2_b"]),
            jnp.zeros((2, D_MODEL), jnp.float32)], axis=0))
    d_vec = []
    for l in dec:   # rows: [sa_bo, ln1g, ln1b, cq_b, ca_bo, ln2g, ln2b, ff_b2, ln3g, ln3b, pad*6]
        d_vec.append(jnp.concatenate([
            row(l["self_attn"]["bo"]), row(l["ln1_g"]), row(l["ln1_b"]),
            row(l["cross_attn"]["bq"]), row(l["cross_attn"]["bo"]),
            row(l["ln2_g"]), row(l["ln2_b"]),
            row(l["b2"]), row(l["ln3_g"]), row(l["ln3_b"]),
            jnp.zeros((6, D_MODEL), jnp.float32)], axis=0))

    packed = {
        "w_patch": jnp.pad(params["patch_w"], ((0, PATCH_DIM_PAD - PATCH_DIM), (0, 0))),
        # misc64 rows: [patch_b, pad*7, enc_pos(16)]  (aligned sublane slices in-kernel)
        "misc64": jnp.concatenate([row(params["patch_b"]),
                                   jnp.zeros((7, D_MODEL), jnp.float32),
                                   params["enc_pos"]], axis=0),

        "e_qkv_w": jnp.stack([qkv_w(l["attn"]) for l in enc]),           # (4, 64, 192)
        "e_qkv_b": jnp.stack([qkv_b(l["attn"]) for l in enc]),           # (4, 1, 192)
        "e_out_w": jnp.stack([l["attn"]["wo"] for l in enc]),            # (4, 64, 64)
        "e_ff1_w": jnp.stack([l["w1"] for l in enc]),                    # (4, 64, 128)
        "e_ff1_b": jnp.stack([row(l["b1"]) for l in enc]),               # (4, 1, 128)
        "e_ff2_w": jnp.stack([l["w2"] for l in enc]),                    # (4, 128, 64)
        "e_vec64": jnp.stack(e_vec),                                     # (4, 8, 64)

        "d_qkv_w": jnp.stack([qkv_w(l["self_attn"]) for l in dec]),      # (2, 64, 192)
        "d_qkv_b": jnp.stack([qkv_b(l["self_attn"]) for l in dec]),      # (2, 1, 192)
        "d_out_w": jnp.stack([l["self_attn"]["wo"] for l in dec]),       # (2, 64, 64)
        "c_q_w": jnp.stack([l["cross_attn"]["wq"] for l in dec]),        # (2, 64, 64)
        # cross K/V for both layers fused into one lane-dense (64, 256) weight
        "c_kv_w": jnp.concatenate(
            [jnp.concatenate([l["cross_attn"]["wk"], l["cross_attn"]["wv"]], axis=1)
             for l in dec], axis=1),
        "c_kv_b": jnp.concatenate(
            [jnp.concatenate([l["cross_attn"]["bk"], l["cross_attn"]["bv"]])
             for l in dec]).reshape(1, DEC_DEPTH * 2 * D_MODEL),
        "c_out_w": jnp.stack([l["cross_attn"]["wo"] for l in dec]),      # (2, 64, 64)
        "d_ff1_w": jnp.stack([l["w1"] for l in dec]),                    # (2, 64, 128)
        "d_ff1_b": jnp.stack([row(l["b1"]) for l in dec]),               # (2, 1, 128)
        "d_ff2_w": jnp.stack([l["w2"] for l in dec]),                    # (2, 128, 64)
        "d_vec64": jnp.stack(d_vec),                                     # (2, 16, 64)

        "out_w": jnp.pad(params["out_w"], ((0, 0), (0, VOCAB_PAD - VOCAB))),
        "out_b": jnp.pad(params["out_b"], (0, VOCAB_PAD - VOCAB)).reshape(1, VOCAB_PAD),

        # used by the wrapper (embedding lookup), not by the kernel
        "dec_tok_emb": params["dec_tok_emb"],
        "dec_pos": params["dec_pos"],
    }
    return packed


# --------------------------- pure-JAX reference (correctness) ---------------------------
def _ln_ref(x, g, b):
    mu = x.mean(-1, keepdims=True)
    var = ((x - mu) ** 2).mean(-1, keepdims=True)
    return (x - mu) / jnp.sqrt(var + LN_EPS) * g + b


def _mha_ref(xq, xkv, a, causal):
    hp = lax.Precision.HIGHEST
    q = jnp.matmul(xq, a["wq"], precision=hp) + a["bq"]
    k = jnp.matmul(xkv, a["wk"], precision=hp) + a["bk"]
    v = jnp.matmul(xkv, a["wv"], precision=hp) + a["bv"]
    B, Sq, _ = q.shape
    Sk = k.shape[1]
    q = q.reshape(B, Sq, N_HEADS, HEAD_DIM).transpose(0, 2, 1, 3)
    k = k.reshape(B, Sk, N_HEADS, HEAD_DIM).transpose(0, 2, 1, 3)
    v = v.reshape(B, Sk, N_HEADS, HEAD_DIM).transpose(0, 2, 1, 3)
    s = jnp.einsum("bhqd,bhkd->bhqk", q, k, precision=hp) * ATTN_SCALE
    if causal:
        s = jnp.where(jnp.tril(jnp.ones((Sq, Sk), bool)), s, -jnp.inf)
    p = jax.nn.softmax(s, axis=-1)
    o = jnp.einsum("bhqk,bhkd->bhqd", p, v, precision=hp)
    o = o.transpose(0, 2, 1, 3).reshape(B, Sq, D_MODEL)
    return jnp.matmul(o, a["wo"], precision=hp) + a["bo"]


def reference_forward(params, image, ids):
    hp = lax.Precision.HIGHEST
    mm = lambda a, b: jnp.matmul(a, b, precision=hp)
    B = image.shape[0]
    S = ids.shape[1]
    p = image.reshape(B, 1, 4, PATCH, 4, PATCH).transpose(0, 2, 4, 1, 3, 5)
    p = p.reshape(B, NUM_PATCHES, PATCH_DIM)
    x = mm(p, params["patch_w"]) + params["patch_b"] + params["enc_pos"]
    for l in params["enc_layers"]:
        x = _ln_ref(x + _mha_ref(x, x, l["attn"], False), l["ln1_g"], l["ln1_b"])
        h = jnp.maximum(mm(x, l["w1"]) + l["b1"], 0.0)
        x = _ln_ref(x + mm(h, l["w2"]) + l["b2"], l["ln2_g"], l["ln2_b"])
    enc_out = x
    y = jnp.take(params["dec_tok_emb"], ids, axis=0) + params["dec_pos"][None, :S]
    for l in params["dec_layers"]:
        y = _ln_ref(y + _mha_ref(y, y, l["self_attn"], True), l["ln1_g"], l["ln1_b"])
        y = _ln_ref(y + _mha_ref(y, enc_out, l["cross_attn"], False), l["ln2_g"], l["ln2_b"])
        h = jnp.maximum(mm(y, l["w1"]) + l["b1"], 0.0)
        y = _ln_ref(y + mm(h, l["w2"]) + l["b2"], l["ln3_g"], l["ln3_b"])
    return mm(y, params["out_w"]) + params["out_b"]


if __name__ == "__main__":
    key = jax.random.PRNGKey(0)
    pkey, ikey, dkey = jax.random.split(key, 3)
    params = init_params(pkey)
    packed = pack_params(params)

    B = 2
    image = jax.random.normal(ikey, (B, 1, 56, 56), jnp.float32)       # (B, 1, 56, 56)
    ids = jax.random.randint(dkey, (B, MAX_SEQ), 0, VOCAB)             # (B, 5)

    apply = jax.jit(forward)
    logits = jax.block_until_ready(apply(packed, image, ids))

    assert logits.shape == (B, MAX_SEQ, VOCAB), logits.shape
    assert bool(jnp.all(jnp.isfinite(logits)))

    ref = reference_forward(params, image, ids)
    np.testing.assert_allclose(np.asarray(logits), np.asarray(ref), rtol=2e-2, atol=2e-3)

    print("KERNEL_OK")
</pallas_src>

<mosaic_0001>
module attributes {stable_mosaic.version = 11 : i64} {
  func.func @_fused_forward_kernel(%arg0: i32, %arg1: memref<1x16x256xf32, #tpu.memory_space<vmem>>, %arg2: memref<1x8x64xf32, #tpu.memory_space<vmem>>, %arg3: memref<256x64xf32, #tpu.memory_space<vmem>>, %arg4: memref<24x64xf32, #tpu.memory_space<vmem>>, %arg5: memref<4x64x192xf32, #tpu.memory_space<vmem>>, %arg6: memref<4x1x192xf32, #tpu.memory_space<vmem>>, %arg7: memref<4x64x64xf32, #tpu.memory_space<vmem>>, %arg8: memref<4x64x128xf32, #tpu.memory_space<vmem>>, %arg9: memref<4x1x128xf32, #tpu.memory_space<vmem>>, %arg10: memref<4x128x64xf32, #tpu.memory_space<vmem>>, %arg11: memref<4x8x64xf32, #tpu.memory_space<vmem>>, %arg12: memref<2x64x192xf32, #tpu.memory_space<vmem>>, %arg13: memref<2x1x192xf32, #tpu.memory_space<vmem>>, %arg14: memref<2x64x64xf32, #tpu.memory_space<vmem>>, %arg15: memref<2x64x64xf32, #tpu.memory_space<vmem>>, %arg16: memref<64x256xf32, #tpu.memory_space<vmem>>, %arg17: memref<1x256xf32, #tpu.memory_space<vmem>>, %arg18: memref<2x64x64xf32, #tpu.memory_space<vmem>>, %arg19: memref<2x64x128xf32, #tpu.memory_space<vmem>>, %arg20: memref<2x1x128xf32, #tpu.memory_space<vmem>>, %arg21: memref<2x128x64xf32, #tpu.memory_space<vmem>>, %arg22: memref<2x16x64xf32, #tpu.memory_space<vmem>>, %arg23: memref<64x128xf32, #tpu.memory_space<vmem>>, %arg24: memref<1x128xf32, #tpu.memory_space<vmem>>, %arg25: memref<1x8x128xf32, #tpu.memory_space<vmem>>) attributes {dimension_semantics = [#tpu.dimension_semantics<parallel>], iteration_bounds = array<i64: 2>, scalar_prefetch = 0 : i64, scratch_operands = 0 : i64, tpu.core_type = #tpu.core_type<tc>, window_params = [{transform_indices = @transform_0, window_bounds = array<i64: 1, 16, 256>}, {transform_indices = @transform_1, window_bounds = array<i64: 1, 8, 64>}, {pipeline_mode = #tpu.pipeline_mode<synchronous>, transform_indices = @transform_2, window_bounds = array<i64: 256, 64>}, {pipeline_mode = #tpu.pipeline_mode<synchronous>, transform_indices = @transform_3, window_bounds = array<i64: 24, 64>}, {pipeline_mode = #tpu.pipeline_mode<synchronous>, transform_indices = @transform_4, window_bounds = array<i64: 4, 64, 192>}, {pipeline_mode = #tpu.pipeline_mode<synchronous>, transform_indices = @transform_5, window_bounds = array<i64: 4, 1, 192>}, {pipeline_mode = #tpu.pipeline_mode<synchronous>, transform_indices = @transform_6, window_bounds = array<i64: 4, 64, 64>}, {pipeline_mode = #tpu.pipeline_mode<synchronous>, transform_indices = @transform_7, window_bounds = array<i64: 4, 64, 128>}, {pipeline_mode = #tpu.pipeline_mode<synchronous>, transform_indices = @transform_8, window_bounds = array<i64: 4, 1, 128>}, {pipeline_mode = #tpu.pipeline_mode<synchronous>, transform_indices = @transform_9, window_bounds = array<i64: 4, 128, 64>}, {pipeline_mode = #tpu.pipeline_mode<synchronous>, transform_indices = @transform_10, window_bounds = array<i64: 4, 8, 64>}, {pipeline_mode = #tpu.pipeline_mode<synchronous>, transform_indices = @transform_11, window_bounds = array<i64: 2, 64, 192>}, {pipeline_mode = #tpu.pipeline_mode<synchronous>, transform_indices = @transform_12, window_bounds = array<i64: 2, 1, 192>}, {pipeline_mode = #tpu.pipeline_mode<synchronous>, transform_indices = @transform_13, window_bounds = array<i64: 2, 64, 64>}, {pipeline_mode = #tpu.pipeline_mode<synchronous>, transform_indices = @transform_14, window_bounds = array<i64: 2, 64, 64>}, {pipeline_mode = #tpu.pipeline_mode<synchronous>, transform_indices = @transform_15, window_bounds = array<i64: 64, 256>}, {pipeline_mode = #tpu.pipeline_mode<synchronous>, transform_indices = @transform_16, window_bounds = array<i64: 1, 256>}, {pipeline_mode = #tpu.pipeline_mode<synchronous>, transform_indices = @transform_17, window_bounds = array<i64: 2, 64, 64>}, {pipeline_mode = #tpu.pipeline_mode<synchronous>, transform_indices = @transform_18, window_bounds = array<i64: 2, 64, 128>}, {pipeline_mode = #tpu.pipeline_mode<synchronous>, transform_indices = @transform_19, window_bounds = array<i64: 2, 1, 128>}, {pipeline_mode = #tpu.pipeline_mode<synchronous>, transform_indices = @transform_20, window_bounds = array<i64: 2, 128, 64>}, {pipeline_mode = #tpu.pipeline_mode<synchronous>, transform_indices = @transform_21, window_bounds = array<i64: 2, 16, 64>}, {pipeline_mode = #tpu.pipeline_mode<synchronous>, transform_indices = @transform_22, window_bounds = array<i64: 64, 128>}, {pipeline_mode = #tpu.pipeline_mode<synchronous>, transform_indices = @transform_23, window_bounds = array<i64: 1, 128>}, {transform_indices = @transform_24, window_bounds = array<i64: 1, 8, 128>}]} {
    %0 = tpu.iota {dimensions = array<i32: 0>} : vector<64x64xi32>
    %1 = tpu.iota {dimensions = array<i32: 1>} : vector<64x64xi32>
    %c4_i32 = arith.constant 4 : i32
    %2 = vector.broadcast %c4_i32 : i32 to vector<64x64xi32>
    %3 = arith.shrsi %0, %2 : vector<64x64xi32>
    %c4_i32_0 = arith.constant 4 : i32
    %4 = vector.broadcast %c4_i32_0 : i32 to vector<64x64xi32>
    %5 = arith.shrsi %1, %4 : vector<64x64xi32>
    %6 = arith.cmpi eq, %3, %5 : vector<64x64xi32>
    %cst = arith.constant 0.000000e+00 : f32
    %cst_1 = arith.constant -1.000000e+09 : f32
    %7 = vector.broadcast %cst : f32 to vector<64x64xf32>
    %8 = vector.broadcast %cst_1 : f32 to vector<64x64xf32>
    %9 = arith.select %6, %7, %8 : vector<64x64xi1>, vector<64x64xf32>
    %10 = tpu.iota {dimensions = array<i32: 0>} : vector<32x32xi32>
    %11 = tpu.iota {dimensions = array<i32: 1>} : vector<32x32xi32>
    %c3_i32 = arith.constant 3 : i32
    %12 = vector.broadcast %c3_i32 : i32 to vector<32x32xi32>
    %13 = arith.shrsi %10, %12 : vector<32x32xi32>
    %c3_i32_2 = arith.constant 3 : i32
    %14 = vector.broadcast %c3_i32_2 : i32 to vector<32x32xi32>
    %15 = arith.shrsi %11, %14 : vector<32x32xi32>
    %16 = arith.cmpi eq, %13, %15 : vector<32x32xi32>
    %c7_i32 = arith.constant 7 : i32
    %17 = vector.broadcast %c7_i32 : i32 to vector<32x32xi32>
    %18 = arith.andi %11, %17 : vector<32x32xi32>
    %c7_i32_3 = arith.constant 7 : i32
    %19 = vector.broadcast %c7_i32_3 : i32 to vector<32x32xi32>
    %20 = arith.andi %10, %19 : vector<32x32xi32>
    %21 = arith.cmpi sle, %18, %20 : vector<32x32xi32>
    %22 = arith.andi %16, %21 : vector<32x32xi1>
    %cst_4 = arith.constant 0.000000e+00 : f32
    %cst_5 = arith.constant -1.000000e+09 : f32
    %23 = vector.broadcast %cst_4 : f32 to vector<32x32xf32>
    %24 = vector.broadcast %cst_5 : f32 to vector<32x32xf32>
    %25 = arith.select %22, %23, %24 : vector<32x32xi1>, vector<32x32xf32>
    %26 = tpu.iota {dimensions = array<i32: 0>} : vector<32x64xi32>
    %27 = tpu.iota {dimensions = array<i32: 1>} : vector<32x64xi32>
    %c3_i32_6 = arith.constant 3 : i32
    %28 = vector.broadcast %c3_i32_6 : i32 to vector<32x64xi32>
    %29 = arith.shrsi %26, %28 : vector<32x64xi32>
    %c4_i32_7 = arith.constant 4 : i32
    %30 = vector.broadcast %c4_i32_7 : i32 to vector<32x64xi32>
    %31 = arith.shrsi %27, %30 : vector<32x64xi32>
    %32 = arith.cmpi eq, %29, %31 : vector<32x64xi32>
    %cst_8 = arith.constant 0.000000e+00 : f32
    %cst_9 = arith.constant -1.000000e+09 : f32
    %33 = vector.broadcast %cst_8 : f32 to vector<32x64xf32>
    %34 = vector.broadcast %cst_9 : f32 to vector<32x64xf32>
    %35 = arith.select %32, %33, %34 : vector<32x64xi1>, vector<32x64xf32>
    %c0 = arith.constant 0 : index
    %c0_10 = arith.constant 0 : index
    %36 = vector.load %arg4[%c0, %c0_10] : memref<24x64xf32, #tpu.memory_space<vmem>>, vector<24x64xf32>
    %37 = vector.extract_strided_slice %36 {offsets = [0, 0], sizes = [1, 64], strides = [1, 1]} : vector<24x64xf32> to vector<1x64xf32>
    %38 = vector.extract_strided_slice %36 {offsets = [8, 0], sizes = [16, 64], strides = [1, 1]} : vector<24x64xf32> to vector<16x64xf32>
    %c0_11 = arith.constant 0 : index
    %c0_12 = arith.constant 0 : index
    %c0_13 = arith.constant 0 : index
    %39 = vector.load %arg1[%c0_11, %c0_12, %c0_13] : memref<1x16x256xf32, #tpu.memory_space<vmem>>, vector<1x16x256xf32>
    %40 = vector.shape_cast %39 : vector<1x16x256xf32> to vector<16x256xf32>
    %c0_14 = arith.constant 0 : index
    %c0_15 = arith.constant 0 : index
    %41 = vector.load %arg3[%c0_14, %c0_15] : memref<256x64xf32, #tpu.memory_space<vmem>>, vector<256x64xf32>
    %cst_16 = arith.constant dense<0.000000e+00> : vector<16x64xf32>
    %42 = tpu.matmul %40, %41, %cst_16 {dimension_numbers = #tpu.dot_dimension_numbers<[1], [0], [0], [1], [0, 0, 1, 1], [], []>} : vector<16x256xf32>, vector<256x64xf32>, vector<16x64xf32> -> vector<16x64xf32>
    %43 = vector.broadcast %37 : vector<1x64xf32> to vector<16x64xf32>
    %44 = arith.addf %42, %43 : vector<16x64xf32>
    %45 = arith.addf %44, %38 : vector<16x64xf32>
    %c0_i32 = arith.constant 0 : i32
    %c4_i32_17 = arith.constant 4 : i32
    %46 = arith.addi %c0_i32, %c4_i32_17 : i32
    %c1_i32 = arith.constant 1 : i32
    %47 = scf.for %arg26 = %c0_i32 to %46 step %c1_i32 iter_args(%arg27 = %45) -> (vector<16x64xf32>)  : i32 {
      %437 = arith.index_cast %arg26 : i32 to index
      %c0_152 = arith.constant 0 : index
      %c0_153 = arith.constant 0 : index
      %438 = vector.load %arg11[%437, %c0_152, %c0_153] : memref<4x8x64xf32, #tpu.memory_space<vmem>>, vector<1x8x64xf32>
      %439 = vector.shape_cast %438 : vector<1x8x64xf32> to vector<8x64xf32>
      %440 = arith.index_cast %arg26 : i32 to index
      %c0_154 = arith.constant 0 : index
      %c0_155 = arith.constant 0 : index
      %441 = vector.load %arg5[%440, %c0_154, %c0_155] : memref<4x64x192xf32, #tpu.memory_space<vmem>>, vector<1x64x192xf32>
      %442 = vector.shape_cast %441 : vector<1x64x192xf32> to vector<64x192xf32>
      %cst_156 = arith.constant dense<0.000000e+00> : vector<16x192xf32>
      %443 = tpu.matmul %arg27, %442, %cst_156 {dimension_numbers = #tpu.dot_dimension_numbers<[1], [0], [0], [1], [0, 0, 1, 1], [], []>} : vector<16x64xf32>, vector<64x192xf32>, vector<16x192xf32> -> vector<16x192xf32>
      %444 = arith.index_cast %arg26 : i32 to index
      %c0_157 = arith.constant 0 : index
      %c0_158 = arith.constant 0 : index
      %445 = vector.load %arg6[%444, %c0_157, %c0_158] : memref<4x1x192xf32, #tpu.memory_space<vmem>>, vector<1x1x192xf32>
      %446 = vector.shape_cast %445 : vector<1x1x192xf32> to vector<1x192xf32>
      %447 = vector.broadcast %446 : vector<1x192xf32> to vector<16x192xf32>
      %448 = arith.addf %443, %447 : vector<16x192xf32>
      %449 = vector.extract_strided_slice %448 {offsets = [0, 0], sizes = [16, 16], strides = [1, 1]} : vector<16x192xf32> to vector<16x16xf32>
      %450 = vector.extract_strided_slice %448 {offsets = [0, 16], sizes = [16, 16], strides = [1, 1]} : vector<16x192xf32> to vector<16x16xf32>
      %451 = vector.extract_strided_slice %448 {offsets = [0, 32], sizes = [16, 16], strides = [1, 1]} : vector<16x192xf32> to vector<16x16xf32>
      %452 = vector.extract_strided_slice %448 {offsets = [0, 48], sizes = [16, 16], strides = [1, 1]} : vector<16x192xf32> to vector<16x16xf32>
      %453 = vector.extract_strided_slice %448 {offsets = [0, 64], sizes = [16, 16], strides = [1, 1]} : vector<16x192xf32> to vector<16x16xf32>
      %454 = vector.extract_strided_slice %448 {offsets = [0, 80], sizes = [16, 16], strides = [1, 1]} : vector<16x192xf32> to vector<16x16xf32>
      %455 = vector.extract_strided_slice %448 {offsets = [0, 96], sizes = [16, 16], strides = [1, 1]} : vector<16x192xf32> to vector<16x16xf32>
      %456 = vector.extract_strided_slice %448 {offsets = [0, 112], sizes = [16, 16], strides = [1, 1]} : vector<16x192xf32> to vector<16x16xf32>
      %457 = vector.extract_strided_slice %448 {offsets = [0, 128], sizes = [16, 16], strides = [1, 1]} : vector<16x192xf32> to vector<16x16xf32>
      %458 = vector.extract_strided_slice %448 {offsets = [0, 144], sizes = [16, 16], strides = [1, 1]} : vector<16x192xf32> to vector<16x16xf32>
      %459 = vector.extract_strided_slice %448 {offsets = [0, 160], sizes = [16, 16], strides = [1, 1]} : vector<16x192xf32> to vector<16x16xf32>
      %460 = vector.extract_strided_slice %448 {offsets = [0, 176], sizes = [16, 16], strides = [1, 1]} : vector<16x192xf32> to vector<16x16xf32>
      %461 = tpu.concatenate %449, %450, %451, %452 in 0 : vector<16x16xf32>, vector<16x16xf32>, vector<16x16xf32>, vector<16x16xf32> -> vector<64x16xf32>
      %462 = tpu.concatenate %453, %454, %455, %456 in 0 : vector<16x16xf32>, vector<16x16xf32>, vector<16x16xf32>, vector<16x16xf32> -> vector<64x16xf32>
      %463 = tpu.concatenate %457, %458, %459, %460 in 0 : vector<16x16xf32>, vector<16x16xf32>, vector<16x16xf32>, vector<16x16xf32> -> vector<64x16xf32>
      %cst_159 = arith.constant dense<0.000000e+00> : vector<64x64xf32>
      %464 = tpu.matmul %461, %462, %cst_159 {dimension_numbers = #tpu.dot_dimension_numbers<[1], [1], [0], [0], [0, 0, 1, 0], [], []>} : vector<64x16xf32>, vector<64x16xf32>, vector<64x64xf32> -> vector<64x64xf32>
      %cst_160 = arith.constant 2.500000e-01 : f32
      %465 = vector.broadcast %cst_160 : f32 to vector<64x64xf32>
      %466 = arith.mulf %464, %465 : vector<64x64xf32>
      %467 = arith.addf %466, %9 : vector<64x64xf32>
      %cst_161 = arith.constant dense<0xFF800000> : vector<64xf32>
      %468 = vector.multi_reduction <maximumf>, %467, %cst_161 [1] : vector<64x64xf32> to vector<64xf32>
      %469 = vector.shape_cast %468 : vector<64xf32> to vector<64x1xf32>
      %470 = vector.broadcast %469 : vector<64x1xf32> to vector<64x64xf32>
      %471 = arith.subf %467, %470 : vector<64x64xf32>
      %472 = math.exp %471 : vector<64x64xf32>
      %cst_162 = arith.constant dense<0.000000e+00> : vector<64xf32>
      %473 = vector.multi_reduction <add>, %472, %cst_162 [1] : vector<64x64xf32> to vector<64xf32>
      %474 = vector.shape_cast %473 : vector<64xf32> to vector<64x1xf32>
      %475 = vector.broadcast %474 : vector<64x1xf32> to vector<64x64xf32>
      %476 = arith.divf %472, %475 : vector<64x64xf32>
      %cst_163 = arith.constant dense<0.000000e+00> : vector<64x16xf32>
      %477 = tpu.matmul %476, %463, %cst_163 {dimension_numbers = #tpu.dot_dimension_numbers<[1], [0], [0], [1], [0, 0, 1, 1], [], []>} : vector<64x64xf32>, vector<64x16xf32>, vector<64x16xf32> -> vector<64x16xf32>
      %478 = vector.extract_strided_slice %477 {offsets = [0, 0], sizes = [16, 16], strides = [1, 1]} : vector<64x16xf32> to vector<16x16xf32>
      %479 = vector.extract_strided_slice %477 {offsets = [16, 0], sizes = [16, 16], strides = [1, 1]} : vector<64x16xf32> to vector<16x16xf32>
      %480 = vector.extract_strided_slice %477 {offsets = [32, 0], sizes = [16, 16], strides = [1, 1]} : vector<64x16xf32> to vector<16x16xf32>
      %481 = vector.extract_strided_slice %477 {offsets = [48, 0], sizes = [16, 16], strides = [1, 1]} : vector<64x16xf32> to vector<16x16xf32>
      %482 = tpu.concatenate %478, %479, %480, %481 in 1 : vector<16x16xf32>, vector<16x16xf32>, vector<16x16xf32>, vector<16x16xf32> -> vector<16x64xf32>
      %483 = arith.index_cast %arg26 : i32 to index
      %c0_164 = arith.constant 0 : index
      %c0_165 = arith.constant 0 : index
      %484 = vector.load %arg7[%483, %c0_164, %c0_165] : memref<4x64x64xf32, #tpu.memory_space<vmem>>, vector<1x64x64xf32>
      %485 = vector.shape_cast %484 : vector<1x64x64xf32> to vector<64x64xf32>
      %cst_166 = arith.constant dense<0.000000e+00> : vector<16x64xf32>
      %486 = tpu.matmul %482, %485, %cst_166 {dimension_numbers = #tpu.dot_dimension_numbers<[1], [0], [0], [1], [0, 0, 1, 1], [], []>} : vector<16x64xf32>, vector<64x64xf32>, vector<16x64xf32> -> vector<16x64xf32>
      %487 = vector.extract_strided_slice %439 {offsets = [0, 0], sizes = [1, 64], strides = [1, 1]} : vector<8x64xf32> to vector<1x64xf32>
      %488 = vector.broadcast %487 : vector<1x64xf32> to vector<16x64xf32>
      %489 = arith.addf %486, %488 : vector<16x64xf32>
      %490 = arith.addf %arg27, %489 : vector<16x64xf32>
      %491 = vector.extract_strided_slice %439 {offsets = [1, 0], sizes = [1, 64], strides = [1, 1]} : vector<8x64xf32> to vector<1x64xf32>
      %492 = vector.extract_strided_slice %439 {offsets = [2, 0], sizes = [1, 64], strides = [1, 1]} : vector<8x64xf32> to vector<1x64xf32>
      %cst_167 = arith.constant dense<0.000000e+00> : vector<16xf32>
      %493 = vector.multi_reduction <add>, %490, %cst_167 [1] : vector<16x64xf32> to vector<16xf32>
      %494 = vector.shape_cast %493 : vector<16xf32> to vector<16x1xf32>
      %cst_168 = arith.constant 6.400000e+01 : f32
      %495 = vector.broadcast %cst_168 : f32 to vector<16x1xf32>
      %496 = arith.divf %494, %495 : vector<16x1xf32>
      %497 = vector.broadcast %496 : vector<16x1xf32> to vector<16x64xf32>
      %498 = arith.subf %490, %497 : vector<16x64xf32>
      %499 = arith.mulf %498, %498 : vector<16x64xf32>
      %cst_169 = arith.constant dense<0.000000e+00> : vector<16xf32>
      %500 = vector.multi_reduction <add>, %499, %cst_169 [1] : vector<16x64xf32> to vector<16xf32>
      %501 = vector.shape_cast %500 : vector<16xf32> to vector<16x1xf32>
      %cst_170 = arith.constant 6.400000e+01 : f32
      %502 = vector.broadcast %cst_170 : f32 to vector<16x1xf32>
      %503 = arith.divf %501, %502 : vector<16x1xf32>
      %504 = vector.broadcast %496 : vector<16x1xf32> to vector<16x64xf32>
      %505 = arith.subf %490, %504 : vector<16x64xf32>
      %cst_171 = arith.constant 9.99999974E-6 : f32
      %506 = vector.broadcast %cst_171 : f32 to vector<16x1xf32>
      %507 = arith.addf %503, %506 : vector<16x1xf32>
      %508 = math.rsqrt %507 : vector<16x1xf32>
      %509 = vector.broadcast %508 : vector<16x1xf32> to vector<16x64xf32>
      %510 = arith.mulf %505, %509 : vector<16x64xf32>
      %511 = vector.broadcast %491 : vector<1x64xf32> to vector<16x64xf32>
      %512 = arith.mulf %510, %511 : vector<16x64xf32>
      %513 = vector.broadcast %492 : vector<1x64xf32> to vector<16x64xf32>
      %514 = arith.addf %512, %513 : vector<16x64xf32>
      %515 = arith.index_cast %arg26 : i32 to index
      %c0_172 = arith.constant 0 : index
      %c0_173 = arith.constant 0 : index
      %516 = vector.load %arg8[%515, %c0_172, %c0_173] : memref<4x64x128xf32, #tpu.memory_space<vmem>>, vector<1x64x128xf32>
      %517 = vector.shape_cast %516 : vector<1x64x128xf32> to vector<64x128xf32>
      %cst_174 = arith.constant dense<0.000000e+00> : vector<16x128xf32>
      %518 = tpu.matmul %514, %517, %cst_174 {dimension_numbers = #tpu.dot_dimension_numbers<[1], [0], [0], [1], [0, 0, 1, 1], [], []>} : vector<16x64xf32>, vector<64x128xf32>, vector<16x128xf32> -> vector<16x128xf32>
      %519 = arith.index_cast %arg26 : i32 to index
      %c0_175 = arith.constant 0 : index
      %c0_176 = arith.constant 0 : index
      %520 = vector.load %arg9[%519, %c0_175, %c0_176] : memref<4x1x128xf32, #tpu.memory_space<vmem>>, vector<1x1x128xf32>
      %521 = vector.shape_cast %520 : vector<1x1x128xf32> to vector<1x128xf32>
      %522 = vector.broadcast %521 : vector<1x128xf32> to vector<16x128xf32>
      %523 = arith.addf %518, %522 : vector<16x128xf32>
      %cst_177 = arith.constant 0.000000e+00 : f32
      %524 = vector.broadcast %cst_177 : f32 to vector<16x128xf32>
      %525 = arith.maximumf %523, %524 : vector<16x128xf32>
      %526 = arith.index_cast %arg26 : i32 to index
      %c0_178 = arith.constant 0 : index
      %c0_179 = arith.constant 0 : index
      %527 = vector.load %arg10[%526, %c0_178, %c0_179] : memref<4x128x64xf32, #tpu.memory_space<vmem>>, vector<1x128x64xf32>
      %528 = vector.shape_cast %527 : vector<1x128x64xf32> to vector<128x64xf32>
      %cst_180 = arith.constant dense<0.000000e+00> : vector<16x64xf32>
      %529 = tpu.matmul %525, %528, %cst_180 {dimension_numbers = #tpu.dot_dimension_numbers<[1], [0], [0], [1], [0, 0, 1, 1], [], []>} : vector<16x128xf32>, vector<128x64xf32>, vector<16x64xf32> -> vector<16x64xf32>
      %530 = vector.extract_strided_slice %439 {offsets = [3, 0], sizes = [1, 64], strides = [1, 1]} : vector<8x64xf32> to vector<1x64xf32>
      %531 = vector.broadcast %530 : vector<1x64xf32> to vector<16x64xf32>
      %532 = arith.addf %529, %531 : vector<16x64xf32>
      %533 = arith.addf %514, %532 : vector<16x64xf32>
      %534 = vector.extract_strided_slice %439 {offsets = [4, 0], sizes = [1, 64], strides = [1, 1]} : vector<8x64xf32> to vector<1x64xf32>
      %535 = vector.extract_strided_slice %439 {offsets = [5, 0], sizes = [1, 64], strides = [1, 1]} : vector<8x64xf32> to vector<1x64xf32>
      %cst_181 = arith.constant dense<0.000000e+00> : vector<16xf32>
      %536 = vector.multi_reduction <add>, %533, %cst_181 [1] : vector<16x64xf32> to vector<16xf32>
      %537 = vector.shape_cast %536 : vector<16xf32> to vector<16x1xf32>
      %cst_182 = arith.constant 6.400000e+01 : f32
      %538 = vector.broadcast %cst_182 : f32 to vector<16x1xf32>
      %539 = arith.divf %537, %538 : vector<16x1xf32>
      %540 = vector.broadcast %539 : vector<16x1xf32> to vector<16x64xf32>
      %541 = arith.subf %533, %540 : vector<16x64xf32>
      %542 = arith.mulf %541, %541 : vector<16x64xf32>
      %cst_183 = arith.constant dense<0.000000e+00> : vector<16xf32>
      %543 = vector.multi_reduction <add>, %542, %cst_183 [1] : vector<16x64xf32> to vector<16xf32>
      %544 = vector.shape_cast %543 : vector<16xf32> to vector<16x1xf32>
      %cst_184 = arith.constant 6.400000e+01 : f32
      %545 = vector.broadcast %cst_184 : f32 to vector<16x1xf32>
      %546 = arith.divf %544, %545 : vector<16x1xf32>
      %547 = vector.broadcast %539 : vector<16x1xf32> to vector<16x64xf32>
      %548 = arith.subf %533, %547 : vector<16x64xf32>
      %cst_185 = arith.constant 9.99999974E-6 : f32
      %549 = vector.broadcast %cst_185 : f32 to vector<16x1xf32>
      %550 = arith.addf %546, %549 : vector<16x1xf32>
      %551 = math.rsqrt %550 : vector<16x1xf32>
      %552 = vector.broadcast %551 : vector<16x1xf32> to vector<16x64xf32>
      %553 = arith.mulf %548, %552 : vector<16x64xf32>
      %554 = vector.broadcast %534 : vector<1x64xf32> to vector<16x64xf32>
      %555 = arith.mulf %553, %554 : vector<16x64xf32>
      %556 = vector.broadcast %535 : vector<1x64xf32> to vector<16x64xf32>
      %557 = arith.addf %555, %556 : vector<16x64xf32>
      scf.yield %557 : vector<16x64xf32>
    }
    %c4_i32_18 = arith.constant 4 : i32
    %c0_19 = arith.constant 0 : index
    %c0_20 = arith.constant 0 : index
    %48 = vector.load %arg16[%c0_19, %c0_20] : memref<64x256xf32, #tpu.memory_space<vmem>>, vector<64x256xf32>
    %cst_21 = arith.constant dense<0.000000e+00> : vector<16x256xf32>
    %49 = tpu.matmul %47, %48, %cst_21 {dimension_numbers = #tpu.dot_dimension_numbers<[1], [0], [0], [1], [0, 0, 1, 1], [], []>} : vector<16x64xf32>, vector<64x256xf32>, vector<16x256xf32> -> vector<16x256xf32>
    %c0_22 = arith.constant 0 : index
    %c0_23 = arith.constant 0 : index
    %50 = vector.load %arg17[%c0_22, %c0_23] : memref<1x256xf32, #tpu.memory_space<vmem>>, vector<1x256xf32>
    %51 = vector.broadcast %50 : vector<1x256xf32> to vector<16x256xf32>
    %52 = arith.addf %49, %51 : vector<16x256xf32>
    %c0_24 = arith.constant 0 : index
    %c0_25 = arith.constant 0 : index
    %c0_26 = arith.constant 0 : index
    %53 = vector.load %arg2[%c0_24, %c0_25, %c0_26] : memref<1x8x64xf32, #tpu.memory_space<vmem>>, vector<1x8x64xf32>
    %54 = vector.shape_cast %53 : vector<1x8x64xf32> to vector<8x64xf32>
    %c0_27 = arith.constant 0 : index
    %c0_28 = arith.constant 0 : index
    %c0_29 = arith.constant 0 : index
    %55 = vector.load %arg22[%c0_27, %c0_28, %c0_29] : memref<2x16x64xf32, #tpu.memory_space<vmem>>, vector<1x16x64xf32>
    %56 = vector.shape_cast %55 : vector<1x16x64xf32> to vector<16x64xf32>
    %c0_30 = arith.constant 0 : index
    %c0_31 = arith.constant 0 : index
    %c0_32 = arith.constant 0 : index
    %57 = vector.load %arg12[%c0_30, %c0_31, %c0_32] : memref<2x64x192xf32, #tpu.memory_space<vmem>>, vector<1x64x192xf32>
    %58 = vector.shape_cast %57 : vector<1x64x192xf32> to vector<64x192xf32>
    %cst_33 = arith.constant dense<0.000000e+00> : vector<8x192xf32>
    %59 = tpu.matmul %54, %58, %cst_33 {dimension_numbers = #tpu.dot_dimension_numbers<[1], [0], [0], [1], [0, 0, 1, 1], [], []>} : vector<8x64xf32>, vector<64x192xf32>, vector<8x192xf32> -> vector<8x192xf32>
    %c0_34 = arith.constant 0 : index
    %c0_35 = arith.constant 0 : index
    %c0_36 = arith.constant 0 : index
    %60 = vector.load %arg13[%c0_34, %c0_35, %c0_36] : memref<2x1x192xf32, #tpu.memory_space<vmem>>, vector<1x1x192xf32>
    %61 = vector.shape_cast %60 : vector<1x1x192xf32> to vector<1x192xf32>
    %62 = vector.broadcast %61 : vector<1x192xf32> to vector<8x192xf32>
    %63 = arith.addf %59, %62 : vector<8x192xf32>
    %64 = vector.extract_strided_slice %63 {offsets = [0, 0], sizes = [8, 16], strides = [1, 1]} : vector<8x192xf32> to vector<8x16xf32>
    %65 = vector.extract_strided_slice %63 {offsets = [0, 16], sizes = [8, 16], strides = [1, 1]} : vector<8x192xf32> to vector<8x16xf32>
    %66 = vector.extract_strided_slice %63 {offsets = [0, 32], sizes = [8, 16], strides = [1, 1]} : vector<8x192xf32> to vector<8x16xf32>
    %67 = vector.extract_strided_slice %63 {offsets = [0, 48], sizes = [8, 16], strides = [1, 1]} : vector<8x192xf32> to vector<8x16xf32>
    %68 = vector.extract_strided_slice %63 {offsets = [0, 64], sizes = [8, 16], strides = [1, 1]} : vector<8x192xf32> to vector<8x16xf32>
    %69 = vector.extract_strided_slice %63 {offsets = [0, 80], sizes = [8, 16], strides = [1, 1]} : vector<8x192xf32> to vector<8x16xf32>
    %70 = vector.extract_strided_slice %63 {offsets = [0, 96], sizes = [8, 16], strides = [1, 1]} : vector<8x192xf32> to vector<8x16xf32>
    %71 = vector.extract_strided_slice %63 {offsets = [0, 112], sizes = [8, 16], strides = [1, 1]} : vector<8x192xf32> to vector<8x16xf32>
    %72 = vector.extract_strided_slice %63 {offsets = [0, 128], sizes = [8, 16], strides = [1, 1]} : vector<8x192xf32> to vector<8x16xf32>
    %73 = vector.extract_strided_slice %63 {offsets = [0, 144], sizes = [8, 16], strides = [1, 1]} : vector<8x192xf32> to vector<8x16xf32>
    %74 = vector.extract_strided_slice %63 {offsets = [0, 160], sizes = [8, 16], strides = [1, 1]} : vector<8x192xf32> to vector<8x16xf32>
    %75 = vector.extract_strided_slice %63 {offsets = [0, 176], sizes = [8, 16], strides = [1, 1]} : vector<8x192xf32> to vector<8x16xf32>
    %76 = tpu.concatenate %64, %65, %66, %67 in 0 : vector<8x16xf32>, vector<8x16xf32>, vector<8x16xf32>, vector<8x16xf32> -> vector<32x16xf32>
    %77 = tpu.concatenate %68, %69, %70, %71 in 0 : vector<8x16xf32>, vector<8x16xf32>, vector<8x16xf32>, vector<8x16xf32> -> vector<32x16xf32>
    %78 = tpu.concatenate %72, %73, %74, %75 in 0 : vector<8x16xf32>, vector<8x16xf32>, vector<8x16xf32>, vector<8x16xf32> -> vector<32x16xf32>
    %cst_37 = arith.constant dense<0.000000e+00> : vector<32x32xf32>
    %79 = tpu.matmul %76, %77, %cst_37 {dimension_numbers = #tpu.dot_dimension_numbers<[1], [1], [0], [0], [0, 0, 1, 0], [], []>} : vector<32x16xf32>, vector<32x16xf32>, vector<32x32xf32> -> vector<32x32xf32>
    %cst_38 = arith.constant 2.500000e-01 : f32
    %80 = vector.broadcast %cst_38 : f32 to vector<32x32xf32>
    %81 = arith.mulf %79, %80 : vector<32x32xf32>
    %82 = arith.addf %81, %25 : vector<32x32xf32>
    %cst_39 = arith.constant dense<0xFF800000> : vector<32xf32>
    %83 = vector.multi_reduction <maximumf>, %82, %cst_39 [1] : vector<32x32xf32> to vector<32xf32>
    %84 = vector.shape_cast %83 : vector<32xf32> to vector<32x1xf32>
    %85 = vector.broadcast %84 : vector<32x1xf32> to vector<32x32xf32>
    %86 = arith.subf %82, %85 : vector<32x32xf32>
    %87 = math.exp %86 : vector<32x32xf32>
    %cst_40 = arith.constant dense<0.000000e+00> : vector<32xf32>
    %88 = vector.multi_reduction <add>, %87, %cst_40 [1] : vector<32x32xf32> to vector<32xf32>
    %89 = vector.shape_cast %88 : vector<32xf32> to vector<32x1xf32>
    %90 = vector.broadcast %89 : vector<32x1xf32> to vector<32x32xf32>
    %91 = arith.divf %87, %90 : vector<32x32xf32>
    %cst_41 = arith.constant dense<0.000000e+00> : vector<32x16xf32>
    %92 = tpu.matmul %91, %78, %cst_41 {dimension_numbers = #tpu.dot_dimension_numbers<[1], [0], [0], [1], [0, 0, 1, 1], [], []>} : vector<32x32xf32>, vector<32x16xf32>, vector<32x16xf32> -> vector<32x16xf32>
    %93 = vector.extract_strided_slice %92 {offsets = [0, 0], sizes = [8, 16], strides = [1, 1]} : vector<32x16xf32> to vector<8x16xf32>
    %94 = vector.extract_strided_slice %92 {offsets = [8, 0], sizes = [8, 16], strides = [1, 1]} : vector<32x16xf32> to vector<8x16xf32>
    %95 = vector.extract_strided_slice %92 {offsets = [16, 0], sizes = [8, 16], strides = [1, 1]} : vector<32x16xf32> to vector<8x16xf32>
    %96 = vector.extract_strided_slice %92 {offsets = [24, 0], sizes = [8, 16], strides = [1, 1]} : vector<32x16xf32> to vector<8x16xf32>
    %97 = tpu.concatenate %93, %94, %95, %96 in 1 : vector<8x16xf32>, vector<8x16xf32>, vector<8x16xf32>, vector<8x16xf32> -> vector<8x64xf32>
    %c0_42 = arith.constant 0 : index
    %c0_43 = arith.constant 0 : index
    %c0_44 = arith.constant 0 : index
    %98 = vector.load %arg14[%c0_42, %c0_43, %c0_44] : memref<2x64x64xf32, #tpu.memory_space<vmem>>, vector<1x64x64xf32>
    %99 = vector.shape_cast %98 : vector<1x64x64xf32> to vector<64x64xf32>
    %cst_45 = arith.constant dense<0.000000e+00> : vector<8x64xf32>
    %100 = tpu.matmul %97, %99, %cst_45 {dimension_numbers = #tpu.dot_dimension_numbers<[1], [0], [0], [1], [0, 0, 1, 1], [], []>} : vector<8x64xf32>, vector<64x64xf32>, vector<8x64xf32> -> vector<8x64xf32>
    %101 = vector.extract_strided_slice %56 {offsets = [0, 0], sizes = [1, 64], strides = [1, 1]} : vector<16x64xf32> to vector<1x64xf32>
    %102 = vector.broadcast %101 : vector<1x64xf32> to vector<8x64xf32>
    %103 = arith.addf %100, %102 : vector<8x64xf32>
    %104 = arith.addf %54, %103 : vector<8x64xf32>
    %105 = vector.extract_strided_slice %56 {offsets = [1, 0], sizes = [1, 64], strides = [1, 1]} : vector<16x64xf32> to vector<1x64xf32>
    %106 = vector.extract_strided_slice %56 {offsets = [2, 0], sizes = [1, 64], strides = [1, 1]} : vector<16x64xf32> to vector<1x64xf32>
    %cst_46 = arith.constant dense<0.000000e+00> : vector<8xf32>
    %107 = vector.multi_reduction <add>, %104, %cst_46 [1] : vector<8x64xf32> to vector<8xf32>
    %108 = vector.shape_cast %107 : vector<8xf32> to vector<8x1xf32>
    %cst_47 = arith.constant 6.400000e+01 : f32
    %109 = vector.broadcast %cst_47 : f32 to vector<8x1xf32>
    %110 = arith.divf %108, %109 : vector<8x1xf32>
    %111 = vector.broadcast %110 : vector<8x1xf32> to vector<8x64xf32>
    %112 = arith.subf %104, %111 : vector<8x64xf32>
    %113 = arith.mulf %112, %112 : vector<8x64xf32>
    %cst_48 = arith.constant dense<0.000000e+00> : vector<8xf32>
    %114 = vector.multi_reduction <add>, %113, %cst_48 [1] : vector<8x64xf32> to vector<8xf32>
    %115 = vector.shape_cast %114 : vector<8xf32> to vector<8x1xf32>
    %cst_49 = arith.constant 6.400000e+01 : f32
    %116 = vector.broadcast %cst_49 : f32 to vector<8x1xf32>
    %117 = arith.divf %115, %116 : vector<8x1xf32>
    %118 = vector.broadcast %110 : vector<8x1xf32> to vector<8x64xf32>
    %119 = arith.subf %104, %118 : vector<8x64xf32>
    %cst_50 = arith.constant 9.99999974E-6 : f32
    %120 = vector.broadcast %cst_50 : f32 to vector<8x1xf32>
    %121 = arith.addf %117, %120 : vector<8x1xf32>
    %122 = math.rsqrt %121 : vector<8x1xf32>
    %123 = vector.broadcast %122 : vector<8x1xf32> to vector<8x64xf32>
    %124 = arith.mulf %119, %123 : vector<8x64xf32>
    %125 = vector.broadcast %105 : vector<1x64xf32> to vector<8x64xf32>
    %126 = arith.mulf %124, %125 : vector<8x64xf32>
    %127 = vector.broadcast %106 : vector<1x64xf32> to vector<8x64xf32>
    %128 = arith.addf %126, %127 : vector<8x64xf32>
    %c0_51 = arith.constant 0 : index
    %c0_52 = arith.constant 0 : index
    %c0_53 = arith.constant 0 : index
    %129 = vector.load %arg15[%c0_51, %c0_52, %c0_53] : memref<2x64x64xf32, #tpu.memory_space<vmem>>, vector<1x64x64xf32>
    %130 = vector.shape_cast %129 : vector<1x64x64xf32> to vector<64x64xf32>
    %cst_54 = arith.constant dense<0.000000e+00> : vector<8x64xf32>
    %131 = tpu.matmul %128, %130, %cst_54 {dimension_numbers = #tpu.dot_dimension_numbers<[1], [0], [0], [1], [0, 0, 1, 1], [], []>} : vector<8x64xf32>, vector<64x64xf32>, vector<8x64xf32> -> vector<8x64xf32>
    %132 = vector.extract_strided_slice %56 {offsets = [3, 0], sizes = [1, 64], strides = [1, 1]} : vector<16x64xf32> to vector<1x64xf32>
    %133 = vector.broadcast %132 : vector<1x64xf32> to vector<8x64xf32>
    %134 = arith.addf %131, %133 : vector<8x64xf32>
    %135 = vector.extract_strided_slice %134 {offsets = [0, 0], sizes = [8, 16], strides = [1, 1]} : vector<8x64xf32> to vector<8x16xf32>
    %136 = vector.extract_strided_slice %134 {offsets = [0, 16], sizes = [8, 16], strides = [1, 1]} : vector<8x64xf32> to vector<8x16xf32>
    %137 = vector.extract_strided_slice %134 {offsets = [0, 32], sizes = [8, 16], strides = [1, 1]} : vector<8x64xf32> to vector<8x16xf32>
    %138 = vector.extract_strided_slice %134 {offsets = [0, 48], sizes = [8, 16], strides = [1, 1]} : vector<8x64xf32> to vector<8x16xf32>
    %139 = tpu.concatenate %135, %136, %137, %138 in 0 : vector<8x16xf32>, vector<8x16xf32>, vector<8x16xf32>, vector<8x16xf32> -> vector<32x16xf32>
    %140 = vector.extract_strided_slice %52 {offsets = [0, 0], sizes = [16, 64], strides = [1, 1]} : vector<16x256xf32> to vector<16x64xf32>
    %141 = vector.extract_strided_slice %140 {offsets = [0, 0], sizes = [16, 16], strides = [1, 1]} : vector<16x64xf32> to vector<16x16xf32>
    %142 = vector.extract_strided_slice %140 {offsets = [0, 16], sizes = [16, 16], strides = [1, 1]} : vector<16x64xf32> to vector<16x16xf32>
    %143 = vector.extract_strided_slice %140 {offsets = [0, 32], sizes = [16, 16], strides = [1, 1]} : vector<16x64xf32> to vector<16x16xf32>
    %144 = vector.extract_strided_slice %140 {offsets = [0, 48], sizes = [16, 16], strides = [1, 1]} : vector<16x64xf32> to vector<16x16xf32>
    %145 = tpu.concatenate %141, %142, %143, %144 in 0 : vector<16x16xf32>, vector<16x16xf32>, vector<16x16xf32>, vector<16x16xf32> -> vector<64x16xf32>
    %146 = vector.extract_strided_slice %52 {offsets = [0, 64], sizes = [16, 64], strides = [1, 1]} : vector<16x256xf32> to vector<16x64xf32>
    %147 = vector.extract_strided_slice %146 {offsets = [0, 0], sizes = [16, 16], strides = [1, 1]} : vector<16x64xf32> to vector<16x16xf32>
    %148 = vector.extract_strided_slice %146 {offsets = [0, 16], sizes = [16, 16], strides = [1, 1]} : vector<16x64xf32> to vector<16x16xf32>
    %149 = vector.extract_strided_slice %146 {offsets = [0, 32], sizes = [16, 16], strides = [1, 1]} : vector<16x64xf32> to vector<16x16xf32>
    %150 = vector.extract_strided_slice %146 {offsets = [0, 48], sizes = [16, 16], strides = [1, 1]} : vector<16x64xf32> to vector<16x16xf32>
    %151 = tpu.concatenate %147, %148, %149, %150 in 0 : vector<16x16xf32>, vector<16x16xf32>, vector<16x16xf32>, vector<16x16xf32> -> vector<64x16xf32>
    %cst_55 = arith.constant dense<0.000000e+00> : vector<32x64xf32>
    %152 = tpu.matmul %139, %145, %cst_55 {dimension_numbers = #tpu.dot_dimension_numbers<[1], [1], [0], [0], [0, 0, 1, 0], [], []>} : vector<32x16xf32>, vector<64x16xf32>, vector<32x64xf32> -> vector<32x64xf32>
    %cst_56 = arith.constant 2.500000e-01 : f32
    %153 = vector.broadcast %cst_56 : f32 to vector<32x64xf32>
    %154 = arith.mulf %152, %153 : vector<32x64xf32>
    %155 = arith.addf %154, %35 : vector<32x64xf32>
    %cst_57 = arith.constant dense<0xFF800000> : vector<32xf32>
    %156 = vector.multi_reduction <maximumf>, %155, %cst_57 [1] : vector<32x64xf32> to vector<32xf32>
    %157 = vector.shape_cast %156 : vector<32xf32> to vector<32x1xf32>
    %158 = vector.broadcast %157 : vector<32x1xf32> to vector<32x64xf32>
    %159 = arith.subf %155, %158 : vector<32x64xf32>
    %160 = math.exp %159 : vector<32x64xf32>
    %cst_58 = arith.constant dense<0.000000e+00> : vector<32xf32>
    %161 = vector.multi_reduction <add>, %160, %cst_58 [1] : vector<32x64xf32> to vector<32xf32>
    %162 = vector.shape_cast %161 : vector<32xf32> to vector<32x1xf32>
    %163 = vector.broadcast %162 : vector<32x1xf32> to vector<32x64xf32>
    %164 = arith.divf %160, %163 : vector<32x64xf32>
    %cst_59 = arith.constant dense<0.000000e+00> : vector<32x16xf32>
    %165 = tpu.matmul %164, %151, %cst_59 {dimension_numbers = #tpu.dot_dimension_numbers<[1], [0], [0], [1], [0, 0, 1, 1], [], []>} : vector<32x64xf32>, vector<64x16xf32>, vector<32x16xf32> -> vector<32x16xf32>
    %166 = vector.extract_strided_slice %165 {offsets = [0, 0], sizes = [8, 16], strides = [1, 1]} : vector<32x16xf32> to vector<8x16xf32>
    %167 = vector.extract_strided_slice %165 {offsets = [8, 0], sizes = [8, 16], strides = [1, 1]} : vector<32x16xf32> to vector<8x16xf32>
    %168 = vector.extract_strided_slice %165 {offsets = [16, 0], sizes = [8, 16], strides = [1, 1]} : vector<32x16xf32> to vector<8x16xf32>
    %169 = vector.extract_strided_slice %165 {offsets = [24, 0], sizes = [8, 16], strides = [1, 1]} : vector<32x16xf32> to vector<8x16xf32>
    %170 = tpu.concatenate %166, %167, %168, %169 in 1 : vector<8x16xf32>, vector<8x16xf32>, vector<8x16xf32>, vector<8x16xf32> -> vector<8x64xf32>
    %c0_60 = arith.constant 0 : index
    %c0_61 = arith.constant 0 : index
    %c0_62 = arith.constant 0 : index
    %171 = vector.load %arg18[%c0_60, %c0_61, %c0_62] : memref<2x64x64xf32, #tpu.memory_space<vmem>>, vector<1x64x64xf32>
    %172 = vector.shape_cast %171 : vector<1x64x64xf32> to vector<64x64xf32>
    %cst_63 = arith.constant dense<0.000000e+00> : vector<8x64xf32>
    %173 = tpu.matmul %170, %172, %cst_63 {dimension_numbers = #tpu.dot_dimension_numbers<[1], [0], [0], [1], [0, 0, 1, 1], [], []>} : vector<8x64xf32>, vector<64x64xf32>, vector<8x64xf32> -> vector<8x64xf32>
    %174 = vector.extract_strided_slice %56 {offsets = [4, 0], sizes = [1, 64], strides = [1, 1]} : vector<16x64xf32> to vector<1x64xf32>
    %175 = vector.broadcast %174 : vector<1x64xf32> to vector<8x64xf32>
    %176 = arith.addf %173, %175 : vector<8x64xf32>
    %177 = arith.addf %128, %176 : vector<8x64xf32>
    %178 = vector.extract_strided_slice %56 {offsets = [5, 0], sizes = [1, 64], strides = [1, 1]} : vector<16x64xf32> to vector<1x64xf32>
    %179 = vector.extract_strided_slice %56 {offsets = [6, 0], sizes = [1, 64], strides = [1, 1]} : vector<16x64xf32> to vector<1x64xf32>
    %cst_64 = arith.constant dense<0.000000e+00> : vector<8xf32>
    %180 = vector.multi_reduction <add>, %177, %cst_64 [1] : vector<8x64xf32> to vector<8xf32>
    %181 = vector.shape_cast %180 : vector<8xf32> to vector<8x1xf32>
    %cst_65 = arith.constant 6.400000e+01 : f32
    %182 = vector.broadcast %cst_65 : f32 to vector<8x1xf32>
    %183 = arith.divf %181, %182 : vector<8x1xf32>
    %184 = vector.broadcast %183 : vector<8x1xf32> to vector<8x64xf32>
    %185 = arith.subf %177, %184 : vector<8x64xf32>
    %186 = arith.mulf %185, %185 : vector<8x64xf32>
    %cst_66 = arith.constant dense<0.000000e+00> : vector<8xf32>
    %187 = vector.multi_reduction <add>, %186, %cst_66 [1] : vector<8x64xf32> to vector<8xf32>
    %188 = vector.shape_cast %187 : vector<8xf32> to vector<8x1xf32>
    %cst_67 = arith.constant 6.400000e+01 : f32
    %189 = vector.broadcast %cst_67 : f32 to vector<8x1xf32>
    %190 = arith.divf %188, %189 : vector<8x1xf32>
    %191 = vector.broadcast %183 : vector<8x1xf32> to vector<8x64xf32>
    %192 = arith.subf %177, %191 : vector<8x64xf32>
    %cst_68 = arith.constant 9.99999974E-6 : f32
    %193 = vector.broadcast %cst_68 : f32 to vector<8x1xf32>
    %194 = arith.addf %190, %193 : vector<8x1xf32>
    %195 = math.rsqrt %194 : vector<8x1xf32>
    %196 = vector.broadcast %195 : vector<8x1xf32> to vector<8x64xf32>
    %197 = arith.mulf %192, %196 : vector<8x64xf32>
    %198 = vector.broadcast %178 : vector<1x64xf32> to vector<8x64xf32>
    %199 = arith.mulf %197, %198 : vector<8x64xf32>
    %200 = vector.broadcast %179 : vector<1x64xf32> to vector<8x64xf32>
    %201 = arith.addf %199, %200 : vector<8x64xf32>
    %c0_69 = arith.constant 0 : index
    %c0_70 = arith.constant 0 : index
    %c0_71 = arith.constant 0 : index
    %202 = vector.load %arg19[%c0_69, %c0_70, %c0_71] : memref<2x64x128xf32, #tpu.memory_space<vmem>>, vector<1x64x128xf32>
    %203 = vector.shape_cast %202 : vector<1x64x128xf32> to vector<64x128xf32>
    %cst_72 = arith.constant dense<0.000000e+00> : vector<8x128xf32>
    %204 = tpu.matmul %201, %203, %cst_72 {dimension_numbers = #tpu.dot_dimension_numbers<[1], [0], [0], [1], [0, 0, 1, 1], [], []>} : vector<8x64xf32>, vector<64x128xf32>, vector<8x128xf32> -> vector<8x128xf32>
    %c0_73 = arith.constant 0 : index
    %c0_74 = arith.constant 0 : index
    %c0_75 = arith.constant 0 : index
    %205 = vector.load %arg20[%c0_73, %c0_74, %c0_75] : memref<2x1x128xf32, #tpu.memory_space<vmem>>, vector<1x1x128xf32>
    %206 = vector.shape_cast %205 : vector<1x1x128xf32> to vector<1x128xf32>
    %207 = vector.broadcast %206 : vector<1x128xf32> to vector<8x128xf32>
    %208 = arith.addf %204, %207 : vector<8x128xf32>
    %cst_76 = arith.constant 0.000000e+00 : f32
    %209 = vector.broadcast %cst_76 : f32 to vector<8x128xf32>
    %210 = arith.maximumf %208, %209 : vector<8x128xf32>
    %c0_77 = arith.constant 0 : index
    %c0_78 = arith.constant 0 : index
    %c0_79 = arith.constant 0 : index
    %211 = vector.load %arg21[%c0_77, %c0_78, %c0_79] : memref<2x128x64xf32, #tpu.memory_space<vmem>>, vector<1x128x64xf32>
    %212 = vector.shape_cast %211 : vector<1x128x64xf32> to vector<128x64xf32>
    %cst_80 = arith.constant dense<0.000000e+00> : vector<8x64xf32>
    %213 = tpu.matmul %210, %212, %cst_80 {dimension_numbers = #tpu.dot_dimension_numbers<[1], [0], [0], [1], [0, 0, 1, 1], [], []>} : vector<8x128xf32>, vector<128x64xf32>, vector<8x64xf32> -> vector<8x64xf32>
    %214 = vector.extract_strided_slice %56 {offsets = [7, 0], sizes = [1, 64], strides = [1, 1]} : vector<16x64xf32> to vector<1x64xf32>
    %215 = vector.broadcast %214 : vector<1x64xf32> to vector<8x64xf32>
    %216 = arith.addf %213, %215 : vector<8x64xf32>
    %217 = arith.addf %201, %216 : vector<8x64xf32>
    %218 = vector.extract_strided_slice %56 {offsets = [8, 0], sizes = [1, 64], strides = [1, 1]} : vector<16x64xf32> to vector<1x64xf32>
    %219 = vector.extract_strided_slice %56 {offsets = [9, 0], sizes = [1, 64], strides = [1, 1]} : vector<16x64xf32> to vector<1x64xf32>
    %cst_81 = arith.constant dense<0.000000e+00> : vector<8xf32>
    %220 = vector.multi_reduction <add>, %217, %cst_81 [1] : vector<8x64xf32> to vector<8xf32>
    %221 = vector.shape_cast %220 : vector<8xf32> to vector<8x1xf32>
    %cst_82 = arith.constant 6.400000e+01 : f32
    %222 = vector.broadcast %cst_82 : f32 to vector<8x1xf32>
    %223 = arith.divf %221, %222 : vector<8x1xf32>
    %224 = vector.broadcast %223 : vector<8x1xf32> to vector<8x64xf32>
    %225 = arith.subf %217, %224 : vector<8x64xf32>
    %226 = arith.mulf %225, %225 : vector<8x64xf32>
    %cst_83 = arith.constant dense<0.000000e+00> : vector<8xf32>
    %227 = vector.multi_reduction <add>, %226, %cst_83 [1] : vector<8x64xf32> to vector<8xf32>
    %228 = vector.shape_cast %227 : vector<8xf32> to vector<8x1xf32>
    %cst_84 = arith.constant 6.400000e+01 : f32
    %229 = vector.broadcast %cst_84 : f32 to vector<8x1xf32>
    %230 = arith.divf %228, %229 : vector<8x1xf32>
    %231 = vector.broadcast %223 : vector<8x1xf32> to vector<8x64xf32>
    %232 = arith.subf %217, %231 : vector<8x64xf32>
    %cst_85 = arith.constant 9.99999974E-6 : f32
    %233 = vector.broadcast %cst_85 : f32 to vector<8x1xf32>
    %234 = arith.addf %230, %233 : vector<8x1xf32>
    %235 = math.rsqrt %234 : vector<8x1xf32>
    %236 = vector.broadcast %235 : vector<8x1xf32> to vector<8x64xf32>
    %237 = arith.mulf %232, %236 : vector<8x64xf32>
    %238 = vector.broadcast %218 : vector<1x64xf32> to vector<8x64xf32>
    %239 = arith.mulf %237, %238 : vector<8x64xf32>
    %240 = vector.broadcast %219 : vector<1x64xf32> to vector<8x64xf32>
    %241 = arith.addf %239, %240 : vector<8x64xf32>
    %c1 = arith.constant 1 : index
    %c0_86 = arith.constant 0 : index
    %c0_87 = arith.constant 0 : index
    %242 = vector.load %arg22[%c1, %c0_86, %c0_87] : memref<2x16x64xf32, #tpu.memory_space<vmem>>, vector<1x16x64xf32>
    %243 = vector.shape_cast %242 : vector<1x16x64xf32> to vector<16x64xf32>
    %c1_88 = arith.constant 1 : index
    %c0_89 = arith.constant 0 : index
    %c0_90 = arith.constant 0 : index
    %244 = vector.load %arg12[%c1_88, %c0_89, %c0_90] : memref<2x64x192xf32, #tpu.memory_space<vmem>>, vector<1x64x192xf32>
    %245 = vector.shape_cast %244 : vector<1x64x192xf32> to vector<64x192xf32>
    %cst_91 = arith.constant dense<0.000000e+00> : vector<8x192xf32>
    %246 = tpu.matmul %241, %245, %cst_91 {dimension_numbers = #tpu.dot_dimension_numbers<[1], [0], [0], [1], [0, 0, 1, 1], [], []>} : vector<8x64xf32>, vector<64x192xf32>, vector<8x192xf32> -> vector<8x192xf32>
    %c1_92 = arith.constant 1 : index
    %c0_93 = arith.constant 0 : index
    %c0_94 = arith.constant 0 : index
    %247 = vector.load %arg13[%c1_92, %c0_93, %c0_94] : memref<2x1x192xf32, #tpu.memory_space<vmem>>, vector<1x1x192xf32>
    %248 = vector.shape_cast %247 : vector<1x1x192xf32> to vector<1x192xf32>
    %249 = vector.broadcast %248 : vector<1x192xf32> to vector<8x192xf32>
    %250 = arith.addf %246, %249 : vector<8x192xf32>
    %251 = vector.extract_strided_slice %250 {offsets = [0, 0], sizes = [8, 16], strides = [1, 1]} : vector<8x192xf32> to vector<8x16xf32>
    %252 = vector.extract_strided_slice %250 {offsets = [0, 16], sizes = [8, 16], strides = [1, 1]} : vector<8x192xf32> to vector<8x16xf32>
    %253 = vector.extract_strided_slice %250 {offsets = [0, 32], sizes = [8, 16], strides = [1, 1]} : vector<8x192xf32> to vector<8x16xf32>
    %254 = vector.extract_strided_slice %250 {offsets = [0, 48], sizes = [8, 16], strides = [1, 1]} : vector<8x192xf32> to vector<8x16xf32>
    %255 = vector.extract_strided_slice %250 {offsets = [0, 64], sizes = [8, 16], strides = [1, 1]} : vector<8x192xf32> to vector<8x16xf32>
    %256 = vector.extract_strided_slice %250 {offsets = [0, 80], sizes = [8, 16], strides = [1, 1]} : vector<8x192xf32> to vector<8x16xf32>
    %257 = vector.extract_strided_slice %250 {offsets = [0, 96], sizes = [8, 16], strides = [1, 1]} : vector<8x192xf32> to vector<8x16xf32>
    %258 = vector.extract_strided_slice %250 {offsets = [0, 112], sizes = [8, 16], strides = [1, 1]} : vector<8x192xf32> to vector<8x16xf32>
    %259 = vector.extract_strided_slice %250 {offsets = [0, 128], sizes = [8, 16], strides = [1, 1]} : vector<8x192xf32> to vector<8x16xf32>
    %260 = vector.extract_strided_slice %250 {offsets = [0, 144], sizes = [8, 16], strides = [1, 1]} : vector<8x192xf32> to vector<8x16xf32>
    %261 = vector.extract_strided_slice %250 {offsets = [0, 160], sizes = [8, 16], strides = [1, 1]} : vector<8x192xf32> to vector<8x16xf32>
    %262 = vector.extract_strided_slice %250 {offsets = [0, 176], sizes = [8, 16], strides = [1, 1]} : vector<8x192xf32> to vector<8x16xf32>
    %263 = tpu.concatenate %251, %252, %253, %254 in 0 : vector<8x16xf32>, vector<8x16xf32>, vector<8x16xf32>, vector<8x16xf32> -> vector<32x16xf32>
    %264 = tpu.concatenate %255, %256, %257, %258 in 0 : vector<8x16xf32>, vector<8x16xf32>, vector<8x16xf32>, vector<8x16xf32> -> vector<32x16xf32>
    %265 = tpu.concatenate %259, %260, %261, %262 in 0 : vector<8x16xf32>, vector<8x16xf32>, vector<8x16xf32>, vector<8x16xf32> -> vector<32x16xf32>
    %cst_95 = arith.constant dense<0.000000e+00> : vector<32x32xf32>
    %266 = tpu.matmul %263, %264, %cst_95 {dimension_numbers = #tpu.dot_dimension_numbers<[1], [1], [0], [0], [0, 0, 1, 0], [], []>} : vector<32x16xf32>, vector<32x16xf32>, vector<32x32xf32> -> vector<32x32xf32>
    %cst_96 = arith.constant 2.500000e-01 : f32
    %267 = vector.broadcast %cst_96 : f32 to vector<32x32xf32>
    %268 = arith.mulf %266, %267 : vector<32x32xf32>
    %269 = arith.addf %268, %25 : vector<32x32xf32>
    %cst_97 = arith.constant dense<0xFF800000> : vector<32xf32>
    %270 = vector.multi_reduction <maximumf>, %269, %cst_97 [1] : vector<32x32xf32> to vector<32xf32>
    %271 = vector.shape_cast %270 : vector<32xf32> to vector<32x1xf32>
    %272 = vector.broadcast %271 : vector<32x1xf32> to vector<32x32xf32>
    %273 = arith.subf %269, %272 : vector<32x32xf32>
    %274 = math.exp %273 : vector<32x32xf32>
    %cst_98 = arith.constant dense<0.000000e+00> : vector<32xf32>
    %275 = vector.multi_reduction <add>, %274, %cst_98 [1] : vector<32x32xf32> to vector<32xf32>
    %276 = vector.shape_cast %275 : vector<32xf32> to vector<32x1xf32>
    %277 = vector.broadcast %276 : vector<32x1xf32> to vector<32x32xf32>
    %278 = arith.divf %274, %277 : vector<32x32xf32>
    %cst_99 = arith.constant dense<0.000000e+00> : vector<32x16xf32>
    %279 = tpu.matmul %278, %265, %cst_99 {dimension_numbers = #tpu.dot_dimension_numbers<[1], [0], [0], [1], [0, 0, 1, 1], [], []>} : vector<32x32xf32>, vector<32x16xf32>, vector<32x16xf32> -> vector<32x16xf32>
    %280 = vector.extract_strided_slice %279 {offsets = [0, 0], sizes = [8, 16], strides = [1, 1]} : vector<32x16xf32> to vector<8x16xf32>
    %281 = vector.extract_strided_slice %279 {offsets = [8, 0], sizes = [8, 16], strides = [1, 1]} : vector<32x16xf32> to vector<8x16xf32>
    %282 = vector.extract_strided_slice %279 {offsets = [16, 0], sizes = [8, 16], strides = [1, 1]} : vector<32x16xf32> to vector<8x16xf32>
    %283 = vector.extract_strided_slice %279 {offsets = [24, 0], sizes = [8, 16], strides = [1, 1]} : vector<32x16xf32> to vector<8x16xf32>
    %284 = tpu.concatenate %280, %281, %282, %283 in 1 : vector<8x16xf32>, vector<8x16xf32>, vector<8x16xf32>, vector<8x16xf32> -> vector<8x64xf32>
    %c1_100 = arith.constant 1 : index
    %c0_101 = arith.constant 0 : index
    %c0_102 = arith.constant 0 : index
    %285 = vector.load %arg14[%c1_100, %c0_101, %c0_102] : memref<2x64x64xf32, #tpu.memory_space<vmem>>, vector<1x64x64xf32>
    %286 = vector.shape_cast %285 : vector<1x64x64xf32> to vector<64x64xf32>
    %cst_103 = arith.constant dense<0.000000e+00> : vector<8x64xf32>
    %287 = tpu.matmul %284, %286, %cst_103 {dimension_numbers = #tpu.dot_dimension_numbers<[1], [0], [0], [1], [0, 0, 1, 1], [], []>} : vector<8x64xf32>, vector<64x64xf32>, vector<8x64xf32> -> vector<8x64xf32>
    %288 = vector.extract_strided_slice %243 {offsets = [0, 0], sizes = [1, 64], strides = [1, 1]} : vector<16x64xf32> to vector<1x64xf32>
    %289 = vector.broadcast %288 : vector<1x64xf32> to vector<8x64xf32>
    %290 = arith.addf %287, %289 : vector<8x64xf32>
    %291 = arith.addf %241, %290 : vector<8x64xf32>
    %292 = vector.extract_strided_slice %243 {offsets = [1, 0], sizes = [1, 64], strides = [1, 1]} : vector<16x64xf32> to vector<1x64xf32>
    %293 = vector.extract_strided_slice %243 {offsets = [2, 0], sizes = [1, 64], strides = [1, 1]} : vector<16x64xf32> to vector<1x64xf32>
    %cst_104 = arith.constant dense<0.000000e+00> : vector<8xf32>
    %294 = vector.multi_reduction <add>, %291, %cst_104 [1] : vector<8x64xf32> to vector<8xf32>
    %295 = vector.shape_cast %294 : vector<8xf32> to vector<8x1xf32>
    %cst_105 = arith.constant 6.400000e+01 : f32
    %296 = vector.broadcast %cst_105 : f32 to vector<8x1xf32>
    %297 = arith.divf %295, %296 : vector<8x1xf32>
    %298 = vector.broadcast %297 : vector<8x1xf32> to vector<8x64xf32>
    %299 = arith.subf %291, %298 : vector<8x64xf32>
    %300 = arith.mulf %299, %299 : vector<8x64xf32>
    %cst_106 = arith.constant dense<0.000000e+00> : vector<8xf32>
    %301 = vector.multi_reduction <add>, %300, %cst_106 [1] : vector<8x64xf32> to vector<8xf32>
    %302 = vector.shape_cast %301 : vector<8xf32> to vector<8x1xf32>
    %cst_107 = arith.constant 6.400000e+01 : f32
    %303 = vector.broadcast %cst_107 : f32 to vector<8x1xf32>
    %304 = arith.divf %302, %303 : vector<8x1xf32>
    %305 = vector.broadcast %297 : vector<8x1xf32> to vector<8x64xf32>
    %306 = arith.subf %291, %305 : vector<8x64xf32>
    %cst_108 = arith.constant 9.99999974E-6 : f32
    %307 = vector.broadcast %cst_108 : f32 to vector<8x1xf32>
    %308 = arith.addf %304, %307 : vector<8x1xf32>
    %309 = math.rsqrt %308 : vector<8x1xf32>
    %310 = vector.broadcast %309 : vector<8x1xf32> to vector<8x64xf32>
    %311 = arith.mulf %306, %310 : vector<8x64xf32>
    %312 = vector.broadcast %292 : vector<1x64xf32> to vector<8x64xf32>
    %313 = arith.mulf %311, %312 : vector<8x64xf32>
    %314 = vector.broadcast %293 : vector<1x64xf32> to vector<8x64xf32>
    %315 = arith.addf %313, %314 : vector<8x64xf32>
    %c1_109 = arith.constant 1 : index
    %c0_110 = arith.constant 0 : index
    %c0_111 = arith.constant 0 : index
    %316 = vector.load %arg15[%c1_109, %c0_110, %c0_111] : memref<2x64x64xf32, #tpu.memory_space<vmem>>, vector<1x64x64xf32>
    %317 = vector.shape_cast %316 : vector<1x64x64xf32> to vector<64x64xf32>
    %cst_112 = arith.constant dense<0.000000e+00> : vector<8x64xf32>
    %318 = tpu.matmul %315, %317, %cst_112 {dimension_numbers = #tpu.dot_dimension_numbers<[1], [0], [0], [1], [0, 0, 1, 1], [], []>} : vector<8x64xf32>, vector<64x64xf32>, vector<8x64xf32> -> vector<8x64xf32>
    %319 = vector.extract_strided_slice %243 {offsets = [3, 0], sizes = [1, 64], strides = [1, 1]} : vector<16x64xf32> to vector<1x64xf32>
    %320 = vector.broadcast %319 : vector<1x64xf32> to vector<8x64xf32>
    %321 = arith.addf %318, %320 : vector<8x64xf32>
    %322 = vector.extract_strided_slice %321 {offsets = [0, 0], sizes = [8, 16], strides = [1, 1]} : vector<8x64xf32> to vector<8x16xf32>
    %323 = vector.extract_strided_slice %321 {offsets = [0, 16], sizes = [8, 16], strides = [1, 1]} : vector<8x64xf32> to vector<8x16xf32>
    %324 = vector.extract_strided_slice %321 {offsets = [0, 32], sizes = [8, 16], strides = [1, 1]} : vector<8x64xf32> to vector<8x16xf32>
    %325 = vector.extract_strided_slice %321 {offsets = [0, 48], sizes = [8, 16], strides = [1, 1]} : vector<8x64xf32> to vector<8x16xf32>
    %326 = tpu.concatenate %322, %323, %324, %325 in 0 : vector<8x16xf32>, vector<8x16xf32>, vector<8x16xf32>, vector<8x16xf32> -> vector<32x16xf32>
    %327 = vector.extract_strided_slice %52 {offsets = [0, 128], sizes = [16, 64], strides = [1, 1]} : vector<16x256xf32> to vector<16x64xf32>
    %328 = vector.extract_strided_slice %327 {offsets = [0, 0], sizes = [16, 16], strides = [1, 1]} : vector<16x64xf32> to vector<16x16xf32>
    %329 = vector.extract_strided_slice %327 {offsets = [0, 16], sizes = [16, 16], strides = [1, 1]} : vector<16x64xf32> to vector<16x16xf32>
    %330 = vector.extract_strided_slice %327 {offsets = [0, 32], sizes = [16, 16], strides = [1, 1]} : vector<16x64xf32> to vector<16x16xf32>
    %331 = vector.extract_strided_slice %327 {offsets = [0, 48], sizes = [16, 16], strides = [1, 1]} : vector<16x64xf32> to vector<16x16xf32>
    %332 = tpu.concatenate %328, %329, %330, %331 in 0 : vector<16x16xf32>, vector<16x16xf32>, vector<16x16xf32>, vector<16x16xf32> -> vector<64x16xf32>
    %333 = vector.extract_strided_slice %52 {offsets = [0, 192], sizes = [16, 64], strides = [1, 1]} : vector<16x256xf32> to vector<16x64xf32>
    %334 = vector.extract_strided_slice %333 {offsets = [0, 0], sizes = [16, 16], strides = [1, 1]} : vector<16x64xf32> to vector<16x16xf32>
    %335 = vector.extract_strided_slice %333 {offsets = [0, 16], sizes = [16, 16], strides = [1, 1]} : vector<16x64xf32> to vector<16x16xf32>
    %336 = vector.extract_strided_slice %333 {offsets = [0, 32], sizes = [16, 16], strides = [1, 1]} : vector<16x64xf32> to vector<16x16xf32>
    %337 = vector.extract_strided_slice %333 {offsets = [0, 48], sizes = [16, 16], strides = [1, 1]} : vector<16x64xf32> to vector<16x16xf32>
    %338 = tpu.concatenate %334, %335, %336, %337 in 0 : vector<16x16xf32>, vector<16x16xf32>, vector<16x16xf32>, vector<16x16xf32> -> vector<64x16xf32>
    %cst_113 = arith.constant dense<0.000000e+00> : vector<32x64xf32>
    %339 = tpu.matmul %326, %332, %cst_113 {dimension_numbers = #tpu.dot_dimension_numbers<[1], [1], [0], [0], [0, 0, 1, 0], [], []>} : vector<32x16xf32>, vector<64x16xf32>, vector<32x64xf32> -> vector<32x64xf32>
    %cst_114 = arith.constant 2.500000e-01 : f32
    %340 = vector.broadcast %cst_114 : f32 to vector<32x64xf32>
    %341 = arith.mulf %339, %340 : vector<32x64xf32>
    %342 = arith.addf %341, %35 : vector<32x64xf32>
    %cst_115 = arith.constant dense<0xFF800000> : vector<32xf32>
    %343 = vector.multi_reduction <maximumf>, %342, %cst_115 [1] : vector<32x64xf32> to vector<32xf32>
    %344 = vector.shape_cast %343 : vector<32xf32> to vector<32x1xf32>
    %345 = vector.broadcast %344 : vector<32x1xf32> to vector<32x64xf32>
    %346 = arith.subf %342, %345 : vector<32x64xf32>
    %347 = math.exp %346 : vector<32x64xf32>
    %cst_116 = arith.constant dense<0.000000e+00> : vector<32xf32>
    %348 = vector.multi_reduction <add>, %347, %cst_116 [1] : vector<32x64xf32> to vector<32xf32>
    %349 = vector.shape_cast %348 : vector<32xf32> to vector<32x1xf32>
    %350 = vector.broadcast %349 : vector<32x1xf32> to vector<32x64xf32>
    %351 = arith.divf %347, %350 : vector<32x64xf32>
    %cst_117 = arith.constant dense<0.000000e+00> : vector<32x16xf32>
    %352 = tpu.matmul %351, %338, %cst_117 {dimension_numbers = #tpu.dot_dimension_numbers<[1], [0], [0], [1], [0, 0, 1, 1], [], []>} : vector<32x64xf32>, vector<64x16xf32>, vector<32x16xf32> -> vector<32x16xf32>
    %353 = vector.extract_strided_slice %352 {offsets = [0, 0], sizes = [8, 16], strides = [1, 1]} : vector<32x16xf32> to vector<8x16xf32>
    %354 = vector.extract_strided_slice %352 {offsets = [8, 0], sizes = [8, 16], strides = [1, 1]} : vector<32x16xf32> to vector<8x16xf32>
    %355 = vector.extract_strided_slice %352 {offsets = [16, 0], sizes = [8, 16], strides = [1, 1]} : vector<32x16xf32> to vector<8x16xf32>
    %356 = vector.extract_strided_slice %352 {offsets = [24, 0], sizes = [8, 16], strides = [1, 1]} : vector<32x16xf32> to vector<8x16xf32>
    %357 = tpu.concatenate %353, %354, %355, %356 in 1 : vector<8x16xf32>, vector<8x16xf32>, vector<8x16xf32>, vector<8x16xf32> -> vector<8x64xf32>
    %c1_118 = arith.constant 1 : index
    %c0_119 = arith.constant 0 : index
    %c0_120 = arith.constant 0 : index
    %358 = vector.load %arg18[%c1_118, %c0_119, %c0_120] : memref<2x64x64xf32, #tpu.memory_space<vmem>>, vector<1x64x64xf32>
    %359 = vector.shape_cast %358 : vector<1x64x64xf32> to vector<64x64xf32>
    %cst_121 = arith.constant dense<0.000000e+00> : vector<8x64xf32>
    %360 = tpu.matmul %357, %359, %cst_121 {dimension_numbers = #tpu.dot_dimension_numbers<[1], [0], [0], [1], [0, 0, 1, 1], [], []>} : vector<8x64xf32>, vector<64x64xf32>, vector<8x64xf32> -> vector<8x64xf32>
    %361 = vector.extract_strided_slice %243 {offsets = [4, 0], sizes = [1, 64], strides = [1, 1]} : vector<16x64xf32> to vector<1x64xf32>
    %362 = vector.broadcast %361 : vector<1x64xf32> to vector<8x64xf32>
    %363 = arith.addf %360, %362 : vector<8x64xf32>
    %364 = arith.addf %315, %363 : vector<8x64xf32>
    %365 = vector.extract_strided_slice %243 {offsets = [5, 0], sizes = [1, 64], strides = [1, 1]} : vector<16x64xf32> to vector<1x64xf32>
    %366 = vector.extract_strided_slice %243 {offsets = [6, 0], sizes = [1, 64], strides = [1, 1]} : vector<16x64xf32> to vector<1x64xf32>
    %cst_122 = arith.constant dense<0.000000e+00> : vector<8xf32>
    %367 = vector.multi_reduction <add>, %364, %cst_122 [1] : vector<8x64xf32> to vector<8xf32>
    %368 = vector.shape_cast %367 : vector<8xf32> to vector<8x1xf32>
    %cst_123 = arith.constant 6.400000e+01 : f32
    %369 = vector.broadcast %cst_123 : f32 to vector<8x1xf32>
    %370 = arith.divf %368, %369 : vector<8x1xf32>
    %371 = vector.broadcast %370 : vector<8x1xf32> to vector<8x64xf32>
    %372 = arith.subf %364, %371 : vector<8x64xf32>
    %373 = arith.mulf %372, %372 : vector<8x64xf32>
    %cst_124 = arith.constant dense<0.000000e+00> : vector<8xf32>
    %374 = vector.multi_reduction <add>, %373, %cst_124 [1] : vector<8x64xf32> to vector<8xf32>
    %375 = vector.shape_cast %374 : vector<8xf32> to vector<8x1xf32>
    %cst_125 = arith.constant 6.400000e+01 : f32
    %376 = vector.broadcast %cst_125 : f32 to vector<8x1xf32>
    %377 = arith.divf %375, %376 : vector<8x1xf32>
    %378 = vector.broadcast %370 : vector<8x1xf32> to vector<8x64xf32>
    %379 = arith.subf %364, %378 : vector<8x64xf32>
    %cst_126 = arith.constant 9.99999974E-6 : f32
    %380 = vector.broadcast %cst_126 : f32 to vector<8x1xf32>
    %381 = arith.addf %377, %380 : vector<8x1xf32>
    %382 = math.rsqrt %381 : vector<8x1xf32>
    %383 = vector.broadcast %382 : vector<8x1xf32> to vector<8x64xf32>
    %384 = arith.mulf %379, %383 : vector<8x64xf32>
    %385 = vector.broadcast %365 : vector<1x64xf32> to vector<8x64xf32>
    %386 = arith.mulf %384, %385 : vector<8x64xf32>
    %387 = vector.broadcast %366 : vector<1x64xf32> to vector<8x64xf32>
    %388 = arith.addf %386, %387 : vector<8x64xf32>
    %c1_127 = arith.constant 1 : index
    %c0_128 = arith.constant 0 : index
    %c0_129 = arith.constant 0 : index
    %389 = vector.load %arg19[%c1_127, %c0_128, %c0_129] : memref<2x64x128xf32, #tpu.memory_space<vmem>>, vector<1x64x128xf32>
    %390 = vector.shape_cast %389 : vector<1x64x128xf32> to vector<64x128xf32>
    %cst_130 = arith.constant dense<0.000000e+00> : vector<8x128xf32>
    %391 = tpu.matmul %388, %390, %cst_130 {dimension_numbers = #tpu.dot_dimension_numbers<[1], [0], [0], [1], [0, 0, 1, 1], [], []>} : vector<8x64xf32>, vector<64x128xf32>, vector<8x128xf32> -> vector<8x128xf32>
    %c1_131 = arith.constant 1 : index
    %c0_132 = arith.constant 0 : index
    %c0_133 = arith.constant 0 : index
    %392 = vector.load %arg20[%c1_131, %c0_132, %c0_133] : memref<2x1x128xf32, #tpu.memory_space<vmem>>, vector<1x1x128xf32>
    %393 = vector.shape_cast %392 : vector<1x1x128xf32> to vector<1x128xf32>
    %394 = vector.broadcast %393 : vector<1x128xf32> to vector<8x128xf32>
    %395 = arith.addf %391, %394 : vector<8x128xf32>
    %cst_134 = arith.constant 0.000000e+00 : f32
    %396 = vector.broadcast %cst_134 : f32 to vector<8x128xf32>
    %397 = arith.maximumf %395, %396 : vector<8x128xf32>
    %c1_135 = arith.constant 1 : index
    %c0_136 = arith.constant 0 : index
    %c0_137 = arith.constant 0 : index
    %398 = vector.load %arg21[%c1_135, %c0_136, %c0_137] : memref<2x128x64xf32, #tpu.memory_space<vmem>>, vector<1x128x64xf32>
    %399 = vector.shape_cast %398 : vector<1x128x64xf32> to vector<128x64xf32>
    %cst_138 = arith.constant dense<0.000000e+00> : vector<8x64xf32>
    %400 = tpu.matmul %397, %399, %cst_138 {dimension_numbers = #tpu.dot_dimension_numbers<[1], [0], [0], [1], [0, 0, 1, 1], [], []>} : vector<8x128xf32>, vector<128x64xf32>, vector<8x64xf32> -> vector<8x64xf32>
    %401 = vector.extract_strided_slice %243 {offsets = [7, 0], sizes = [1, 64], strides = [1, 1]} : vector<16x64xf32> to vector<1x64xf32>
    %402 = vector.broadcast %401 : vector<1x64xf32> to vector<8x64xf32>
    %403 = arith.addf %400, %402 : vector<8x64xf32>
    %404 = arith.addf %388, %403 : vector<8x64xf32>
    %405 = vector.extract_strided_slice %243 {offsets = [8, 0], sizes = [1, 64], strides = [1, 1]} : vector<16x64xf32> to vector<1x64xf32>
    %406 = vector.extract_strided_slice %243 {offsets = [9, 0], sizes = [1, 64], strides = [1, 1]} : vector<16x64xf32> to vector<1x64xf32>
    %cst_139 = arith.constant dense<0.000000e+00> : vector<8xf32>
    %407 = vector.multi_reduction <add>, %404, %cst_139 [1] : vector<8x64xf32> to vector<8xf32>
    %408 = vector.shape_cast %407 : vector<8xf32> to vector<8x1xf32>
    %cst_140 = arith.constant 6.400000e+01 : f32
    %409 = vector.broadcast %cst_140 : f32 to vector<8x1xf32>
    %410 = arith.divf %408, %409 : vector<8x1xf32>
    %411 = vector.broadcast %410 : vector<8x1xf32> to vector<8x64xf32>
    %412 = arith.subf %404, %411 : vector<8x64xf32>
    %413 = arith.mulf %412, %412 : vector<8x64xf32>
    %cst_141 = arith.constant dense<0.000000e+00> : vector<8xf32>
    %414 = vector.multi_reduction <add>, %413, %cst_141 [1] : vector<8x64xf32> to vector<8xf32>
    %415 = vector.shape_cast %414 : vector<8xf32> to vector<8x1xf32>
    %cst_142 = arith.constant 6.400000e+01 : f32
    %416 = vector.broadcast %cst_142 : f32 to vector<8x1xf32>
    %417 = arith.divf %415, %416 : vector<8x1xf32>
    %418 = vector.broadcast %410 : vector<8x1xf32> to vector<8x64xf32>
    %419 = arith.subf %404, %418 : vector<8x64xf32>
    %cst_143 = arith.constant 9.99999974E-6 : f32
    %420 = vector.broadcast %cst_143 : f32 to vector<8x1xf32>
    %421 = arith.addf %417, %420 : vector<8x1xf32>
    %422 = math.rsqrt %421 : vector<8x1xf32>
    %423 = vector.broadcast %422 : vector<8x1xf32> to vector<8x64xf32>
    %424 = arith.mulf %419, %423 : vector<8x64xf32>
    %425 = vector.broadcast %405 : vector<1x64xf32> to vector<8x64xf32>
    %426 = arith.mulf %424, %425 : vector<8x64xf32>
    %427 = vector.broadcast %406 : vector<1x64xf32> to vector<8x64xf32>
    %428 = arith.addf %426, %427 : vector<8x64xf32>
    %c0_144 = arith.constant 0 : index
    %c0_145 = arith.constant 0 : index
    %429 = vector.load %arg23[%c0_144, %c0_145] : memref<64x128xf32, #tpu.memory_space<vmem>>, vector<64x128xf32>
    %cst_146 = arith.constant dense<0.000000e+00> : vector<8x128xf32>
    %430 = tpu.matmul %428, %429, %cst_146 {dimension_numbers = #tpu.dot_dimension_numbers<[1], [0], [0], [1], [0, 0, 1, 1], [], []>} : vector<8x64xf32>, vector<64x128xf32>, vector<8x128xf32> -> vector<8x128xf32>
    %c0_147 = arith.constant 0 : index
    %c0_148 = arith.constant 0 : index
    %431 = vector.load %arg24[%c0_147, %c0_148] : memref<1x128xf32, #tpu.memory_space<vmem>>, vector<1x128xf32>
    %432 = vector.broadcast %431 : vector<1x128xf32> to vector<8x128xf32>
    %433 = arith.addf %430, %432 : vector<8x128xf32>
    %c0_149 = arith.constant 0 : index
    %c0_150 = arith.constant 0 : index
    %c0_151 = arith.constant 0 : index
    %434 = vector.load %arg25[%c0_149, %c0_150, %c0_151] : memref<1x8x128xf32, #tpu.memory_space<vmem>>, vector<1x8x128xf32>
    %435 = vector.shape_cast %434 : vector<1x8x128xf32> to vector<8x128xf32>
    %436 = vector.shape_cast %433 : vector<8x128xf32> to vector<1x8x128xf32>
    tpu.vector_store %arg25[%c0_149, %c0_150, %c0_151], %436 {strides = array<i32>} : memref<1x8x128xf32, #tpu.memory_space<vmem>>, vector<1x8x128xf32>,
    return
  }
  func.func @transform_0(%arg0: i32) -> (i32, i32, i32) {
    %c0_i32 = arith.constant 0 : i32
    %c0_i32_0 = arith.constant 0 : i32
    %c0_i32_1 = arith.constant 0 : i32
    return %arg0, %c0_i32, %c0_i32_0 : i32, i32, i32
  }
  func.func @transform_1(%arg0: i32) -> (i32, i32, i32) {
    %c0_i32 = arith.constant 0 : i32
    %c0_i32_0 = arith.constant 0 : i32
    %c0_i32_1 = arith.constant 0 : i32
    return %arg0, %c0_i32, %c0_i32_0 : i32, i32, i32
  }
  func.func @transform_2(%arg0: i32) -> (i32, i32) {
    %c0_i32 = arith.constant 0 : i32
    %c0_i32_0 = arith.constant 0 : i32
    %c0_i32_1 = arith.constant 0 : i32
    return %c0_i32, %c0_i32_0 : i32, i32
  }
  func.func @transform_3(%arg0: i32) -> (i32, i32) {
    %c0_i32 = arith.constant 0 : i32
    %c0_i32_0 = arith.constant 0 : i32
    %c0_i32_1 = arith.constant 0 : i32
    return %c0_i32, %c0_i32_0 : i32, i32
  }
  func.func @transform_4(%arg0: i32) -> (i32, i32, i32) {
    %c0_i32 = arith.constant 0 : i32
    %c0_i32_0 = arith.constant 0 : i32
    %c0_i32_1 = arith.constant 0 : i32
    %c0_i32_2 = arith.constant 0 : i32
    return %c0_i32, %c0_i32_0, %c0_i32_1 : i32, i32, i32
  }
  func.func @transform_5(%arg0: i32) -> (i32, i32, i32) {
    %c0_i32 = arith.constant 0 : i32
    %c0_i32_0 = arith.constant 0 : i32
    %c0_i32_1 = arith.constant 0 : i32
    %c0_i32_2 = arith.constant 0 : i32
    return %c0_i32, %c0_i32_0, %c0_i32_1 : i32, i32, i32
  }
  func.func @transform_6(%arg0: i32) -> (i32, i32, i32) {
    %c0_i32 = arith.constant 0 : i32
    %c0_i32_0 = arith.constant 0 : i32
    %c0_i32_1 = arith.constant 0 : i32
    %c0_i32_2 = arith.constant 0 : i32
    return %c0_i32, %c0_i32_0, %c0_i32_1 : i32, i32, i32
  }
  func.func @transform_7(%arg0: i32) -> (i32, i32, i32) {
    %c0_i32 = arith.constant 0 : i32
    %c0_i32_0 = arith.constant 0 : i32
    %c0_i32_1 = arith.constant 0 : i32
    %c0_i32_2 = arith.constant 0 : i32
    return %c0_i32, %c0_i32_0, %c0_i32_1 : i32, i32, i32
  }
  func.func @transform_8(%arg0: i32) -> (i32, i32, i32) {
    %c0_i32 = arith.constant 0 : i32
    %c0_i32_0 = arith.constant 0 : i32
    %c0_i32_1 = arith.constant 0 : i32
    %c0_i32_2 = arith.constant 0 : i32
    return %c0_i32, %c0_i32_0, %c0_i32_1 : i32, i32, i32
  }
  func.func @transform_9(%arg0: i32) -> (i32, i32, i32) {
    %c0_i32 = arith.constant 0 : i32
    %c0_i32_0 = arith.constant 0 : i32
    %c0_i32_1 = arith.constant 0 : i32
    %c0_i32_2 = arith.constant 0 : i32
    return %c0_i32, %c0_i32_0, %c0_i32_1 : i32, i32, i32
  }
  func.func @transform_10(%arg0: i32) -> (i32, i32, i32) {
    %c0_i32 = arith.constant 0 : i32
    %c0_i32_0 = arith.constant 0 : i32
    %c0_i32_1 = arith.constant 0 : i32
    %c0_i32_2 = arith.constant 0 : i32
    return %c0_i32, %c0_i32_0, %c0_i32_1 : i32, i32, i32
  }
  func.func @transform_11(%arg0: i32) -> (i32, i32, i32) {
    %c0_i32 = arith.constant 0 : i32
    %c0_i32_0 = arith.constant 0 : i32
    %c0_i32_1 = arith.constant 0 : i32
    %c0_i32_2 = arith.constant 0 : i32
    return %c0_i32, %c0_i32_0, %c0_i32_1 : i32, i32, i32
  }
  func.func @transform_12(%arg0: i32) -> (i32, i32, i32) {
    %c0_i32 = arith.constant 0 : i32
    %c0_i32_0 = arith.constant 0 : i32
    %c0_i32_1 = arith.constant 0 : i32
    %c0_i32_2 = arith.constant 0 : i32
    return %c0_i32, %c0_i32_0, %c0_i32_1 : i32, i32, i32
  }
  func.func @transform_13(%arg0: i32) -> (i32, i32, i32) {
    %c0_i32 = arith.constant 0 : i32
    %c0_i32_0 = arith.constant 0 : i32
    %c0_i32_1 = arith.constant 0 : i32
    %c0_i32_2 = arith.constant 0 : i32
    return %c0_i32, %c0_i32_0, %c0_i32_1 : i32, i32, i32
  }
  func.func @transform_14(%arg0: i32) -> (i32, i32, i32) {
    %c0_i32 = arith.constant 0 : i32
    %c0_i32_0 = arith.constant 0 : i32
    %c0_i32_1 = arith.constant 0 : i32
    %c0_i32_2 = arith.constant 0 : i32
    return %c0_i32, %c0_i32_0, %c0_i32_1 : i32, i32, i32
  }
  func.func @transform_15(%arg0: i32) -> (i32, i32) {
    %c0_i32 = arith.constant 0 : i32
    %c0_i32_0 = arith.constant 0 : i32
    %c0_i32_1 = arith.constant 0 : i32
    return %c0_i32, %c0_i32_0 : i32, i32
  }
  func.func @transform_16(%arg0: i32) -> (i32, i32) {
    %c0_i32 = arith.constant 0 : i32
    %c0_i32_0 = arith.constant 0 : i32
    %c0_i32_1 = arith.constant 0 : i32
    return %c0_i32, %c0_i32_0 : i32, i32
  }
  func.func @transform_17(%arg0: i32) -> (i32, i32, i32) {
    %c0_i32 = arith.constant 0 : i32
    %c0_i32_0 = arith.constant 0 : i32
    %c0_i32_1 = arith.constant 0 : i32
    %c0_i32_2 = arith.constant 0 : i32
    return %c0_i32, %c0_i32_0, %c0_i32_1 : i32, i32, i32
  }
  func.func @transform_18(%arg0: i32) -> (i32, i32, i32) {
    %c0_i32 = arith.constant 0 : i32
    %c0_i32_0 = arith.constant 0 : i32
    %c0_i32_1 = arith.constant 0 : i32
    %c0_i32_2 = arith.constant 0 : i32
    return %c0_i32, %c0_i32_0, %c0_i32_1 : i32, i32, i32
  }
  func.func @transform_19(%arg0: i32) -> (i32, i32, i32) {
    %c0_i32 = arith.constant 0 : i32
    %c0_i32_0 = arith.constant 0 : i32
    %c0_i32_1 = arith.constant 0 : i32
    %c0_i32_2 = arith.constant 0 : i32
    return %c0_i32, %c0_i32_0, %c0_i32_1 : i32, i32, i32
  }
  func.func @transform_20(%arg0: i32) -> (i32, i32, i32) {
    %c0_i32 = arith.constant 0 : i32
    %c0_i32_0 = arith.constant 0 : i32
    %c0_i32_1 = arith.constant 0 : i32
    %c0_i32_2 = arith.constant 0 : i32
    return %c0_i32, %c0_i32_0, %c0_i32_1 : i32, i32, i32
  }
  func.func @transform_21(%arg0: i32) -> (i32, i32, i32) {
    %c0_i32 = arith.constant 0 : i32
    %c0_i32_0 = arith.constant 0 : i32
    %c0_i32_1 = arith.constant 0 : i32
    %c0_i32_2 = arith.constant 0 : i32
    return %c0_i32, %c0_i32_0, %c0_i32_1 : i32, i32, i32
  }
  func.func @transform_22(%arg0: i32) -> (i32, i32) {
    %c0_i32 = arith.constant 0 : i32
    %c0_i32_0 = arith.constant 0 : i32
    %c0_i32_1 = arith.constant 0 : i32
    return %c0_i32, %c0_i32_0 : i32, i32
  }
  func.func @transform_23(%arg0: i32) -> (i32, i32) {
    %c0_i32 = arith.constant 0 : i32
    %c0_i32_0 = arith.constant 0 : i32
    %c0_i32_1 = arith.constant 0 : i32
    return %c0_i32, %c0_i32_0 : i32, i32
  }
  func.func @transform_24(%arg0: i32) -> (i32, i32, i32) {
    %c0_i32 = arith.constant 0 : i32
    %c0_i32_0 = arith.constant 0 : i32
    %c0_i32_1 = arith.constant 0 : i32
    return %arg0, %c0_i32, %c0_i32_0 : i32, i32, i32
  }
}

</mosaic_0001>

<llo_original>
// kernel: forward.1
$region0: #{forward.1}
  #allocation0 [shape = 'u32[]', space=smem, size = 0x4, offset = 0x4, fixed_abs, tag = 'smem constant byte address 0x4 - core index']
  #allocation1 [shape = 'u32[144,128]{1,0:T(1,128)}', space=vmem, size = 0x12000, scoped, tag = 'internal scratch']
  %s0 = inlined_call_operand.vmem [shape: f32[2,16,256], index: 0, kind: input, shape index: {}]
  %s1 = inlined_call_operand.vmem [shape: f32[2,8,64], index: 1, kind: input, shape index: {}]
  %s2 = inlined_call_operand.vmem [shape: f32[256,64], index: 2, kind: input, shape index: {}]
  %s3 = inlined_call_operand.vmem [shape: f32[24,64], index: 3, kind: input, shape index: {}]
  %s4 = inlined_call_operand.vmem [shape: f32[4,64,192], index: 4, kind: input, shape index: {}]
  %s5 = inlined_call_operand.vmem [shape: f32[4,1,192], index: 5, kind: input, shape index: {}]
  %s6 = inlined_call_operand.vmem [shape: f32[4,64,64], index: 6, kind: input, shape index: {}]
  %s7 = inlined_call_operand.vmem [shape: f32[4,64,128], index: 7, kind: input, shape index: {}]
  %s8 = inlined_call_operand.vmem [shape: f32[4,1,128], index: 8, kind: input, shape index: {}]
  %s9 = inlined_call_operand.vmem [shape: f32[4,128,64], index: 9, kind: input, shape index: {}]
  %s10 = inlined_call_operand.vmem [shape: f32[4,8,64], index: 10, kind: input, shape index: {}]
  %s11 = inlined_call_operand.vmem [shape: f32[2,64,192], index: 11, kind: input, shape index: {}]
  %s12 = inlined_call_operand.vmem [shape: f32[2,1,192], index: 12, kind: input, shape index: {}]
  %s13 = inlined_call_operand.vmem [shape: f32[2,64,64], index: 13, kind: input, shape index: {}]
  %s14 = inlined_call_operand.vmem [shape: f32[2,64,64], index: 14, kind: input, shape index: {}]
  %s15 = inlined_call_operand.vmem [shape: f32[64,256], index: 15, kind: input, shape index: {}]
  %s16 = inlined_call_operand.vmem [shape: f32[1,256], index: 16, kind: input, shape index: {}]
  %s17 = inlined_call_operand.vmem [shape: f32[2,64,64], index: 17, kind: input, shape index: {}]
  %s18 = inlined_call_operand.vmem [shape: f32[2,64,128], index: 18, kind: input, shape index: {}]
  %s19 = inlined_call_operand.vmem [shape: f32[2,1,128], index: 19, kind: input, shape index: {}]
  %s20 = inlined_call_operand.vmem [shape: f32[2,128,64], index: 20, kind: input, shape index: {}]
  %s21 = inlined_call_operand.vmem [shape: f32[2,16,64], index: 21, kind: input, shape index: {}]
  %s22 = inlined_call_operand.vmem [shape: f32[64,128], index: 22, kind: input, shape index: {}]
  %s23 = inlined_call_operand.vmem [shape: f32[1,128], index: 23, kind: input, shape index: {}]
  %s24 = inlined_call_operand.vmem [shape: f32[2,8,128], index: 24, kind: output, shape index: {}]
  %s25 = sld [smem:[#allocation0]]
  $region136: #{forward.1} parent=0
    _
  %s27 = ssub.s32 1, %s25
  %s28 = scalar_select 0, %s27, %s25
  loop: start=0, step=1, limit=4
  $region2: #{forward.1} parent=0 // loop_pre_header
    _
  $region3: #{forward.1} parent=0 // loop_header
    %s30 = sphi 0, %s34
    %p31 = scmp.ge.s32.totalorder %s30, 4
    %s40 = sphi 0, %s42
    %s43 = sphi 0, %s40
    %s44 = sphi 0, %s43
    %s60 = sphi 0, %s44
    %s66 = sphi 0, %s68
    %s69 = sphi 0, %s66
    %s70 = sphi 0, %s69
    %s86 = sphi 0, %s70
    %s90 = sphi 0, %s90
    %s92 = sphi 0, %s90
    %s93 = sphi 0, %s92
    %s107 = sphi 0, %s93
    %s111 = sphi 0, %s111
    %s113 = sphi 0, %s111
    %s114 = sphi 0, %s113
    %s128 = sphi 0, %s114
    %s132 = sphi 0, %s132
    %s134 = sphi 0, %s132
    %s135 = sphi 0, %s134
    %s149 = sphi 0, %s135
    %s153 = sphi 0, %s153
    %s155 = sphi 0, %s153
    %s156 = sphi 0, %s155
    %s170 = sphi 0, %s156
    %s174 = sphi 0, %s174
    %s176 = sphi 0, %s174
    %s177 = sphi 0, %s176
    %s191 = sphi 0, %s177
    %s195 = sphi 0, %s195
    %s197 = sphi 0, %s195
    %s198 = sphi 0, %s197
    %s212 = sphi 0, %s198
    %s216 = sphi 0, %s216
    %s218 = sphi 0, %s216
    %s219 = sphi 0, %s218
    %s233 = sphi 0, %s219
    %s237 = sphi 0, %s237
    %s239 = sphi 0, %s237
    %s240 = sphi 0, %s239
    %s254 = sphi 0, %s240
    %s258 = sphi 0, %s258
    %s260 = sphi 0, %s258
    %s261 = sphi 0, %s260
    %s275 = sphi 0, %s261
    %s279 = sphi 0, %s279
    %s281 = sphi 0, %s279
    %s282 = sphi 0, %s281
    %s296 = sphi 0, %s282
    %s300 = sphi 0, %s300
    %s302 = sphi 0, %s300
    %s303 = sphi 0, %s302
    %s317 = sphi 0, %s303
    %s321 = sphi 0, %s321
    %s323 = sphi 0, %s321
    %s324 = sphi 0, %s323
    %s338 = sphi 0, %s324
    %s342 = sphi 0, %s342
    %s344 = sphi 0, %s342
    %s345 = sphi 0, %s344
    %s359 = sphi 0, %s345
    %s363 = sphi 0, %s363
    %s365 = sphi 0, %s363
    %s366 = sphi 0, %s365
    %s380 = sphi 0, %s366
    %s384 = sphi 0, %s384
    %s386 = sphi 0, %s384
    %s387 = sphi 0, %s386
    %s401 = sphi 0, %s387
    %s405 = sphi 0, %s405
    %s407 = sphi 0, %s405
    %s408 = sphi 0, %s407
    %s422 = sphi 0, %s408
    %s426 = sphi 0, %s426
    %s428 = sphi 0, %s426
    %s429 = sphi 0, %s428
    %s443 = sphi 0, %s429
    %s447 = sphi 0, %s447
    %s449 = sphi 0, %s447
    %s450 = sphi 0, %s449
    %s464 = sphi 0, %s450
    %s468 = sphi 0, %s468
    %s470 = sphi 0, %s468
    %s471 = sphi 0, %s470
    %s485 = sphi 0, %s471
    %s489 = sphi 0, %s489
    %s491 = sphi 0, %s489
    %s492 = sphi 0, %s491
    %s506 = sphi 0, %s492
    %s510 = sphi 0, %s510
    %s512 = sphi 0, %s510
    %s513 = sphi 0, %s512
    %s527 = sphi 0, %s513
    %s531 = sphi 0, %s531
    %s533 = sphi 0, %s531
    %s534 = sphi 0, %s533
    %s548 = sphi 0, %s534
    %s554 = sphi 0, %s556
    %s557 = sphi 0, %s554
    %s558 = sphi 0, %s557
    %s574 = sphi 0, %s558
  $region4: #{forward.1} parent=0 // loop_header_branch
    %33 = sbr.rel (%p31) target = $region8
  $region5: #{forward.1} parent=0 // loop_body
    %s35 = ssub.s32 %s30, 1
    %s36 = ssub.s32 %s30, 2
    %s37 = sadd.s32 %s30, 1
    %s38 = ssub.s32 %s30, %s37
    %p39 = scmp.eq.s32.totalorder %s38, 0
    %s41 = sadd.s32 %s40, 1
    %s42 = scalar_select %p39, %s40, %s41
    %p45 = pneg %p39
    %p46 = scmp.eq.s32.totalorder %s30, 1
    %p47 = por %p45, %p46
    %p48 = scmp.ne.s32.totalorder %s40, %s43
    %p49 = scmp.eq.s32.totalorder %s30, 0
    %p50 = por %p48, %p49
    %p51 = scmp.ne.s32.totalorder %s40, %s43
    %p52 = scmp.eq.s32.totalorder %s35, 1
    %p53 = por %p51, %p52
    %p54 = scmp.ne.s32.totalorder %s43, %s44
    %p55 = scmp.eq.s32.totalorder %s35, 0
    %p56 = por %p54, %p55
    %p57 = scmp.ne.s32.totalorder %s43, %s44
    %p58 = scmp.eq.s32.totalorder %s36, 1
    %p59 = por %p57, %p58
    %p61 = scmp.ne.s32.totalorder %s44, %s60
    %p62 = scmp.eq.s32.totalorder %s36, 0
    %p63 = por %p61, %p62
    %s64 = ssub.s32 %s30, %s37
    %p65 = scmp.eq.s32.totalorder %s64, 0
    %s67 = sadd.s32 %s66, 1
    %s68 = scalar_select %p65, %s66, %s67
    %p71 = pneg %p65
    %p72 = scmp.eq.s32.totalorder %s30, 1
    %p73 = por %p71, %p72
    %p74 = scmp.ne.s32.totalorder %s66, %s69
    %p75 = scmp.eq.s32.totalorder %s30, 0
    %p76 = por %p74, %p75
    %p77 = scmp.ne.s32.totalorder %s66, %s69
    %p78 = scmp.eq.s32.totalorder %s35, 1
    %p79 = por %p77, %p78
    %p80 = scmp.ne.s32.totalorder %s69, %s70
    %p81 = scmp.eq.s32.totalorder %s35, 0
    %p82 = por %p80, %p81
    %p83 = scmp.ne.s32.totalorder %s69, %s70
    %p84 = scmp.eq.s32.totalorder %s36, 1
    %p85 = por %p83, %p84
    %p87 = scmp.ne.s32.totalorder %s70, %s86
    %p88 = scmp.eq.s32.totalorder %s36, 0
    %p89 = por %p87, %p88
    %s91 = sadd.s32 %s90, 1
    %p94 = scmp.eq.s32.totalorder %s30, 1
    %p95 = scmp.ne.s32.totalorder %s90, %s92
    %p96 = scmp.eq.s32.totalorder %s30, 0
    %p97 = por %p95, %p96
    %p98 = scmp.ne.s32.totalorder %s90, %s92
    %p99 = scmp.eq.s32.totalorder %s35, 1
    %p100 = por %p98, %p99
    %p101 = scmp.ne.s32.totalorder %s92, %s93
    %p102 = scmp.eq.s32.totalorder %s35, 0
    %p103 = por %p101, %p102
    %p104 = scmp.ne.s32.totalorder %s92, %s93
    %p105 = scmp.eq.s32.totalorder %s36, 1
    %p106 = por %p104, %p105
    %p108 = scmp.ne.s32.totalorder %s93, %s107
    %p109 = scmp.eq.s32.totalorder %s36, 0
    %p110 = por %p108, %p109
    %s112 = sadd.s32 %s111, 1
    %p115 = scmp.eq.s32.totalorder %s30, 1
    %p116 = scmp.ne.s32.totalorder %s111, %s113
    %p117 = scmp.eq.s32.totalorder %s30, 0
    %p118 = por %p116, %p117
    %p119 = scmp.ne.s32.totalorder %s111, %s113
    %p120 = scmp.eq.s32.totalorder %s35, 1
    %p121 = por %p119, %p120
    %p122 = scmp.ne.s32.totalorder %s113, %s114
    %p123 = scmp.eq.s32.totalorder %s35, 0
    %p124 = por %p122, %p123
    %p125 = scmp.ne.s32.totalorder %s113, %s114
    %p126 = scmp.eq.s32.totalorder %s36, 1
    %p127 = por %p125, %p126
    %p129 = scmp.ne.s32.totalorder %s114, %s128
    %p130 = scmp.eq.s32.totalorder %s36, 0
    %p131 = por %p129, %p130
    %s133 = sadd.s32 %s132, 1
    %p136 = scmp.eq.s32.totalorder %s30, 1
    %p137 = scmp.ne.s32.totalorder %s132, %s134
    %p138 = scmp.eq.s32.totalorder %s30, 0
    %p139 = por %p137, %p138
    %p140 = scmp.ne.s32.totalorder %s132, %s134
    %p141 = scmp.eq.s32.totalorder %s35, 1
    %p142 = por %p140, %p141
    %p143 = scmp.ne.s32.totalorder %s134, %s135
    %p144 = scmp.eq.s32.totalorder %s35, 0
    %p145 = por %p143, %p144
    %p146 = scmp.ne.s32.totalorder %s134, %s135
    %p147 = scmp.eq.s32.totalorder %s36, 1
    %p148 = por %p146, %p147
    %p150 = scmp.ne.s32.totalorder %s135, %s149
    %p151 = scmp.eq.s32.totalorder %s36, 0
    %p152 = por %p150, %p151
    %s154 = sadd.s32 %s153, 1
    %p157 = scmp.eq.s32.totalorder %s30, 1
    %p158 = scmp.ne.s32.totalorder %s153, %s155
    %p159 = scmp.eq.s32.totalorder %s30, 0
    %p160 = por %p158, %p159
    %p161 = scmp.ne.s32.totalorder %s153, %s155
    %p162 = scmp.eq.s32.totalorder %s35, 1
    %p163 = por %p161, %p162
    %p164 = scmp.ne.s32.totalorder %s155, %s156
    %p165 = scmp.eq.s32.totalorder %s35, 0
    %p166 = por %p164, %p165
    %p167 = scmp.ne.s32.totalorder %s155, %s156
    %p168 = scmp.eq.s32.totalorder %s36, 1
    %p169 = por %p167, %p168
    %p171 = scmp.ne.s32.totalorder %s156, %s170
    %p172 = scmp.eq.s32.totalorder %s36, 0
    %p173 = por %p171, %p172
    %s175 = sadd.s32 %s174, 1
    %p178 = scmp.eq.s32.totalorder %s30, 1
    %p179 = scmp.ne.s32.totalorder %s174, %s176
    %p180 = scmp.eq.s32.totalorder %s30, 0
    %p181 = por %p179, %p180
    %p182 = scmp.ne.s32.totalorder %s174, %s176
    %p183 = scmp.eq.s32.totalorder %s35, 1
    %p184 = por %p182, %p183
    %p185 = scmp.ne.s32.totalorder %s176, %s177
    %p186 = scmp.eq.s32.totalorder %s35, 0
    %p187 = por %p185, %p186
    %p188 = scmp.ne.s32.totalorder %s176, %s177
    %p189 = scmp.eq.s32.totalorder %s36, 1
    %p190 = por %p188, %p189
    %p192 = scmp.ne.s32.totalorder %s177, %s191
    %p193 = scmp.eq.s32.totalorder %s36, 0
    %p194 = por %p192, %p193
    %s196 = sadd.s32 %s195, 1
    %p199 = scmp.eq.s32.totalorder %s30, 1
    %p200 = scmp.ne.s32.totalorder %s195, %s197
    %p201 = scmp.eq.s32.totalorder %s30, 0
    %p202 = por %p200, %p201
    %p203 = scmp.ne.s32.totalorder %s195, %s197
    %p204 = scmp.eq.s32.totalorder %s35, 1
    %p205 = por %p203, %p204
    %p206 = scmp.ne.s32.totalorder %s197, %s198
    %p207 = scmp.eq.s32.totalorder %s35, 0
    %p208 = por %p206, %p207
    %p209 = scmp.ne.s32.totalorder %s197, %s198
    %p210 = scmp.eq.s32.totalorder %s36, 1
    %p211 = por %p209, %p210
    %p213 = scmp.ne.s32.totalorder %s198, %s212
    %p214 = scmp.eq.s32.totalorder %s36, 0
    %p215 = por %p213, %p214
    %s217 = sadd.s32 %s216, 1
    %p220 = scmp.eq.s32.totalorder %s30, 1
    %p221 = scmp.ne.s32.totalorder %s216, %s218
    %p222 = scmp.eq.s32.totalorder %s30, 0
    %p223 = por %p221, %p222
    %p224 = scmp.ne.s32.totalorder %s216, %s218
    %p225 = scmp.eq.s32.totalorder %s35, 1
    %p226 = por %p224, %p225
    %p227 = scmp.ne.s32.totalorder %s218, %s219
    %p228 = scmp.eq.s32.totalorder %s35, 0
    %p229 = por %p227, %p228
    %p230 = scmp.ne.s32.totalorder %s218, %s219
    %p231 = scmp.eq.s32.totalorder %s36, 1
    %p232 = por %p230, %p231
    %p234 = scmp.ne.s32.totalorder %s219, %s233
    %p235 = scmp.eq.s32.totalorder %s36, 0
    %p236 = por %p234, %p235
    %s238 = sadd.s32 %s237, 1
    %p241 = scmp.eq.s32.totalorder %s30, 1
    %p242 = scmp.ne.s32.totalorder %s237, %s239
    %p243 = scmp.eq.s32.totalorder %s30, 0
    %p244 = por %p242, %p243
    %p245 = scmp.ne.s32.totalorder %s237, %s239
    %p246 = scmp.eq.s32.totalorder %s35, 1
    %p247 = por %p245, %p246
    %p248 = scmp.ne.s32.totalorder %s239, %s240
    %p249 = scmp.eq.s32.totalorder %s35, 0
    %p250 = por %p248, %p249
    %p251 = scmp.ne.s32.totalorder %s239, %s240
    %p252 = scmp.eq.s32.totalorder %s36, 1
    %p253 = por %p251, %p252
    %p255 = scmp.ne.s32.totalorder %s240, %s254
    %p256 = scmp.eq.s32.totalorder %s36, 0
    %p257 = por %p255, %p256
    %s259 = sadd.s32 %s258, 1
    %p262 = scmp.eq.s32.totalorder %s30, 1
    %p263 = scmp.ne.s32.totalorder %s258, %s260
    %p264 = scmp.eq.s32.totalorder %s30, 0
    %p265 = por %p263, %p264
    %p266 = scmp.ne.s32.totalorder %s258, %s260
    %p267 = scmp.eq.s32.totalorder %s35, 1
    %p268 = por %p266, %p267
    %p269 = scmp.ne.s32.totalorder %s260, %s261
    %p270 = scmp.eq.s32.totalorder %s35, 0
    %p271 = por %p269, %p270
    %p272 = scmp.ne.s32.totalorder %s260, %s261
    %p273 = scmp.eq.s32.totalorder %s36, 1
    %p274 = por %p272, %p273
    %p276 = scmp.ne.s32.totalorder %s261, %s275
    %p277 = scmp.eq.s32.totalorder %s36, 0
    %p278 = por %p276, %p277
    %s280 = sadd.s32 %s279, 1
    %p283 = scmp.eq.s32.totalorder %s30, 1
    %p284 = scmp.ne.s32.totalorder %s279, %s281
    %p285 = scmp.eq.s32.totalorder %s30, 0
    %p286 = por %p284, %p285
    %p287 = scmp.ne.s32.totalorder %s279, %s281
    %p288 = scmp.eq.s32.totalorder %s35, 1
    %p289 = por %p287, %p288
    %p290 = scmp.ne.s32.totalorder %s281, %s282
    %p291 = scmp.eq.s32.totalorder %s35, 0
    %p292 = por %p290, %p291
    %p293 = scmp.ne.s32.totalorder %s281, %s282
    %p294 = scmp.eq.s32.totalorder %s36, 1
    %p295 = por %p293, %p294
    %p297 = scmp.ne.s32.totalorder %s282, %s296
    %p298 = scmp.eq.s32.totalorder %s36, 0
    %p299 = por %p297, %p298
    %s301 = sadd.s32 %s300, 1
    %p304 = scmp.eq.s32.totalorder %s30, 1
    %p305 = scmp.ne.s32.totalorder %s300, %s302
    %p306 = scmp.eq.s32.totalorder %s30, 0
    %p307 = por %p305, %p306
    %p308 = scmp.ne.s32.totalorder %s300, %s302
    %p309 = scmp.eq.s32.totalorder %s35, 1
    %p310 = por %p308, %p309
    %p311 = scmp.ne.s32.totalorder %s302, %s303
    %p312 = scmp.eq.s32.totalorder %s35, 0
    %p313 = por %p311, %p312
    %p314 = scmp.ne.s32.totalorder %s302, %s303
    %p315 = scmp.eq.s32.totalorder %s36, 1
    %p316 = por %p314, %p315
    %p318 = scmp.ne.s32.totalorder %s303, %s317
    %p319 = scmp.eq.s32.totalorder %s36, 0
    %p320 = por %p318, %p319
    %s322 = sadd.s32 %s321, 1
    %p325 = scmp.eq.s32.totalorder %s30, 1
    %p326 = scmp.ne.s32.totalorder %s321, %s323
    %p327 = scmp.eq.s32.totalorder %s30, 0
    %p328 = por %p326, %p327
    %p329 = scmp.ne.s32.totalorder %s321, %s323
    %p330 = scmp.eq.s32.totalorder %s35, 1
    %p331 = por %p329, %p330
    %p332 = scmp.ne.s32.totalorder %s323, %s324
    %p333 = scmp.eq.s32.totalorder %s35, 0
    %p334 = por %p332, %p333
    %p335 = scmp.ne.s32.totalorder %s323, %s324
    %p336 = scmp.eq.s32.totalorder %s36, 1
    %p337 = por %p335, %p336
    %p339 = scmp.ne.s32.totalorder %s324, %s338
    %p340 = scmp.eq.s32.totalorder %s36, 0
    %p341 = por %p339, %p340
    %s343 = sadd.s32 %s342, 1
    %p346 = scmp.eq.s32.totalorder %s30, 1
    %p347 = scmp.ne.s32.totalorder %s342, %s344
    %p348 = scmp.eq.s32.totalorder %s30, 0
    %p349 = por %p347, %p348
    %p350 = scmp.ne.s32.totalorder %s342, %s344
    %p351 = scmp.eq.s32.totalorder %s35, 1
    %p352 = por %p350, %p351
    %p353 = scmp.ne.s32.totalorder %s344, %s345
    %p354 = scmp.eq.s32.totalorder %s35, 0
    %p355 = por %p353, %p354
    %p356 = scmp.ne.s32.totalorder %s344, %s345
    %p357 = scmp.eq.s32.totalorder %s36, 1
    %p358 = por %p356, %p357
    %p360 = scmp.ne.s32.totalorder %s345, %s359
    %p361 = scmp.eq.s32.totalorder %s36, 0
    %p362 = por %p360, %p361
    %s364 = sadd.s32 %s363, 1
    %p367 = scmp.eq.s32.totalorder %s30, 1
    %p368 = scmp.ne.s32.totalorder %s363, %s365
    %p369 = scmp.eq.s32.totalorder %s30, 0
    %p370 = por %p368, %p369
    %p371 = scmp.ne.s32.totalorder %s363, %s365
    %p372 = scmp.eq.s32.totalorder %s35, 1
    %p373 = por %p371, %p372
    %p374 = scmp.ne.s32.totalorder %s365, %s366
    %p375 = scmp.eq.s32.totalorder %s35, 0
    %p376 = por %p374, %p375
    %p377 = scmp.ne.s32.totalorder %s365, %s366
    %p378 = scmp.eq.s32.totalorder %s36, 1
    %p379 = por %p377, %p378
    %p381 = scmp.ne.s32.totalorder %s366, %s380
    %p382 = scmp.eq.s32.totalorder %s36, 0
    %p383 = por %p381, %p382
    %s385 = sadd.s32 %s384, 1
    %p388 = scmp.eq.s32.totalorder %s30, 1
    %p389 = scmp.ne.s32.totalorder %s384, %s386
    %p390 = scmp.eq.s32.totalorder %s30, 0
    %p391 = por %p389, %p390
    %p392 = scmp.ne.s32.totalorder %s384, %s386
    %p393 = scmp.eq.s32.totalorder %s35, 1
    %p394 = por %p392, %p393
    %p395 = scmp.ne.s32.totalorder %s386, %s387
    %p396 = scmp.eq.s32.totalorder %s35, 0
    %p397 = por %p395, %p396
    %p398 = scmp.ne.s32.totalorder %s386, %s387
    %p399 = scmp.eq.s32.totalorder %s36, 1
    %p400 = por %p398, %p399
    %p402 = scmp.ne.s32.totalorder %s387, %s401
    %p403 = scmp.eq.s32.totalorder %s36, 0
    %p404 = por %p402, %p403
    %s406 = sadd.s32 %s405, 1
    %p409 = scmp.eq.s32.totalorder %s30, 1
    %p410 = scmp.ne.s32.totalorder %s405, %s407
    %p411 = scmp.eq.s32.totalorder %s30, 0
    %p412 = por %p410, %p411
    %p413 = scmp.ne.s32.totalorder %s405, %s407
    %p414 = scmp.eq.s32.totalorder %s35, 1
    %p415 = por %p413, %p414
    %p416 = scmp.ne.s32.totalorder %s407, %s408
    %p417 = scmp.eq.s32.totalorder %s35, 0
    %p418 = por %p416, %p417
    %p419 = scmp.ne.s32.totalorder %s407, %s408
    %p420 = scmp.eq.s32.totalorder %s36, 1
    %p421 = por %p419, %p420
    %p423 = scmp.ne.s32.totalorder %s408, %s422
    %p424 = scmp.eq.s32.totalorder %s36, 0
    %p425 = por %p423, %p424
    %s427 = sadd.s32 %s426, 1
    %p430 = scmp.eq.s32.totalorder %s30, 1
    %p431 = scmp.ne.s32.totalorder %s426, %s428
    %p432 = scmp.eq.s32.totalorder %s30, 0
    %p433 = por %p431, %p432
    %p434 = scmp.ne.s32.totalorder %s426, %s428
    %p435 = scmp.eq.s32.totalorder %s35, 1
    %p436 = por %p434, %p435
    %p437 = scmp.ne.s32.totalorder %s428, %s429
    %p438 = scmp.eq.s32.totalorder %s35, 0
    %p439 = por %p437, %p438
    %p440 = scmp.ne.s32.totalorder %s428, %s429
    %p441 = scmp.eq.s32.totalorder %s36, 1
    %p442 = por %p440, %p441
    %p444 = scmp.ne.s32.totalorder %s429, %s443
    %p445 = scmp.eq.s32.totalorder %s36, 0
    %p446 = por %p444, %p445
    %s448 = sadd.s32 %s447, 1
    %p451 = scmp.eq.s32.totalorder %s30, 1
    %p452 = scmp.ne.s32.totalorder %s447, %s449
    %p453 = scmp.eq.s32.totalorder %s30, 0
    %p454 = por %p452, %p453
    %p455 = scmp.ne.s32.totalorder %s447, %s449
    %p456 = scmp.eq.s32.totalorder %s35, 1
    %p457 = por %p455, %p456
    %p458 = scmp.ne.s32.totalorder %s449, %s450
    %p459 = scmp.eq.s32.totalorder %s35, 0
    %p460 = por %p458, %p459
    %p461 = scmp.ne.s32.totalorder %s449, %s450
    %p462 = scmp.eq.s32.totalorder %s36, 1
    %p463 = por %p461, %p462
    %p465 = scmp.ne.s32.totalorder %s450, %s464
    %p466 = scmp.eq.s32.totalorder %s36, 0
    %p467 = por %p465, %p466
    %s469 = sadd.s32 %s468, 1
    %p472 = scmp.eq.s32.totalorder %s30, 1
    %p473 = scmp.ne.s32.totalorder %s468, %s470
    %p474 = scmp.eq.s32.totalorder %s30, 0
    %p475 = por %p473, %p474
    %p476 = scmp.ne.s32.totalorder %s468, %s470
    %p477 = scmp.eq.s32.totalorder %s35, 1
    %p478 = por %p476, %p477
    %p479 = scmp.ne.s32.totalorder %s470, %s471
    %p480 = scmp.eq.s32.totalorder %s35, 0
    %p481 = por %p479, %p480
    %p482 = scmp.ne.s32.totalorder %s470, %s471
    %p483 = scmp.eq.s32.totalorder %s36, 1
    %p484 = por %p482, %p483
    %p486 = scmp.ne.s32.totalorder %s471, %s485
    %p487 = scmp.eq.s32.totalorder %s36, 0
    %p488 = por %p486, %p487
    %s490 = sadd.s32 %s489, 1
    %p493 = scmp.eq.s32.totalorder %s30, 1
    %p494 = scmp.ne.s32.totalorder %s489, %s491
    %p495 = scmp.eq.s32.totalorder %s30, 0
    %p496 = por %p494, %p495
    %p497 = scmp.ne.s32.totalorder %s489, %s491
    %p498 = scmp.eq.s32.totalorder %s35, 1
    %p499 = por %p497, %p498
    %p500 = scmp.ne.s32.totalorder %s491, %s492
    %p501 = scmp.eq.s32.totalorder %s35, 0
    %p502 = por %p500, %p501
    %p503 = scmp.ne.s32.totalorder %s491, %s492
    %p504 = scmp.eq.s32.totalorder %s36, 1
    %p505 = por %p503, %p504
    %p507 = scmp.ne.s32.totalorder %s492, %s506
    %p508 = scmp.eq.s32.totalorder %s36, 0
    %p509 = por %p507, %p508
    %s511 = sadd.s32 %s510, 1
    %p514 = scmp.eq.s32.totalorder %s30, 1
    %p515 = scmp.ne.s32.totalorder %s510, %s512
    %p516 = scmp.eq.s32.totalorder %s30, 0
    %p517 = por %p515, %p516
    %p518 = scmp.ne.s32.totalorder %s510, %s512
    %p519 = scmp.eq.s32.totalorder %s35, 1
    %p520 = por %p518, %p519
    %p521 = scmp.ne.s32.totalorder %s512, %s513
    %p522 = scmp.eq.s32.totalorder %s35, 0
    %p523 = por %p521, %p522
    %p524 = scmp.ne.s32.totalorder %s512, %s513
    %p525 = scmp.eq.s32.totalorder %s36, 1
    %p526 = por %p524, %p525
    %p528 = scmp.ne.s32.totalorder %s513, %s527
    %p529 = scmp.eq.s32.totalorder %s36, 0
    %p530 = por %p528, %p529
    %s532 = sadd.s32 %s531, 1
    %p535 = scmp.eq.s32.totalorder %s30, 1
    %p536 = scmp.ne.s32.totalorder %s531, %s533
    %p537 = scmp.eq.s32.totalorder %s30, 0
    %p538 = por %p536, %p537
    %p539 = scmp.ne.s32.totalorder %s531, %s533
    %p540 = scmp.eq.s32.totalorder %s35, 1
    %p541 = por %p539, %p540
    %p542 = scmp.ne.s32.totalorder %s533, %s534
    %p543 = scmp.eq.s32.totalorder %s35, 0
    %p544 = por %p542, %p543
    %p545 = scmp.ne.s32.totalorder %s533, %s534
    %p546 = scmp.eq.s32.totalorder %s36, 1
    %p547 = por %p545, %p546
    %p549 = scmp.ne.s32.totalorder %s534, %s548
    %p550 = scmp.eq.s32.totalorder %s36, 0
    %p551 = por %p549, %p550
    %s552 = ssub.s32 %s30, %s37
    %p553 = scmp.eq.s32.totalorder %s552, 0
    %s555 = sadd.s32 %s554, 1
    %s556 = scalar_select %p553, %s554, %s555
    %p559 = pneg %p553
    %p560 = scmp.eq.s32.totalorder %s30, 1
    %p561 = por %p559, %p560
    %p562 = scmp.ne.s32.totalorder %s554, %s557
    %p563 = scmp.eq.s32.totalorder %s30, 0
    %p564 = por %p562, %p563
    %p565 = scmp.ne.s32.totalorder %s554, %s557
    %p566 = scmp.eq.s32.totalorder %s35, 1
    %p567 = por %p565, %p566
    %p568 = scmp.ne.s32.totalorder %s557, %s558
    %p569 = scmp.eq.s32.totalorder %s35, 0
    %p570 = por %p568, %p569
    %p571 = scmp.ne.s32.totalorder %s557, %s558
    %p572 = scmp.eq.s32.totalorder %s36, 1
    %p573 = por %p571, %p572
    %p575 = scmp.ne.s32.totalorder %s558, %s574
    %p576 = scmp.eq.s32.totalorder %s36, 0
    %p577 = por %p575, %p576
    %p578 = scmp.le.s32.totalorder 1, %s30
    %p579 = scmp.lt.s32.totalorder %s30, 3
    %p580 = pnand %p578, %p579
    %p581 = pneg %p580
    // Predicated region
    $region9: #{forward.1} parent=5 // pred_check
      _
    $region10: #{forward.1} parent=5 // pred_check_branch
      %583 = sbr.rel (%p580) target = $region12
    $region11: #{forward.1} parent=5 // pred_region
      %s584 = ssub.s32 %s30, 1
      // Predicated region
      $region13: #{forward.1} parent=11 // pred_check
        %p585 = pneg %p103
      $region14: #{forward.1} parent=11 // pred_check_branch
        %587 = sbr.rel (%p585) target = $region16
      $region15: #{forward.1} parent=11 // pred_region
        _
      $region16: #{forward.1} parent=11 // pred_fallthru
        _
      // Predicated region
      $region17: #{forward.1} parent=11 // pred_check
        %p588 = pneg %p124
      $region18: #{forward.1} parent=11 // pred_check_branch
        %590 = sbr.rel (%p588) target = $region20
      $region19: #{forward.1} parent=11 // pred_region
        _
      $region20: #{forward.1} parent=11 // pred_fallthru
        _
      // Predicated region
      $region21: #{forward.1} parent=11 // pred_check
        %p591 = pneg %p145
      $region22: #{forward.1} parent=11 // pred_check_branch
        %593 = sbr.rel (%p591) target = $region24
      $region23: #{forward.1} parent=11 // pred_region
        _
      $region24: #{forward.1} parent=11 // pred_fallthru
        _
      // Predicated region
      $region25: #{forward.1} parent=11 // pred_check
        %p594 = pneg %p166
      $region26: #{forward.1} parent=11 // pred_check_branch
        %596 = sbr.rel (%p594) target = $region28
      $region27: #{forward.1} parent=11 // pred_region
        _
      $region28: #{forward.1} parent=11 // pred_fallthru
        _
      // Predicated region
      $region29: #{forward.1} parent=11 // pred_check
        %p597 = pneg %p187
      $region30: #{forward.1} parent=11 // pred_check_branch
        %599 = sbr.rel (%p597) target = $region32
      $region31: #{forward.1} parent=11 // pred_region
        _
      $region32: #{forward.1} parent=11 // pred_fallthru
        _
      // Predicated region
      $region33: #{forward.1} parent=11 // pred_check
        %p600 = pneg %p208
      $region34: #{forward.1} parent=11 // pred_check_branch
        %602 = sbr.rel (%p600) target = $region36
      $region35: #{forward.1} parent=11 // pred_region
        _
      $region36: #{forward.1} parent=11 // pred_fallthru
        _
      // Predicated region
      $region37: #{forward.1} parent=11 // pred_check
        %p603 = pneg %p229
      $region38: #{forward.1} parent=11 // pred_check_branch
        %605 = sbr.rel (%p603) target = $region40
      $region39: #{forward.1} parent=11 // pred_region
        _
      $region40: #{forward.1} parent=11 // pred_fallthru
        _
      // Predicated region
      $region41: #{forward.1} parent=11 // pred_check
        %p606 = pneg %p250
      $region42: #{forward.1} parent=11 // pred_check_branch
        %608 = sbr.rel (%p606) target = $region44
      $region43: #{forward.1} parent=11 // pred_region
        _
      $region44: #{forward.1} parent=11 // pred_fallthru
        _
      // Predicated region
      $region45: #{forward.1} parent=11 // pred_check
        %p609 = pneg %p271
      $region46: #{forward.1} parent=11 // pred_check_branch
        %611 = sbr.rel (%p609) target = $region48
      $region47: #{forward.1} parent=11 // pred_region
        _
      $region48: #{forward.1} parent=11 // pred_fallthru
        _
      // Predicated region
      $region49: #{forward.1} parent=11 // pred_check
        %p612 = pneg %p292
      $region50: #{forward.1} parent=11 // pred_check_branch
        %614 = sbr.rel (%p612) target = $region52
      $region51: #{forward.1} parent=11 // pred_region
        _
      $region52: #{forward.1} parent=11 // pred_fallthru
        _
      // Predicated region
      $region53: #{forward.1} parent=11 // pred_check
        %p615 = pneg %p313
      $region54: #{forward.1} parent=11 // pred_check_branch
        %617 = sbr.rel (%p615) target = $region56
      $region55: #{forward.1} parent=11 // pred_region
        _
      $region56: #{forward.1} parent=11 // pred_fallthru
        _
      // Predicated region
      $region57: #{forward.1} parent=11 // pred_check
        %p618 = pneg %p334
      $region58: #{forward.1} parent=11 // pred_check_branch
        %620 = sbr.rel (%p618) target = $region60
      $region59: #{forward.1} parent=11 // pred_region
        _
      $region60: #{forward.1} parent=11 // pred_fallthru
        _
      // Predicated region
      $region61: #{forward.1} parent=11 // pred_check
        %p621 = pneg %p355
      $region62: #{forward.1} parent=11 // pred_check_branch
        %623 = sbr.rel (%p621) target = $region64
      $region63: #{forward.1} parent=11 // pred_region
        _
      $region64: #{forward.1} parent=11 // pred_fallthru
        _
      // Predicated region
      $region65: #{forward.1} parent=11 // pred_check
        %p624 = pneg %p376
      $region66: #{forward.1} parent=11 // pred_check_branch
        %626 = sbr.rel (%p624) target = $region68
      $region67: #{forward.1} parent=11 // pred_region
        _
      $region68: #{forward.1} parent=11 // pred_fallthru
        _
      // Predicated region
      $region69: #{forward.1} parent=11 // pred_check
        %p627 = pneg %p397
      $region70: #{forward.1} parent=11 // pred_check_branch
        %629 = sbr.rel (%p627) target = $region72
      $region71: #{forward.1} parent=11 // pred_region
        _
      $region72: #{forward.1} parent=11 // pred_fallthru
        _
      // Predicated region
      $region73: #{forward.1} parent=11 // pred_check
        %p630 = pneg %p418
      $region74: #{forward.1} parent=11 // pred_check_branch
        %632 = sbr.rel (%p630) target = $region76
      $region75: #{forward.1} parent=11 // pred_region
        _
      $region76: #{forward.1} parent=11 // pred_fallthru
        _
      // Predicated region
      $region77: #{forward.1} parent=11 // pred_check
        %p633 = pneg %p439
      $region78: #{forward.1} parent=11 // pred_check_branch
        %635 = sbr.rel (%p633) target = $region80
      $region79: #{forward.1} parent=11 // pred_region
        _
      $region80: #{forward.1} parent=11 // pred_fallthru
        _
      // Predicated region
      $region81: #{forward.1} parent=11 // pred_check
        %p636 = pneg %p460
      $region82: #{forward.1} parent=11 // pred_check_branch
        %638 = sbr.rel (%p636) target = $region84
      $region83: #{forward.1} parent=11 // pred_region
        _
      $region84: #{forward.1} parent=11 // pred_fallthru
        _
      // Predicated region
      $region85: #{forward.1} parent=11 // pred_check
        %p639 = pneg %p481
      $region86: #{forward.1} parent=11 // pred_check_branch
        %641 = sbr.rel (%p639) target = $region88
      $region87: #{forward.1} parent=11 // pred_region
        _
      $region88: #{forward.1} parent=11 // pred_fallthru
        _
      // Predicated region
      $region89: #{forward.1} parent=11 // pred_check
        %p642 = pneg %p502
      $region90: #{forward.1} parent=11 // pred_check_branch
        %644 = sbr.rel (%p642) target = $region92
      $region91: #{forward.1} parent=11 // pred_region
        _
      $region92: #{forward.1} parent=11 // pred_fallthru
        _
      // Predicated region
      $region93: #{forward.1} parent=11 // pred_check
        %p645 = pneg %p523
      $region94: #{forward.1} parent=11 // pred_check_branch
        %647 = sbr.rel (%p645) target = $region96
      $region95: #{forward.1} parent=11 // pred_region
        _
      $region96: #{forward.1} parent=11 // pred_fallthru
        _
      // Predicated region
      $region97: #{forward.1} parent=11 // pred_check
        %p648 = pneg %p544
      $region98: #{forward.1} parent=11 // pred_check_branch
        %650 = sbr.rel (%p648) target = $region100
      $region99: #{forward.1} parent=11 // pred_region
        _
      $region100: #{forward.1} parent=11 // pred_fallthru
        _
    $region12: #{forward.1} parent=5 // pred_fallthru
      _
    %p651 = scmp.lt.s32.totalorder %s30, 2
    // Predicated region
    $region101: #{forward.1} parent=5 // pred_check
      %p652 = pneg %p651
    $region102: #{forward.1} parent=5 // pred_check_branch
      %654 = sbr.rel (%p652) target = $region104
    $region103: #{forward.1} parent=5 // pred_region
      // Predicated region
      $region105: #{forward.1} parent=103 // pred_check
        %p655 = pneg %p50
      $region106: #{forward.1} parent=103 // pred_check_branch
        %657 = sbr.rel (%p655) target = $region108
      $region107: #{forward.1} parent=103 // pred_region
        %p658 = scmp.lt.s32.totalorder %s30, 1
        %s659 = scalar_select %p658, %s30, 1
        %s660 = smul.addr %s659, 4
        %s661 = smul.addr %s660, 8
        %s662 = scalar_lea.vmem %s0, %s661
      $region108: #{forward.1} parent=103 // pred_fallthru
        _
      // Predicated region
      $region109: #{forward.1} parent=103 // pred_check
        %p663 = pneg %p76
      $region110: #{forward.1} parent=103 // pred_check_branch
        %665 = sbr.rel (%p663) target = $region112
      $region111: #{forward.1} parent=103 // pred_region
        %p666 = scmp.lt.s32.totalorder %s30, 1
        %s667 = scalar_select %p666, %s30, 1
        %s668 = smul.addr %s667, 8
        %s669 = scalar_lea.vmem %s1, %s668
      $region112: #{forward.1} parent=103 // pred_fallthru
        _
    $region104: #{forward.1} parent=5 // pred_fallthru
      _
    %p670 = scmp.le.s32.totalorder 1, %s30
    %p671 = scmp.lt.s32.totalorder %s30, 3
    %p672 = pnand %p670, %p671
    %p673 = pneg %p672
    // Predicated region
    $region113: #{forward.1} parent=5 // pred_check
      _
    $region114: #{forward.1} parent=5 // pred_check_branch
      %675 = sbr.rel (%p672) target = $region116
    $region115: #{forward.1} parent=5 // pred_region
      %s676 = ssub.s32 %s30, 1
      %p677 = scmp.lt.s32.totalorder %s35, 1
      %s678 = scalar_select %p677, %s35, 1
      %s679 = smul.addr %s678, 4
      %s680 = smul.addr %s679, 8
      %s681 = scalar_lea.vmem %s0, %s680
      %p682 = pneg %p56
      %p683 = pneg %p53
      %p684 = scmp.lt.s32.totalorder %s35, 1
      %s685 = scalar_select %p684, %s35, 1
      %s686 = smul.addr %s685, 8
      %s687 = scalar_lea.vmem %s1, %s686
      %p688 = pneg %p82
      %p689 = pneg %p79
      %p690 = pneg %p103
      %p691 = pneg %p100
      %p692 = pneg %p124
      %p693 = pneg %p121
      %p694 = pneg %p145
      %p695 = pneg %p142
      %p696 = pneg %p166
      %p697 = pneg %p163
      %p698 = pneg %p187
      %p699 = pneg %p184
      %p700 = pneg %p208
      %p701 = pneg %p205
      %p702 = pneg %p229
      %p703 = pneg %p226
      %p704 = pneg %p250
      %p705 = pneg %p247
      %p706 = pneg %p271
      %p707 = pneg %p268
      %p708 = pneg %p292
      %p709 = pneg %p289
      %p710 = pneg %p313
      %p711 = pneg %p310
      %p712 = pneg %p334
      %p713 = pneg %p331
      %p714 = pneg %p355
      %p715 = pneg %p352
      %p716 = pneg %p376
      %p717 = pneg %p373
      %p718 = pneg %p397
      %p719 = pneg %p394
      %p720 = pneg %p418
      %p721 = pneg %p415
      %p722 = pneg %p439
      %p723 = pneg %p436
      %p724 = pneg %p460
      %p725 = pneg %p457
      %p726 = pneg %p481
      %p727 = pneg %p478
      %p728 = pneg %p502
      %p729 = pneg %p499
      %p730 = pneg %p523
      %p731 = pneg %p520
      %p732 = pneg %p544
      %p733 = pneg %p541
      %p734 = pneg %p570
      %p735 = pneg %p567
      %p736 = scmp.lt.s32.totalorder %s35, 1
      %s737 = scalar_select %p736, %s35, 1
      %s738 = smul.addr %s737, 8
      %s739 = scalar_lea.vmem %s24, %s738
      %p740 = scmp.lt.s32.totalorder %s35, 1
      %s741 = scalar_select %p740, %s35, 1
      %s742 = smul.addr %s741, 4
      %s743 = smul.addr %s742, 8
      %s744 = scalar_lea.vmem %s0, %s743
      %p745 = scmp.lt.s32.totalorder %s35, 1
      %s746 = scalar_select %p745, %s35, 1
      %s747 = smul.addr %s746, 8
      %s748 = scalar_lea.vmem %s1, %s747
      %p749 = scmp.lt.s32.totalorder %s35, 1
      %s750 = scalar_select %p749, %s35, 1
      %s751 = smul.addr %s750, 8
      %s752 = scalar_lea.vmem %s24, %s751
      %v753 = vlaneseq
      %v754 = vshrl.u32 %v753, 7
      %v755 = vadd.s32 %v754, 8
      %v756 = vadd.s32 %v754, 16
      %v757 = vadd.s32 %v754, 24
      %v758 = vadd.s32 %v754, 32
      %v759 = vadd.s32 %v754, 40
      %v760 = vadd.s32 %v754, 48
      %v761 = vadd.s32 %v754, 56
      %v762 = vlaneseq
      %v763 = vand.u32 %v762, 127
      %v764 = vshra.s32 %v754, 4
      %v765 = vshra.s32 %v755, 4
      %v766 = vshra.s32 %v756, 4
      %v767 = vshra.s32 %v757, 4
      %v768 = vshra.s32 %v758, 4
      %v769 = vshra.s32 %v759, 4
      %v770 = vshra.s32 %v760, 4
      %v771 = vshra.s32 %v761, 4
      %v772 = vshra.s32 %v763, 4
      %vm773 = vcmp.eq.s32.totalorder %v764, %v772
      %vm774 = vcmp.eq.s32.totalorder %v765, %v772
      %vm775 = vcmp.eq.s32.totalorder %v766, %v772
      %vm776 = vcmp.eq.s32.totalorder %v767, %v772
      %vm777 = vcmp.eq.s32.totalorder %v768, %v772
      %vm778 = vcmp.eq.s32.totalorder %v769, %v772
      %vm779 = vcmp.eq.s32.totalorder %v770, %v772
      %vm780 = vcmp.eq.s32.totalorder %v771, %v772
      %v781 = vsel %vm773, 0.0, -1e+09
      %v782 = vsel %vm774, 0.0, -1e+09
      %v783 = vsel %vm775, 0.0, -1e+09
      %v784 = vsel %vm776, 0.0, -1e+09
      %v785 = vsel %vm777, 0.0, -1e+09
      %v786 = vsel %vm778, 0.0, -1e+09
      %v787 = vsel %vm779, 0.0, -1e+09
      %v788 = vsel %vm780, 0.0, -1e+09
      %v789 = vshra.s32 %v754, 3
      %v790 = vshra.s32 %v755, 3
      %v791 = vshra.s32 %v756, 3
      %v792 = vshra.s32 %v757, 3
      %v793 = vshra.s32 %v763, 3
      %vm794 = vcmp.eq.s32.totalorder %v789, %v793
      %vm795 = vcmp.eq.s32.totalorder %v790, %v793
      %vm796 = vcmp.eq.s32.totalorder %v791, %v793
      %vm797 = vcmp.eq.s32.totalorder %v792, %v793
      %v798 = vand.u32 %v763, 7
      %v799 = vand.u32 %v754, 7
      %v800 = vand.u32 %v755, 7
      %v801 = vand.u32 %v756, 7
      %v802 = vand.u32 %v757, 7
      %vm803 = vcmp.le.s32.totalorder %v798, %v799
      %vm804 = vcmp.le.s32.totalorder %v798, %v800
      %vm805 = vcmp.le.s32.totalorder %v798, %v801
      %vm806 = vcmp.le.s32.totalorder %v798, %v802
      %vm807 = vmand %vm794, %vm803
      %vm808 = vmand %vm795, %vm804
      %vm809 = vmand %vm796, %vm805
      %vm810 = vmand %vm797, %vm806
      %v811 = vsel %vm807, 0.0, -1e+09
      %v812 = vsel %vm808, 0.0, -1e+09
      %v813 = vsel %vm809, 0.0, -1e+09
      %v814 = vsel %vm810, 0.0, -1e+09
      %vm815 = vcmp.eq.s32.totalorder %v789, %v772
      %vm816 = vcmp.eq.s32.totalorder %v790, %v772
      %vm817 = vcmp.eq.s32.totalorder %v791, %v772
      %vm818 = vcmp.eq.s32.totalorder %v792, %v772
      %v819 = vsel %vm815, 0.0, -1e+09
      %v820 = vsel %vm816, 0.0, -1e+09
      %v821 = vsel %vm817, 0.0, -1e+09
      %v822 = vsel %vm818, 0.0, -1e+09
      %v823 = vld [vmem:[%s3] sm:$0xff]
      %v824 = vld [vmem:[%s3 + $0x8] sm:$0xff]
      %v825 = vld [vmem:[%s3 + $0x10] sm:$0xff]
      %v826 = vld [vmem:[%s744] sm:$0xff]
      %v827 = vld [vmem:[%s744 + $0x8] sm:$0xff]
      %v828 = vld [vmem:[%s744 + $0x10] sm:$0xff]
      %v829 = vld [vmem:[%s744 + $0x18] sm:$0xff]
      %v830 = vld [vmem:[%s2] sm:$0xff]
      %v831 = vld [vmem:[%s2 + $0x8] sm:$0xff]
      %v832 = vld [vmem:[%s2 + $0x10] sm:$0xff]
      %v833 = vld [vmem:[%s2 + $0x18] sm:$0xff]
      %v834 = vld [vmem:[%s2 + $0x20] sm:$0xff]
      %v835 = vld [vmem:[%s2 + $0x28] sm:$0xff]
      %v836 = vld [vmem:[%s2 + $0x30] sm:$0xff]
      %v837 = vld [vmem:[%s2 + $0x38] sm:$0xff]
      %v838 = vld [vmem:[%s2 + $0x40] sm:$0xff]
      %v839 = vld [vmem:[%s2 + $0x48] sm:$0xff]
      %v840 = vld [vmem:[%s2 + $0x50] sm:$0xff]
      %v841 = vld [vmem:[%s2 + $0x58] sm:$0xff]
      %v842 = vld [vmem:[%s2 + $0x60] sm:$0xff]
      %v843 = vld [vmem:[%s2 + $0x68] sm:$0xff]
      %v844 = vld [vmem:[%s2 + $0x70] sm:$0xff]
      %v845 = vld [vmem:[%s2 + $0x78] sm:$0xff]
      %v846 = vld [vmem:[%s2 + $0x80] sm:$0xff]
      %v847 = vld [vmem:[%s2 + $0x88] sm:$0xff]
      %v848 = vld [vmem:[%s2 + $0x90] sm:$0xff]
      %v849 = vld [vmem:[%s2 + $0x98] sm:$0xff]
      %v850 = vld [vmem:[%s2 + $0xa0] sm:$0xff]
      %v851 = vld [vmem:[%s2 + $0xa8] sm:$0xff]
      %v852 = vld [vmem:[%s2 + $0xb0] sm:$0xff]
      %v853 = vld [vmem:[%s2 + $0xb8] sm:$0xff]
      %v854 = vld [vmem:[%s2 + $0xc0] sm:$0xff]
      %v855 = vld [vmem:[%s2 + $0xc8] sm:$0xff]
      %v856 = vld [vmem:[%s2 + $0xd0] sm:$0xff]
      %v857 = vld [vmem:[%s2 + $0xd8] sm:$0xff]
      %v858 = vld [vmem:[%s2 + $0xe0] sm:$0xff]
      %v859 = vld [vmem:[%s2 + $0xe8] sm:$0xff]
      %v860 = vld [vmem:[%s2 + $0xf0] sm:$0xff]
      %v861 = vld [vmem:[%s2 + $0xf8] sm:$0xff]
      %v862 = vlaneseq
      %v863 = vshrl.u32 %v862, 7
      %v864 = vsub.s32 0, %v863
      %v865 = vrot.slane %v823, %v864
      %866 = vmatprep.subr.mxu0 0.0
      %867 = vmatpush1.msra.mxu0 %v830
      %868 = vmatprep.subr.mxu0 0.0
      %869 = vmatpush1.msra.mxu0 %v831
      %870 = vmatprep.subr.mxu0 0.0
      %871 = vmatpush1.msra.mxu0 %v832
      %872 = vmatprep.subr.mxu0 0.0
      %873 = vmatpush1.msra.mxu0 %v833
      %874 = vmatprep.subr.mxu0 0.0
      %875 = vmatpush1.msra.mxu0 %v834
      %876 = vmatprep.subr.mxu0 0.0
      %877 = vmatpush1.msra.mxu0 %v835
      %878 = vmatprep.subr.mxu0 0.0
      %879 = vmatpush1.msra.mxu0 %v836
      %880 = vmatprep.subr.mxu0 0.0
      %881 = vmatpush1.msra.mxu0 %v837
      %882 = vmatprep.subr.mxu0 0.0
      %883 = vmatpush1.msra.mxu0 %v838
      %884 = vmatprep.subr.mxu0 0.0
      %885 = vmatpush1.msra.mxu0 %v839
      %886 = vmatprep.subr.mxu0 0.0
      %887 = vmatpush1.msra.mxu0 %v840
      %888 = vmatprep.subr.mxu0 0.0
      %889 = vmatpush1.msra.mxu0 %v841
      %890 = vmatprep.subr.mxu0 0.0
      %891 = vmatpush1.msra.mxu0 %v842
      %892 = vmatprep.subr.mxu0 0.0
      %893 = vmatpush1.msra.mxu0 %v843
      %894 = vmatprep.subr.mxu0 0.0
      %895 = vmatpush1.msra.mxu0 %v844
      %896 = vmatprep.subr.mxu0 0.0
      %897 = vmatpush1.msra.mxu0 %v845
      %898 = vmatprep.subr.mxu0 0.0
      %899 = vmatpush1.msra.mxu0 %v846
      %900 = vmatprep.subr.mxu0 0.0
      %901 = vmatpush1.msra.mxu0 %v847
      %902 = vmatprep.subr.mxu0 0.0
      %903 = vmatpush1.msra.mxu0 %v848
      %904 = vmatprep.subr.mxu0 0.0
      %905 = vmatpush1.msra.mxu0 %v849
      %906 = vmatprep.subr.mxu0 0.0
      %907 = vmatpush1.msra.mxu0 %v850
      %908 = vmatprep.subr.mxu0 0.0
      %909 = vmatpush1.msra.mxu0 %v851
      %910 = vmatprep.subr.mxu0 0.0
      %911 = vmatpush1.msra.mxu0 %v852
      %912 = vmatprep.subr.mxu0 0.0
      %913 = vmatpush1.msra.mxu0 %v853
      %914 = vmatprep.subr.mxu0 0.0
      %915 = vmatpush1.msra.mxu0 %v854
      %916 = vmatprep.subr.mxu0 0.0
      %917 = vmatpush1.msra.mxu0 %v855
      %918 = vmatprep.subr.mxu0 0.0
      %919 = vmatpush1.msra.mxu0 %v856
      %920 = vmatprep.subr.mxu0 0.0
      %921 = vmatpush1.msra.mxu0 %v857
      %922 = vmatprep.subr.mxu0 0.0
      %923 = vmatpush1.msra.mxu0 %v858
      %924 = vmatprep.subr.mxu0 0.0
      %925 = vmatpush1.msra.mxu0 %v859
      %926 = vmatprep.subr.mxu0 0.0
      %927 = vmatpush1.msra.mxu0 %v860
      %928 = vmatprep.subr.mxu0 0.0
      %929 = vmatpush1.msra.mxu0 %v861
      %930 = vmatprep.mubr.f32.mxu0 %v827
      %931 = vmatmul.mubr.f32.gmra.mrb[0].mxu0 %v826
      %v932 = vpop.f32.mrb[0].mxu0
      %v933 = vadd.f32 %v865, %v932
      %v934 = vpop.f32.mrb[0].mxu0
      %935 = vmatprep.mubr.f32.mxu0 %v829
      %936 = vmatmul.mubr.f32.gmra.mrb[0].mxu0 %v828
      %v937 = vpop.f32.mrb[0].mxu0
      %v938 = vadd.f32 %v865, %v937
      %v939 = vpop.f32.mrb[0].mxu0
      %940 = vdwg.mxu0
      %v941 = vadd.f32 %v933, %v824
      %v942 = vadd.f32 %v938, %v825
      loop: start=0, step=1, limit=4
      $region117: #{forward.1} parent=115 // loop_pre_header
        _
      $region118: #{forward.1} parent=115 // loop_header
        %s944 = sphi 0, %s948
        %p945 = scmp.ge.s32.totalorder %s944, 4
        %v949 = vphi %v941, %v1895
        %v950 = vphi %v942, %v1896
      $region119: #{forward.1} parent=115 // loop_header_branch
        %947 = sbr.rel (%p945) target = $region123
      $region120: #{forward.1} parent=115 // loop_body
        %s951 = smul.u32 %s944, 8
        %s952 = scalar_lea.vmem %s10, %s951
        %v953 = vld [vmem:[%s952] sm:$0xff]
        %s954 = smul.u32 %s944, 16
        %s955 = smul.addr %s954, 8
        %s956 = scalar_lea.vmem %s4, %s955
        %v957 = vld [vmem:[%s956] sm:$0xff]
        %v958 = vld [vmem:[%s956 + $0x8] sm:$0xff]
        %v959 = vld [vmem:[%s956 + $0x10] sm:$0xff]
        %v960 = vld [vmem:[%s956 + $0x18] sm:$0xff]
        %v961 = vld [vmem:[%s956 + $0x20] sm:$0xff]
        %v962 = vld [vmem:[%s956 + $0x28] sm:$0xff]
        %v963 = vld [vmem:[%s956 + $0x30] sm:$0xff]
        %v964 = vld [vmem:[%s956 + $0x38] sm:$0xff]
        %v965 = vld [vmem:[%s956 + $0x40] sm:$0xff]
        %v966 = vld [vmem:[%s956 + $0x48] sm:$0xff]
        %v967 = vld [vmem:[%s956 + $0x50] sm:$0xff]
        %v968 = vld [vmem:[%s956 + $0x58] sm:$0xff]
        %v969 = vld [vmem:[%s956 + $0x60] sm:$0xff]
        %v970 = vld [vmem:[%s956 + $0x68] sm:$0xff]
        %v971 = vld [vmem:[%s956 + $0x70] sm:$0xff]
        %v972 = vld [vmem:[%s956 + $0x78] sm:$0xff]
        %s973 = smul.u32 %s944, 2
        %s974 = scalar_lea.vmem %s5, %s973
        %v975 = vld [vmem:[%s974] sm:$0x3]
        %v977 = vlaneseq
        %v978 = vshrl.u32 %v977, 7
        %v979 = vsub.s32 0, %v978
        %v980 = vrot.slane %v975, %v979
        %v981 = vlaneseq
        %v982 = vshrl.u32 %v981, 7
        %v983 = vsub.s32 1, %v982
        %v984 = vrot.slane %v975, %v983
        %vm987 = vcmask 523264
        %v989 = vsel %vm987, %v949, 0
        %v992 = vsel %vm987, %v950, 0
        %994 = vmatprep.subr.mxu0 %v958
        %995 = vmatpush1.msra.mxu0 %v957
        %996 = vmatprep.subr.mxu0 %v960
        %997 = vmatpush1.msra.mxu0 %v959
        %998 = vmatprep.subr.mxu0 %v962
        %999 = vmatpush1.msra.mxu0 %v961
        %1000 = vmatprep.subr.mxu0 %v964
        %1001 = vmatpush1.msra.mxu0 %v963
        %1002 = vmatprep.subr.mxu0 %v966
        %1003 = vmatpush1.msra.mxu0 %v965
        %1004 = vmatprep.subr.mxu0 %v968
        %1005 = vmatpush1.msra.mxu0 %v967
        %1006 = vmatprep.subr.mxu0 %v970
        %1007 = vmatpush1.msra.mxu0 %v969
        %1008 = vmatprep.subr.mxu0 %v972
        %1009 = vmatpush1.msra.mxu0 %v971
        %1010 = vmatprep.subr.mxu0 0.0
        %1011 = vmatpush1.msra.mxu0 0.0
        %1012 = vmatprep.subr.mxu0 0.0
        %1013 = vmatpush1.msra.mxu0 0.0
        %1014 = vmatprep.subr.mxu0 0.0
        %1015 = vmatpush1.msra.mxu0 0.0
        %1016 = vmatprep.subr.mxu0 0.0
        %1017 = vmatpush1.msra.mxu0 0.0
        %1018 = vmatprep.subr.mxu0 0.0
        %1019 = vmatpush1.msra.mxu0 0.0
        %1020 = vmatprep.subr.mxu0 0.0
        %1021 = vmatpush1.msra.mxu0 0.0
        %1022 = vmatprep.subr.mxu0 0.0
        %1023 = vmatpush1.msra.mxu0 0.0
        %1024 = vmatprep.subr.mxu0 0.0
        %1025 = vmatpush1.msra.mxu0 0.0
        %1026 = vmatprep.subr.mxu0 0.0
        %1027 = vmatpush1.msra.mxu0 0.0
        %1028 = vmatprep.subr.mxu0 0.0
        %1029 = vmatpush1.msra.mxu0 0.0
        %1030 = vmatprep.subr.mxu0 0.0
        %1031 = vmatpush1.msra.mxu0 0.0
        %1032 = vmatprep.subr.mxu0 0.0
        %1033 = vmatpush1.msra.mxu0 0.0
        %1034 = vmatprep.subr.mxu0 0.0
        %1035 = vmatpush1.msra.mxu0 0.0
        %1036 = vmatprep.subr.mxu0 0.0
        %1037 = vmatpush1.msra.mxu0 0.0
        %1038 = vmatprep.subr.mxu0 0.0
        %1039 = vmatpush1.msra.mxu0 0.0
        %1040 = vmatprep.subr.mxu0 0.0
        %1041 = vmatpush1.msra.mxu0 0.0
        %1042 = vmatprep.subr.mxu0 0.0
        %1043 = vmatpush1.msra.mxu0 0.0
        %1044 = vmatprep.subr.mxu0 0.0
        %1045 = vmatpush1.msra.mxu0 0.0
        %1046 = vmatprep.subr.mxu0 0.0
        %1047 = vmatpush1.msra.mxu0 0.0
        %1048 = vmatprep.subr.mxu0 0.0
        %1049 = vmatpush1.msra.mxu0 0.0
        %1050 = vmatprep.subr.mxu0 0.0
        %1051 = vmatpush1.msra.mxu0 0.0
        %1052 = vmatprep.subr.mxu0 0.0
        %1053 = vmatpush1.msra.mxu0 0.0
        %1054 = vmatprep.subr.mxu0 0.0
        %1055 = vmatpush1.msra.mxu0 0.0
        %1056 = vmatprep.subr.mxu0 0.0
        %1057 = vmatpush1.msra.mxu0 0.0
        %1058 = vmatprep.mubr.f32.mxu0 0.0
        %1059 = vmatmul.mubr.f32.gmra.mrb[0].mxu0 %v989
        %v1060 = vpop.f32.mrb[0].mxu0
        %v1061 = vadd.f32 %v980, %v1060
        %v1062 = vpop.f32.mrb[0].mxu0
        %v1063 = vadd.f32 %v984, %v1062
        %1064 = vmatprep.mubr.f32.mxu0 0.0
        %1065 = vmatmul.mubr.f32.gmra.mrb[0].mxu0 %v992
        %v1066 = vpop.f32.mrb[0].mxu0
        %v1067 = vadd.f32 %v980, %v1066
        %v1068 = vpop.f32.mrb[0].mxu0
        %v1069 = vadd.f32 %v984, %v1068
        %1070 = vdwg.mxu0
        %1073 = vrot.lane.b32.xlu0 %v1061, 112
        %v1074 = vpop.permute.xlu0 %1073
        %1075 = vrot.lane.b32.xlu0 %v1067, 112
        %v1076 = vpop.permute.xlu0 %1075
        %1077 = vrot.lane.b32.xlu0 %v1061, 96
        %v1078 = vpop.permute.xlu0 %1077
        %1079 = vrot.lane.b32.xlu0 %v1067, 96
        %v1080 = vpop.permute.xlu0 %1079
        %1081 = vrot.lane.b32.xlu0 %v1061, 80
        %v1082 = vpop.permute.xlu0 %1081
        %1083 = vrot.lane.b32.xlu0 %v1067, 80
        %v1084 = vpop.permute.xlu0 %1083
        %1087 = vrot.lane.b32.xlu0 %v1063, 112
        %v1088 = vpop.permute.xlu0 %1087
        %1089 = vrot.lane.b32.xlu0 %v1069, 112
        %v1090 = vpop.permute.xlu0 %1089
        %1093 = vrot.lane.b32.xlu0 %v1063, 96
        %v1094 = vpop.permute.xlu0 %1093
        %1095 = vrot.lane.b32.xlu0 %v1069, 96
        %v1096 = vpop.permute.xlu0 %1095
        %1099 = vrot.lane.b32.xlu0 %v1063, 80
        %v1100 = vpop.permute.xlu0 %1099
        %1101 = vrot.lane.b32.xlu0 %v1069, 80
        %v1102 = vpop.permute.xlu0 %1101
        %1105 = vrot.lane.b32.xlu0 %v1061, 64
        %v1106 = vpop.permute.xlu0 %1105
        %1107 = vrot.lane.b32.xlu0 %v1067, 64
        %v1108 = vpop.permute.xlu0 %1107
        %1109 = vrot.lane.b32.xlu0 %v1074, 64
        %v1110 = vpop.permute.xlu0 %1109
        %1111 = vrot.lane.b32.xlu0 %v1076, 64
        %v1112 = vpop.permute.xlu0 %1111
        %1113 = vrot.lane.b32.xlu0 %v1078, 64
        %v1114 = vpop.permute.xlu0 %1113
        %1115 = vrot.lane.b32.xlu0 %v1080, 64
        %v1116 = vpop.permute.xlu0 %1115
        %1117 = vrot.lane.b32.xlu0 %v1082, 64
        %v1118 = vpop.permute.xlu0 %1117
        %1119 = vrot.lane.b32.xlu0 %v1084, 64
        %v1120 = vpop.permute.xlu0 %1119
        %vm1121 = vcmask 130048
        %v1122 = vsel %vm1121, %v1061, 0
        %v1124 = vsel %vm1121, %v1067, 0
        %v1126 = vsel %vm1121, %v1074, 0
        %v1128 = vsel %vm1121, %v1076, 0
        %v1130 = vsel %vm1121, %v1078, 0
        %v1132 = vsel %vm1121, %v1080, 0
        %v1134 = vsel %vm1121, %v1082, 0
        %v1136 = vsel %vm1121, %v1084, 0
        %v1138 = vsel %vm1121, %v1106, 0
        %v1140 = vsel %vm1121, %v1108, 0
        %v1142 = vsel %vm1121, %v1110, 0
        %v1144 = vsel %vm1121, %v1112, 0
        %v1146 = vsel %vm1121, %v1114, 0
        %v1148 = vsel %vm1121, %v1116, 0
        %v1150 = vsel %vm1121, %v1118, 0
        %v1152 = vsel %vm1121, %v1120, 0
        %1154 = vmatprep.subr.mxu0 0.0
        %1155 = vmatpush1.xpose.msra.mxu0 %v1138
        %1156 = vmatprep.subr.mxu0 0.0
        %1157 = vmatpush1.xpose.msra.mxu0 %v1140
        %1158 = vmatprep.subr.mxu0 0.0
        %1159 = vmatpush1.xpose.msra.mxu0 %v1142
        %1160 = vmatprep.subr.mxu0 0.0
        %1161 = vmatpush1.xpose.msra.mxu0 %v1144
        %1162 = vmatprep.subr.mxu0 0.0
        %1163 = vmatpush1.xpose.msra.mxu0 %v1146
        %1164 = vmatprep.subr.mxu0 0.0
        %1165 = vmatpush1.xpose.msra.mxu0 %v1148
        %1166 = vmatprep.subr.mxu0 0.0
        %1167 = vmatpush1.xpose.msra.mxu0 %v1150
        %1168 = vmatprep.subr.mxu0 0.0
        %1169 = vmatpush1.xpose.msra.mxu0 %v1152
        %1170 = vmatprep.subr.mxu0 0.0
        %1171 = vmatpush1.xpose.msra.mxu0 0.0
        %1172 = vmatprep.subr.mxu0 0.0
        %1173 = vmatpush1.xpose.msra.mxu0 0.0
        %1174 = vmatprep.subr.mxu0 0.0
        %1175 = vmatpush1.xpose.msra.mxu0 0.0
        %1176 = vmatprep.subr.mxu0 0.0
        %1177 = vmatpush1.xpose.msra.mxu0 0.0
        %1178 = vmatprep.subr.mxu0 0.0
        %1179 = vmatpush1.xpose.msra.mxu0 0.0
        %1180 = vmatprep.subr.mxu0 0.0
        %1181 = vmatpush1.xpose.msra.mxu0 0.0
        %1182 = vmatprep.subr.mxu0 0.0
        %1183 = vmatpush1.xpose.msra.mxu0 0.0
        %1184 = vmatprep.subr.mxu0 0.0
        %1185 = vmatpush1.xpose.msra.mxu0 0.0
        %1186 = vmatprep.subr.mxu0 0.0
        %1187 = vmatpush1.xpose.msra.mxu0 0.0
        %1188 = vmatprep.subr.mxu0 0.0
        %1189 = vmatpush1.xpose.msra.mxu0 0.0
        %1190 = vmatprep.subr.mxu0 0.0
        %1191 = vmatpush1.xpose.msra.mxu0 0.0
        %1192 = vmatprep.subr.mxu0 0.0
        %1193 = vmatpush1.xpose.msra.mxu0 0.0
        %1194 = vmatprep.subr.mxu0 0.0
        %1195 = vmatpush1.xpose.msra.mxu0 0.0
        %1196 = vmatprep.subr.mxu0 0.0
        %1197 = vmatpush1.xpose.msra.mxu0 0.0
        %1198 = vmatprep.subr.mxu0 0.0
        %1199 = vmatpush1.xpose.msra.mxu0 0.0
        %1200 = vmatprep.subr.mxu0 0.0
        %1201 = vmatpush1.xpose.msra.mxu0 0.0
        %1202 = vmatprep.subr.mxu0 0.0
        %1203 = vmatpush1.xpose.msra.mxu0 0.0
        %1204 = vmatprep.subr.mxu0 0.0
        %1205 = vmatpush1.xpose.msra.mxu0 0.0
        %1206 = vmatprep.subr.mxu0 0.0
        %1207 = vmatpush1.xpose.msra.mxu0 0.0
        %1208 = vmatprep.subr.mxu0 0.0
        %1209 = vmatpush1.xpose.msra.mxu0 0.0
        %1210 = vmatprep.subr.mxu0 0.0
        %1211 = vmatpush1.xpose.msra.mxu0 0.0
        %1212 = vmatprep.subr.mxu0 0.0
        %1213 = vmatpush1.xpose.msra.mxu0 0.0
        %1214 = vmatprep.subr.mxu0 0.0
        %1215 = vmatpush1.xpose.msra.mxu0 0.0
        %1216 = vmatprep.subr.mxu0 0.0
        %1217 = vmatpush1.xpose.msra.mxu0 0.0
        %1218 = vmatprep.mubr.f32.mxu0 0.0
        %1219 = vmatmul.mubr.f32.gmra.mrb[0].mxu0 %v1122
        %v1220 = vpop.f32.mrb[0].mxu0
        %v1221 = vadd.f32 0.0, %v1220
        %v1222 = vpop.f32.mrb[0].mxu0
        %1223 = vmatprep.mubr.f32.mxu0 0.0
        %1224 = vmatmul.mubr.f32.gmra.mrb[0].mxu0 %v1124
        %v1225 = vpop.f32.mrb[0].mxu0
        %v1226 = vadd.f32 0.0, %v1225
        %v1227 = vpop.f32.mrb[0].mxu0
        %1228 = vmatprep.mubr.f32.mxu0 0.0
        %1229 = vmatmul.mubr.f32.gmra.mrb[0].mxu0 %v1126
        %v1230 = vpop.f32.mrb[0].mxu0
        %v1231 = vadd.f32 0.0, %v1230
        %v1232 = vpop.f32.mrb[0].mxu0
        %1233 = vmatprep.mubr.f32.mxu0 0.0
        %1234 = vmatmul.mubr.f32.gmra.mrb[0].mxu0 %v1128
        %v1235 = vpop.f32.mrb[0].mxu0
        %v1236 = vadd.f32 0.0, %v1235
        %v1237 = vpop.f32.mrb[0].mxu0
        %1238 = vmatprep.mubr.f32.mxu0 0.0
        %1239 = vmatmul.mubr.f32.gmra.mrb[0].mxu0 %v1130
        %v1240 = vpop.f32.mrb[0].mxu0
        %v1241 = vadd.f32 0.0, %v1240
        %v1242 = vpop.f32.mrb[0].mxu0
        %1243 = vmatprep.mubr.f32.mxu0 0.0
        %1244 = vmatmul.mubr.f32.gmra.mrb[0].mxu0 %v1132
        %v1245 = vpop.f32.mrb[0].mxu0
        %v1246 = vadd.f32 0.0, %v1245
        %v1247 = vpop.f32.mrb[0].mxu0
        %1248 = vmatprep.mubr.f32.mxu0 0.0
        %1249 = vmatmul.mubr.f32.gmra.mrb[0].mxu0 %v1134
        %v1250 = vpop.f32.mrb[0].mxu0
        %v1251 = vadd.f32 0.0, %v1250
        %v1252 = vpop.f32.mrb[0].mxu0
        %1253 = vmatprep.mubr.f32.mxu0 0.0
        %1254 = vmatmul.mubr.f32.gmra.mrb[0].mxu0 %v1136
        %v1255 = vpop.f32.mrb[0].mxu0
        %v1256 = vadd.f32 0.0, %v1255
        %v1257 = vpop.f32.mrb[0].mxu0
        %1258 = vdwg.mxu0
        %v1259 = vmul.f32 %v1221, 0.25
        %v1260 = vmul.f32 %v1226, 0.25
        %v1261 = vmul.f32 %v1231, 0.25
        %v1262 = vmul.f32 %v1236, 0.25
        %v1263 = vmul.f32 %v1241, 0.25
        %v1264 = vmul.f32 %v1246, 0.25
        %v1265 = vmul.f32 %v1251, 0.25
        %v1266 = vmul.f32 %v1256, 0.25
        %v1267 = vadd.f32 %v1259, %v781
        %v1268 = vadd.f32 %v1260, %v782
        %v1269 = vadd.f32 %v1261, %v783
        %v1270 = vadd.f32 %v1262, %v784
        %v1271 = vadd.f32 %v1263, %v785
        %v1272 = vadd.f32 %v1264, %v786
        %v1273 = vadd.f32 %v1265, %v787
        %v1274 = vadd.f32 %v1266, %v788
        %v1275 = vsel %vm987, %v1267, -inf
        %1276 = vmax.xlane.f32.xlu0 %v1275
        %v1277 = vpop.xlane.xlu0 %1276
        %v1278 = vsel %vm987, %v1268, -inf
        %1279 = vmax.xlane.f32.xlu0 %v1278
        %v1280 = vpop.xlane.xlu0 %1279
        %v1281 = vsel %vm987, %v1269, -inf
        %1282 = vmax.xlane.f32.xlu0 %v1281
        %v1283 = vpop.xlane.xlu0 %1282
        %v1284 = vsel %vm987, %v1270, -inf
        %1285 = vmax.xlane.f32.xlu0 %v1284
        %v1286 = vpop.xlane.xlu0 %1285
        %v1287 = vsel %vm987, %v1271, -inf
        %1288 = vmax.xlane.f32.xlu0 %v1287
        %v1289 = vpop.xlane.xlu0 %1288
        %v1290 = vsel %vm987, %v1272, -inf
        %1291 = vmax.xlane.f32.xlu0 %v1290
        %v1292 = vpop.xlane.xlu0 %1291
        %v1293 = vsel %vm987, %v1273, -inf
        %1294 = vmax.xlane.f32.xlu0 %v1293
        %v1295 = vpop.xlane.xlu0 %1294
        %v1296 = vsel %vm987, %v1274, -inf
        %1297 = vmax.xlane.f32.xlu0 %v1296
        %v1298 = vpop.xlane.xlu0 %1297
        %v1299 = vsub.f32 %v1267, %v1277
        %v1300 = vsub.f32 %v1268, %v1280
        %v1301 = vsub.f32 %v1269, %v1283
        %v1302 = vsub.f32 %v1270, %v1286
        %v1303 = vsub.f32 %v1271, %v1289
        %v1304 = vsub.f32 %v1272, %v1292
        %v1305 = vsub.f32 %v1273, %v1295
        %v1306 = vsub.f32 %v1274, %v1298
        %v1307 = vmul.f32 %v1299, 1.442695
        %v1308 = vpow.pop %v1307
        %v1309 = vmul.f32 %v1300, 1.442695
        %v1310 = vpow.pop %v1309
        %v1311 = vmul.f32 %v1301, 1.442695
        %v1312 = vpow.pop %v1311
        %v1313 = vmul.f32 %v1302, 1.442695
        %v1314 = vpow.pop %v1313
        %v1315 = vmul.f32 %v1303, 1.442695
        %v1316 = vpow.pop %v1315
        %v1317 = vmul.f32 %v1304, 1.442695
        %v1318 = vpow.pop %v1317
        %v1319 = vmul.f32 %v1305, 1.442695
        %v1320 = vpow.pop %v1319
        %v1321 = vmul.f32 %v1306, 1.442695
        %v1322 = vpow.pop %v1321
        %v1323 = vsel %vm987, %v1308, 0.0
        %1324 = vadd.xlane.f32.xlu0 %v1323
        %v1325 = vpop.xlane.xlu0 %1324
        %v1326 = vsel %vm987, %v1310, 0.0
        %1327 = vadd.xlane.f32.xlu0 %v1326
        %v1328 = vpop.xlane.xlu0 %1327
        %v1329 = vsel %vm987, %v1312, 0.0
        %1330 = vadd.xlane.f32.xlu0 %v1329
        %v1331 = vpop.xlane.xlu0 %1330
        %v1332 = vsel %vm987, %v1314, 0.0
        %1333 = vadd.xlane.f32.xlu0 %v1332
        %v1334 = vpop.xlane.xlu0 %1333
        %v1335 = vsel %vm987, %v1316, 0.0
        %1336 = vadd.xlane.f32.xlu0 %v1335
        %v1337 = vpop.xlane.xlu0 %1336
        %v1338 = vsel %vm987, %v1318, 0.0
        %1339 = vadd.xlane.f32.xlu0 %v1338
        %v1340 = vpop.xlane.xlu0 %1339
        %v1341 = vsel %vm987, %v1320, 0.0
        %1342 = vadd.xlane.f32.xlu0 %v1341
        %v1343 = vpop.xlane.xlu0 %1342
        %v1344 = vsel %vm987, %v1322, 0.0
        %1345 = vadd.xlane.f32.xlu0 %v1344
        %v1346 = vpop.xlane.xlu0 %1345
        %v1347 = vrcp.pop %v1325
        %v1348 = vmul.f32 %v1308, %v1347
        %v1349 = vrcp.pop %v1328
        %v1350 = vmul.f32 %v1310, %v1349
        %v1351 = vrcp.pop %v1331
        %v1352 = vmul.f32 %v1312, %v1351
        %v1353 = vrcp.pop %v1334
        %v1354 = vmul.f32 %v1314, %v1353
        %v1355 = vrcp.pop %v1337
        %v1356 = vmul.f32 %v1316, %v1355
        %v1357 = vrcp.pop %v1340
        %v1358 = vmul.f32 %v1318, %v1357
        %v1359 = vrcp.pop %v1343
        %v1360 = vmul.f32 %v1320, %v1359
        %v1361 = vrcp.pop %v1346
        %v1362 = vmul.f32 %v1322, %v1361
        %v1364 = vsel %vm987, %v1348, 0
        %v1367 = vsel %vm987, %v1350, 0
        %v1370 = vsel %vm987, %v1352, 0
        %v1373 = vsel %vm987, %v1354, 0
        %v1376 = vsel %vm987, %v1356, 0
        %v1379 = vsel %vm987, %v1358, 0
        %v1382 = vsel %vm987, %v1360, 0
        %v1385 = vsel %vm987, %v1362, 0
        %1387 = vmatprep.subr.mxu0 0.0
        %1388 = vmatpush1.msra.mxu0 %v1063
        %1389 = vmatprep.subr.mxu0 0.0
        %1390 = vmatpush1.msra.mxu0 %v1069
        %1391 = vmatprep.subr.mxu0 0.0
        %1392 = vmatpush1.msra.mxu0 %v1088
        %1393 = vmatprep.subr.mxu0 0.0
        %1394 = vmatpush1.msra.mxu0 %v1090
        %1395 = vmatprep.subr.mxu0 0.0
        %1396 = vmatpush1.msra.mxu0 %v1094
        %1397 = vmatprep.subr.mxu0 0.0
        %1398 = vmatpush1.msra.mxu0 %v1096
        %1399 = vmatprep.subr.mxu0 0.0
        %1400 = vmatpush1.msra.mxu0 %v1100
        %1401 = vmatprep.subr.mxu0 0.0
        %1402 = vmatpush1.msra.mxu0 %v1102
        %1403 = vmatprep.subr.mxu0 0.0
        %1404 = vmatpush1.msra.mxu0 0.0
        %1405 = vmatprep.subr.mxu0 0.0
        %1406 = vmatpush1.msra.mxu0 0.0
        %1407 = vmatprep.subr.mxu0 0.0
        %1408 = vmatpush1.msra.mxu0 0.0
        %1409 = vmatprep.subr.mxu0 0.0
        %1410 = vmatpush1.msra.mxu0 0.0
        %1411 = vmatprep.subr.mxu0 0.0
        %1412 = vmatpush1.msra.mxu0 0.0
        %1413 = vmatprep.subr.mxu0 0.0
        %1414 = vmatpush1.msra.mxu0 0.0
        %1415 = vmatprep.subr.mxu0 0.0
        %1416 = vmatpush1.msra.mxu0 0.0
        %1417 = vmatprep.subr.mxu0 0.0
        %1418 = vmatpush1.msra.mxu0 0.0
        %1419 = vmatprep.subr.mxu0 0.0
        %1420 = vmatpush1.msra.mxu0 0.0
        %1421 = vmatprep.subr.mxu0 0.0
        %1422 = vmatpush1.msra.mxu0 0.0
        %1423 = vmatprep.subr.mxu0 0.0
        %1424 = vmatpush1.msra.mxu0 0.0
        %1425 = vmatprep.subr.mxu0 0.0
        %1426 = vmatpush1.msra.mxu0 0.0
        %1427 = vmatprep.subr.mxu0 0.0
        %1428 = vmatpush1.msra.mxu0 0.0
        %1429 = vmatprep.subr.mxu0 0.0
        %1430 = vmatpush1.msra.mxu0 0.0
        %1431 = vmatprep.subr.mxu0 0.0
        %1432 = vmatpush1.msra.mxu0 0.0
        %1433 = vmatprep.subr.mxu0 0.0
        %1434 = vmatpush1.msra.mxu0 0.0
        %1435 = vmatprep.subr.mxu0 0.0
        %1436 = vmatpush1.msra.mxu0 0.0
        %1437 = vmatprep.subr.mxu0 0.0
        %1438 = vmatpush1.msra.mxu0 0.0
        %1439 = vmatprep.subr.mxu0 0.0
        %1440 = vmatpush1.msra.mxu0 0.0
        %1441 = vmatprep.subr.mxu0 0.0
        %1442 = vmatpush1.msra.mxu0 0.0
        %1443 = vmatprep.subr.mxu0 0.0
        %1444 = vmatpush1.msra.mxu0 0.0
        %1445 = vmatprep.subr.mxu0 0.0
        %1446 = vmatpush1.msra.mxu0 0.0
        %1447 = vmatprep.subr.mxu0 0.0
        %1448 = vmatpush1.msra.mxu0 0.0
        %1449 = vmatprep.subr.mxu0 0.0
        %1450 = vmatpush1.msra.mxu0 0.0
        %1451 = vmatprep.mubr.f32.mxu0 0.0
        %1452 = vmatmul.mubr.f32.gmra.mrb[0].mxu0 %v1364
        %v1453 = vpop.f32.mrb[0].mxu0
        %v1454 = vadd.f32 0.0, %v1453
        %v1455 = vpop.f32.mrb[0].mxu0
        %1456 = vmatprep.mubr.f32.mxu0 0.0
        %1457 = vmatmul.mubr.f32.gmra.mrb[0].mxu0 %v1367
        %v1458 = vpop.f32.mrb[0].mxu0
        %v1459 = vadd.f32 0.0, %v1458
        %v1460 = vpop.f32.mrb[0].mxu0
        %1461 = vmatprep.mubr.f32.mxu0 0.0
        %1462 = vmatmul.mubr.f32.gmra.mrb[0].mxu0 %v1370
        %v1463 = vpop.f32.mrb[0].mxu0
        %v1464 = vadd.f32 0.0, %v1463
        %v1465 = vpop.f32.mrb[0].mxu0
        %1466 = vmatprep.mubr.f32.mxu0 0.0
        %1467 = vmatmul.mubr.f32.gmra.mrb[0].mxu0 %v1373
        %v1468 = vpop.f32.mrb[0].mxu0
        %v1469 = vadd.f32 0.0, %v1468
        %v1470 = vpop.f32.mrb[0].mxu0
        %1471 = vmatprep.mubr.f32.mxu0 0.0
        %1472 = vmatmul.mubr.f32.gmra.mrb[0].mxu0 %v1376
        %v1473 = vpop.f32.mrb[0].mxu0
        %v1474 = vadd.f32 0.0, %v1473
        %v1475 = vpop.f32.mrb[0].mxu0
        %1476 = vmatprep.mubr.f32.mxu0 0.0
        %1477 = vmatmul.mubr.f32.gmra.mrb[0].mxu0 %v1379
        %v1478 = vpop.f32.mrb[0].mxu0
        %v1479 = vadd.f32 0.0, %v1478
        %v1480 = vpop.f32.mrb[0].mxu0
        %1481 = vmatprep.mubr.f32.mxu0 0.0
        %1482 = vmatmul.mubr.f32.gmra.mrb[0].mxu0 %v1382
        %v1483 = vpop.f32.mrb[0].mxu0
        %v1484 = vadd.f32 0.0, %v1483
        %v1485 = vpop.f32.mrb[0].mxu0
        %1486 = vmatprep.mubr.f32.mxu0 0.0
        %1487 = vmatmul.mubr.f32.gmra.mrb[0].mxu0 %v1385
        %v1488 = vpop.f32.mrb[0].mxu0
        %v1489 = vadd.f32 0.0, %v1488
        %v1490 = vpop.f32.mrb[0].mxu0
        %1491 = vdwg.mxu0
        %1494 = vrot.lane.b32.xlu0 %v1464, 16
        %v1495 = vpop.permute.xlu0 %1494
        %1496 = vrot.lane.b32.xlu0 %v1469, 16
        %v1497 = vpop.permute.xlu0 %1496
        %1502 = vrot.lane.b32.xlu0 %v1474, 32
        %v1503 = vpop.permute.xlu0 %1502
        %1504 = vrot.lane.b32.xlu0 %v1479, 32
        %v1505 = vpop.permute.xlu0 %1504
        %1510 = vrot.lane.b32.xlu0 %v1484, 48
        %v1511 = vpop.permute.xlu0 %1510
        %1512 = vrot.lane.b32.xlu0 %v1489, 48
        %v1513 = vpop.permute.xlu0 %1512
        %v1516 = vsel %vm1121, %v1454, %v1495
        %v1517 = vsel %vm1121, %v1459, %v1497
        %vm1518 = vcmask 261120
        %v1519 = vsel %vm1518, %v1516, %v1503
        %v1520 = vsel %vm1518, %v1517, %v1505
        %vm1521 = vcmask 392192
        %v1522 = vsel %vm1521, %v1519, %v1511
        %v1523 = vsel %vm1521, %v1520, %v1513
        %s1524 = smul.u32 %s944, 64
        %s1525 = scalar_lea.vmem %s6, %s1524
        %v1526 = vld [vmem:[%s1525] sm:$0xff]
        %v1527 = vld [vmem:[%s1525 + $0x8] sm:$0xff]
        %v1528 = vld [vmem:[%s1525 + $0x10] sm:$0xff]
        %v1529 = vld [vmem:[%s1525 + $0x18] sm:$0xff]
        %v1530 = vld [vmem:[%s1525 + $0x20] sm:$0xff]
        %v1531 = vld [vmem:[%s1525 + $0x28] sm:$0xff]
        %v1532 = vld [vmem:[%s1525 + $0x30] sm:$0xff]
        %v1533 = vld [vmem:[%s1525 + $0x38] sm:$0xff]
        %v1534 = vlaneseq
        %v1535 = vshrl.u32 %v1534, 7
        %v1536 = vsub.s32 0, %v1535
        %v1537 = vrot.slane %v953, %v1536
        %v1539 = vsel %vm987, %v1522, 0
        %v1542 = vsel %vm987, %v1523, 0
        %1544 = vmatprep.subr.mxu0 0.0
        %1545 = vmatpush1.msra.mxu0 %v1526
        %1546 = vmatprep.subr.mxu0 0.0
        %1547 = vmatpush1.msra.mxu0 %v1527
        %1548 = vmatprep.subr.mxu0 0.0
        %1549 = vmatpush1.msra.mxu0 %v1528
        %1550 = vmatprep.subr.mxu0 0.0
        %1551 = vmatpush1.msra.mxu0 %v1529
        %1552 = vmatprep.subr.mxu0 0.0
        %1553 = vmatpush1.msra.mxu0 %v1530
        %1554 = vmatprep.subr.mxu0 0.0
        %1555 = vmatpush1.msra.mxu0 %v1531
        %1556 = vmatprep.subr.mxu0 0.0
        %1557 = vmatpush1.msra.mxu0 %v1532
        %1558 = vmatprep.subr.mxu0 0.0
        %1559 = vmatpush1.msra.mxu0 %v1533
        %1560 = vmatprep.subr.mxu0 0.0
        %1561 = vmatpush1.msra.mxu0 0.0
        %1562 = vmatprep.subr.mxu0 0.0
        %1563 = vmatpush1.msra.mxu0 0.0
        %1564 = vmatprep.subr.mxu0 0.0
        %1565 = vmatpush1.msra.mxu0 0.0
        %1566 = vmatprep.subr.mxu0 0.0
        %1567 = vmatpush1.msra.mxu0 0.0
        %1568 = vmatprep.subr.mxu0 0.0
        %1569 = vmatpush1.msra.mxu0 0.0
        %1570 = vmatprep.subr.mxu0 0.0
        %1571 = vmatpush1.msra.mxu0 0.0
        %1572 = vmatprep.subr.mxu0 0.0
        %1573 = vmatpush1.msra.mxu0 0.0
        %1574 = vmatprep.subr.mxu0 0.0
        %1575 = vmatpush1.msra.mxu0 0.0
        %1576 = vmatprep.subr.mxu0 0.0
        %1577 = vmatpush1.msra.mxu0 0.0
        %1578 = vmatprep.subr.mxu0 0.0
        %1579 = vmatpush1.msra.mxu0 0.0
        %1580 = vmatprep.subr.mxu0 0.0
        %1581 = vmatpush1.msra.mxu0 0.0
        %1582 = vmatprep.subr.mxu0 0.0
        %1583 = vmatpush1.msra.mxu0 0.0
        %1584 = vmatprep.subr.mxu0 0.0
        %1585 = vmatpush1.msra.mxu0 0.0
        %1586 = vmatprep.subr.mxu0 0.0
        %1587 = vmatpush1.msra.mxu0 0.0
        %1588 = vmatprep.subr.mxu0 0.0
        %1589 = vmatpush1.msra.mxu0 0.0
        %1590 = vmatprep.subr.mxu0 0.0
        %1591 = vmatpush1.msra.mxu0 0.0
        %1592 = vmatprep.subr.mxu0 0.0
        %1593 = vmatpush1.msra.mxu0 0.0
        %1594 = vmatprep.subr.mxu0 0.0
        %1595 = vmatpush1.msra.mxu0 0.0
        %1596 = vmatprep.subr.mxu0 0.0
        %1597 = vmatpush1.msra.mxu0 0.0
        %1598 = vmatprep.subr.mxu0 0.0
        %1599 = vmatpush1.msra.mxu0 0.0
        %1600 = vmatprep.subr.mxu0 0.0
        %1601 = vmatpush1.msra.mxu0 0.0
        %1602 = vmatprep.subr.mxu0 0.0
        %1603 = vmatpush1.msra.mxu0 0.0
        %1604 = vmatprep.subr.mxu0 0.0
        %1605 = vmatpush1.msra.mxu0 0.0
        %1606 = vmatprep.subr.mxu0 0.0
        %1607 = vmatpush1.msra.mxu0 0.0
        %1608 = vmatprep.mubr.f32.mxu0 0.0
        %1609 = vmatmul.mubr.f32.gmra.mrb[0].mxu0 %v1539
        %v1610 = vpop.f32.mrb[0].mxu0
        %v1611 = vadd.f32 %v1537, %v1610
        %v1612 = vpop.f32.mrb[0].mxu0
        %1613 = vmatprep.mubr.f32.mxu0 0.0
        %1614 = vmatmul.mubr.f32.gmra.mrb[0].mxu0 %v1542
        %v1615 = vpop.f32.mrb[0].mxu0
        %v1616 = vadd.f32 %v1537, %v1615
        %v1617 = vpop.f32.mrb[0].mxu0
        %1618 = vdwg.mxu0
        %v1619 = vadd.f32 %v949, %v1611
        %v1620 = vadd.f32 %v950, %v1616
        %v1621 = vsel %vm987, %v1619, 0.0
        %1622 = vadd.xlane.f32.xlu0 %v1621
        %v1623 = vpop.xlane.xlu0 %1622
        %v1624 = vsel %vm987, %v1620, 0.0
        %1625 = vadd.xlane.f32.xlu0 %v1624
        %v1626 = vpop.xlane.xlu0 %1625
        %v1627 = vrcp.pop 64.0
        %v1628 = vmul.f32 %v1623, %v1627
        %v1629 = vmul.f32 %v1626, %v1627
        %v1630 = vsub.f32 %v1619, %v1628
        %v1631 = vsub.f32 %v1620, %v1629
        %v1632 = vmul.f32 %v1630, %v1630
        %v1633 = vmul.f32 %v1631, %v1631
        %v1634 = vsel %vm987, %v1632, 0.0
        %1635 = vadd.xlane.f32.xlu0 %v1634
        %v1636 = vpop.xlane.xlu0 %1635
        %v1637 = vsel %vm987, %v1633, 0.0
        %1638 = vadd.xlane.f32.xlu0 %v1637
        %v1639 = vpop.xlane.xlu0 %1638
        %v1640 = vmul.f32 %v1636, %v1627
        %v1641 = vmul.f32 %v1639, %v1627
        %v1642 = vadd.f32 %v1640, 1e-05
        %v1643 = vadd.f32 %v1641, 1e-05
        %v1644 = vrsqrt.pop %v1642
        %v1645 = vrsqrt.pop %v1643
        %v1646 = vmul.f32 %v1630, %v1644
        %v1647 = vmul.f32 %v1631, %v1645
        %v1648 = vlaneseq
        %v1649 = vshrl.u32 %v1648, 7
        %v1650 = vsub.s32 1, %v1649
        %v1651 = vrot.slane %v953, %v1650
        %v1652 = vmul.f32 %v1646, %v1651
        %v1653 = vmul.f32 %v1647, %v1651
        %v1654 = vlaneseq
        %v1655 = vshrl.u32 %v1654, 7
        %v1656 = vsub.s32 2, %v1655
        %v1657 = vrot.slane %v953, %v1656
        %v1658 = vadd.f32 %v1652, %v1657
        %v1659 = vadd.f32 %v1653, %v1657
        %s1660 = scalar_lea.vmem %s7, %s1524
        %v1661 = vld [vmem:[%s1660] sm:$0xff]
        %v1662 = vld [vmem:[%s1660 + $0x8] sm:$0xff]
        %v1663 = vld [vmem:[%s1660 + $0x10] sm:$0xff]
        %v1664 = vld [vmem:[%s1660 + $0x18] sm:$0xff]
        %v1665 = vld [vmem:[%s1660 + $0x20] sm:$0xff]
        %v1666 = vld [vmem:[%s1660 + $0x28] sm:$0xff]
        %v1667 = vld [vmem:[%s1660 + $0x30] sm:$0xff]
        %v1668 = vld [vmem:[%s1660 + $0x38] sm:$0xff]
        %s1669 = scalar_lea.vmem %s8, %s944
        %v1670 = vld [vmem:[%s1669] sm:$0x1]
        %v1672 = vlaneseq
        %v1673 = vshrl.u32 %v1672, 7
        %v1674 = vsub.s32 0, %v1673
        %v1675 = vrot.slane %v1670, %v1674
        %v1678 = vsel %vm987, %v1658, 0
        %v1681 = vsel %vm987, %v1659, 0
        %1683 = vmatprep.subr.mxu0 0.0
        %1684 = vmatpush1.msra.mxu0 %v1661
        %1685 = vmatprep.subr.mxu0 0.0
        %1686 = vmatpush1.msra.mxu0 %v1662
        %1687 = vmatprep.subr.mxu0 0.0
        %1688 = vmatpush1.msra.mxu0 %v1663
        %1689 = vmatprep.subr.mxu0 0.0
        %1690 = vmatpush1.msra.mxu0 %v1664
        %1691 = vmatprep.subr.mxu0 0.0
        %1692 = vmatpush1.msra.mxu0 %v1665
        %1693 = vmatprep.subr.mxu0 0.0
        %1694 = vmatpush1.msra.mxu0 %v1666
        %1695 = vmatprep.subr.mxu0 0.0
        %1696 = vmatpush1.msra.mxu0 %v1667
        %1697 = vmatprep.subr.mxu0 0.0
        %1698 = vmatpush1.msra.mxu0 %v1668
        %1699 = vmatprep.subr.mxu0 0.0
        %1700 = vmatpush1.msra.mxu0 0.0
        %1701 = vmatprep.subr.mxu0 0.0
        %1702 = vmatpush1.msra.mxu0 0.0
        %1703 = vmatprep.subr.mxu0 0.0
        %1704 = vmatpush1.msra.mxu0 0.0
        %1705 = vmatprep.subr.mxu0 0.0
        %1706 = vmatpush1.msra.mxu0 0.0
        %1707 = vmatprep.subr.mxu0 0.0
        %1708 = vmatpush1.msra.mxu0 0.0
        %1709 = vmatprep.subr.mxu0 0.0
        %1710 = vmatpush1.msra.mxu0 0.0
        %1711 = vmatprep.subr.mxu0 0.0
        %1712 = vmatpush1.msra.mxu0 0.0
        %1713 = vmatprep.subr.mxu0 0.0
        %1714 = vmatpush1.msra.mxu0 0.0
        %1715 = vmatprep.subr.mxu0 0.0
        %1716 = vmatpush1.msra.mxu0 0.0
        %1717 = vmatprep.subr.mxu0 0.0
        %1718 = vmatpush1.msra.mxu0 0.0
        %1719 = vmatprep.subr.mxu0 0.0
        %1720 = vmatpush1.msra.mxu0 0.0
        %1721 = vmatprep.subr.mxu0 0.0
        %1722 = vmatpush1.msra.mxu0 0.0
        %1723 = vmatprep.subr.mxu0 0.0
        %1724 = vmatpush1.msra.mxu0 0.0
        %1725 = vmatprep.subr.mxu0 0.0
        %1726 = vmatpush1.msra.mxu0 0.0
        %1727 = vmatprep.subr.mxu0 0.0
        %1728 = vmatpush1.msra.mxu0 0.0
        %1729 = vmatprep.subr.mxu0 0.0
        %1730 = vmatpush1.msra.mxu0 0.0
        %1731 = vmatprep.subr.mxu0 0.0
        %1732 = vmatpush1.msra.mxu0 0.0
        %1733 = vmatprep.subr.mxu0 0.0
        %1734 = vmatpush1.msra.mxu0 0.0
        %1735 = vmatprep.subr.mxu0 0.0
        %1736 = vmatpush1.msra.mxu0 0.0
        %1737 = vmatprep.subr.mxu0 0.0
        %1738 = vmatpush1.msra.mxu0 0.0
        %1739 = vmatprep.subr.mxu0 0.0
        %1740 = vmatpush1.msra.mxu0 0.0
        %1741 = vmatprep.subr.mxu0 0.0
        %1742 = vmatpush1.msra.mxu0 0.0
        %1743 = vmatprep.subr.mxu0 0.0
        %1744 = vmatpush1.msra.mxu0 0.0
        %1745 = vmatprep.subr.mxu0 0.0
        %1746 = vmatpush1.msra.mxu0 0.0
        %1747 = vmatprep.mubr.f32.mxu0 0.0
        %1748 = vmatmul.mubr.f32.gmra.mrb[0].mxu0 %v1678
        %v1749 = vpop.f32.mrb[0].mxu0
        %v1750 = vadd.f32 %v1675, %v1749
        %v1751 = vpop.f32.mrb[0].mxu0
        %1752 = vmatprep.mubr.f32.mxu0 0.0
        %1753 = vmatmul.mubr.f32.gmra.mrb[0].mxu0 %v1681
        %v1754 = vpop.f32.mrb[0].mxu0
        %v1755 = vadd.f32 %v1675, %v1754
        %v1756 = vpop.f32.mrb[0].mxu0
        %1757 = vdwg.mxu0
        %v1758 = vmax.f32 %v1750, 0.0
        %v1759 = vmax.f32 %v1755, 0.0
        %s1760 = smul.u32 %s944, 128
        %s1761 = scalar_lea.vmem %s9, %s1760
        %v1762 = vld [vmem:[%s1761] sm:$0xff]
        %v1763 = vld [vmem:[%s1761 + $0x8] sm:$0xff]
        %v1764 = vld [vmem:[%s1761 + $0x10] sm:$0xff]
        %v1765 = vld [vmem:[%s1761 + $0x18] sm:$0xff]
        %v1766 = vld [vmem:[%s1761 + $0x20] sm:$0xff]
        %v1767 = vld [vmem:[%s1761 + $0x28] sm:$0xff]
        %v1768 = vld [vmem:[%s1761 + $0x30] sm:$0xff]
        %v1769 = vld [vmem:[%s1761 + $0x38] sm:$0xff]
        %v1770 = vld [vmem:[%s1761 + $0x40] sm:$0xff]
        %v1771 = vld [vmem:[%s1761 + $0x48] sm:$0xff]
        %v1772 = vld [vmem:[%s1761 + $0x50] sm:$0xff]
        %v1773 = vld [vmem:[%s1761 + $0x58] sm:$0xff]
        %v1774 = vld [vmem:[%s1761 + $0x60] sm:$0xff]
        %v1775 = vld [vmem:[%s1761 + $0x68] sm:$0xff]
        %v1776 = vld [vmem:[%s1761 + $0x70] sm:$0xff]
        %v1777 = vld [vmem:[%s1761 + $0x78] sm:$0xff]
        %v1778 = vlaneseq
        %v1779 = vshrl.u32 %v1778, 7
        %v1780 = vsub.s32 3, %v1779
        %v1781 = vrot.slane %v953, %v1780
        %1782 = vmatprep.subr.mxu0 0.0
        %1783 = vmatpush1.msra.mxu0 %v1762
        %1784 = vmatprep.subr.mxu0 0.0
        %1785 = vmatpush1.msra.mxu0 %v1763
        %1786 = vmatprep.subr.mxu0 0.0
        %1787 = vmatpush1.msra.mxu0 %v1764
        %1788 = vmatprep.subr.mxu0 0.0
        %1789 = vmatpush1.msra.mxu0 %v1765
        %1790 = vmatprep.subr.mxu0 0.0
        %1791 = vmatpush1.msra.mxu0 %v1766
        %1792 = vmatprep.subr.mxu0 0.0
        %1793 = vmatpush1.msra.mxu0 %v1767
        %1794 = vmatprep.subr.mxu0 0.0
        %1795 = vmatpush1.msra.mxu0 %v1768
        %1796 = vmatprep.subr.mxu0 0.0
        %1797 = vmatpush1.msra.mxu0 %v1769
        %1798 = vmatprep.subr.mxu0 0.0
        %1799 = vmatpush1.msra.mxu0 %v1770
        %1800 = vmatprep.subr.mxu0 0.0
        %1801 = vmatpush1.msra.mxu0 %v1771
        %1802 = vmatprep.subr.mxu0 0.0
        %1803 = vmatpush1.msra.mxu0 %v1772
        %1804 = vmatprep.subr.mxu0 0.0
        %1805 = vmatpush1.msra.mxu0 %v1773
        %1806 = vmatprep.subr.mxu0 0.0
        %1807 = vmatpush1.msra.mxu0 %v1774
        %1808 = vmatprep.subr.mxu0 0.0
        %1809 = vmatpush1.msra.mxu0 %v1775
        %1810 = vmatprep.subr.mxu0 0.0
        %1811 = vmatpush1.msra.mxu0 %v1776
        %1812 = vmatprep.subr.mxu0 0.0
        %1813 = vmatpush1.msra.mxu0 %v1777
        %1814 = vmatprep.subr.mxu0 0.0
        %1815 = vmatpush1.msra.mxu0 0.0
        %1816 = vmatprep.subr.mxu0 0.0
        %1817 = vmatpush1.msra.mxu0 0.0
        %1818 = vmatprep.subr.mxu0 0.0
        %1819 = vmatpush1.msra.mxu0 0.0
        %1820 = vmatprep.subr.mxu0 0.0
        %1821 = vmatpush1.msra.mxu0 0.0
        %1822 = vmatprep.subr.mxu0 0.0
        %1823 = vmatpush1.msra.mxu0 0.0
        %1824 = vmatprep.subr.mxu0 0.0
        %1825 = vmatpush1.msra.mxu0 0.0
        %1826 = vmatprep.subr.mxu0 0.0
        %1827 = vmatpush1.msra.mxu0 0.0
        %1828 = vmatprep.subr.mxu0 0.0
        %1829 = vmatpush1.msra.mxu0 0.0
        %1830 = vmatprep.subr.mxu0 0.0
        %1831 = vmatpush1.msra.mxu0 0.0
        %1832 = vmatprep.subr.mxu0 0.0
        %1833 = vmatpush1.msra.mxu0 0.0
        %1834 = vmatprep.subr.mxu0 0.0
        %1835 = vmatpush1.msra.mxu0 0.0
        %1836 = vmatprep.subr.mxu0 0.0
        %1837 = vmatpush1.msra.mxu0 0.0
        %1838 = vmatprep.subr.mxu0 0.0
        %1839 = vmatpush1.msra.mxu0 0.0
        %1840 = vmatprep.subr.mxu0 0.0
        %1841 = vmatpush1.msra.mxu0 0.0
        %1842 = vmatprep.subr.mxu0 0.0
        %1843 = vmatpush1.msra.mxu0 0.0
        %1844 = vmatprep.subr.mxu0 0.0
        %1845 = vmatpush1.msra.mxu0 0.0
        %1846 = vmatprep.mubr.f32.mxu0 0.0
        %1847 = vmatmul.mubr.f32.gmra.mrb[0].mxu0 %v1758
        %v1848 = vpop.f32.mrb[0].mxu0
        %v1849 = vadd.f32 %v1781, %v1848
        %v1850 = vpop.f32.mrb[0].mxu0
        %1851 = vmatprep.mubr.f32.mxu0 0.0
        %1852 = vmatmul.mubr.f32.gmra.mrb[0].mxu0 %v1759
        %v1853 = vpop.f32.mrb[0].mxu0
        %v1854 = vadd.f32 %v1781, %v1853
        %v1855 = vpop.f32.mrb[0].mxu0
        %1856 = vdwg.mxu0
        %v1857 = vadd.f32 %v1658, %v1849
        %v1858 = vadd.f32 %v1659, %v1854
        %v1859 = vsel %vm987, %v1857, 0.0
        %1860 = vadd.xlane.f32.xlu0 %v1859
        %v1861 = vpop.xlane.xlu0 %1860
        %v1862 = vsel %vm987, %v1858, 0.0
        %1863 = vadd.xlane.f32.xlu0 %v1862
        %v1864 = vpop.xlane.xlu0 %1863
        %v1865 = vmul.f32 %v1861, %v1627
        %v1866 = vmul.f32 %v1864, %v1627
        %v1867 = vsub.f32 %v1857, %v1865
        %v1868 = vsub.f32 %v1858, %v1866
        %v1869 = vmul.f32 %v1867, %v1867
        %v1870 = vmul.f32 %v1868, %v1868
        %v1871 = vsel %vm987, %v1869, 0.0
        %1872 = vadd.xlane.f32.xlu0 %v1871
        %v1873 = vpop.xlane.xlu0 %1872
        %v1874 = vsel %vm987, %v1870, 0.0
        %1875 = vadd.xlane.f32.xlu0 %v1874
        %v1876 = vpop.xlane.xlu0 %1875
        %v1877 = vmul.f32 %v1873, %v1627
        %v1878 = vmul.f32 %v1876, %v1627
        %v1879 = vadd.f32 %v1877, 1e-05
        %v1880 = vadd.f32 %v1878, 1e-05
        %v1881 = vrsqrt.pop %v1879
        %v1882 = vrsqrt.pop %v1880
        %v1883 = vmul.f32 %v1867, %v1881
        %v1884 = vmul.f32 %v1868, %v1882
        %v1885 = vlaneseq
        %v1886 = vshrl.u32 %v1885, 7
        %v1887 = vsub.s32 4, %v1886
        %v1888 = vrot.slane %v953, %v1887
        %v1889 = vmul.f32 %v1883, %v1888
        %v1890 = vmul.f32 %v1884, %v1888
        %v1891 = vlaneseq
        %v1892 = vshrl.u32 %v1891, 7
        %v1893 = vsub.s32 5, %v1892
        %v1894 = vrot.slane %v953, %v1893
        %v1895 = vadd.f32 %v1889, %v1894
        %v1896 = vadd.f32 %v1890, %v1894
      $region121: #{forward.1} parent=115 // loop_footer
        %s948 = sadd.s32 1, %s944
      $region122: #{forward.1} parent=115 // loop_footer_branch
        %943 = sbr.rel target = $region118
      $region123: #{forward.1} parent=115 // loop_exit
        _
      %v1897 = vld [vmem:[%s15] sm:$0xff]
      %v1898 = vld [vmem:[%s15 + $0x8] sm:$0xff]
      %v1899 = vld [vmem:[%s15 + $0x10] sm:$0xff]
      %v1900 = vld [vmem:[%s15 + $0x18] sm:$0xff]
      %v1901 = vld [vmem:[%s15 + $0x20] sm:$0xff]
      %v1902 = vld [vmem:[%s15 + $0x28] sm:$0xff]
      %v1903 = vld [vmem:[%s15 + $0x30] sm:$0xff]
      %v1904 = vld [vmem:[%s15 + $0x38] sm:$0xff]
      %v1905 = vld [vmem:[%s15 + $0x40] sm:$0xff]
      %v1906 = vld [vmem:[%s15 + $0x48] sm:$0xff]
      %v1907 = vld [vmem:[%s15 + $0x50] sm:$0xff]
      %v1908 = vld [vmem:[%s15 + $0x58] sm:$0xff]
      %v1909 = vld [vmem:[%s15 + $0x60] sm:$0xff]
      %v1910 = vld [vmem:[%s15 + $0x68] sm:$0xff]
      %v1911 = vld [vmem:[%s15 + $0x70] sm:$0xff]
      %v1912 = vld [vmem:[%s15 + $0x78] sm:$0xff]
      %v1913 = vld [vmem:[%s16] sm:$0x3]
      %v1915 = vlaneseq
      %v1916 = vshrl.u32 %v1915, 7
      %v1917 = vsub.s32 0, %v1916
      %v1918 = vrot.slane %v1913, %v1917
      %v1919 = vlaneseq
      %v1920 = vshrl.u32 %v1919, 7
      %v1921 = vsub.s32 1, %v1920
      %v1922 = vrot.slane %v1913, %v1921
      %vm1925 = vcmask 523264
      %v1927 = vsel %vm1925, %v949, 0
      %v1930 = vsel %vm1925, %v950, 0
      %1932 = vmatprep.subr.mxu0 %v1898
      %1933 = vmatpush1.msra.mxu0 %v1897
      %1934 = vmatprep.subr.mxu0 %v1900
      %1935 = vmatpush1.msra.mxu0 %v1899
      %1936 = vmatprep.subr.mxu0 %v1902
      %1937 = vmatpush1.msra.mxu0 %v1901
      %1938 = vmatprep.subr.mxu0 %v1904
      %1939 = vmatpush1.msra.mxu0 %v1903
      %1940 = vmatprep.subr.mxu0 %v1906
      %1941 = vmatpush1.msra.mxu0 %v1905
      %1942 = vmatprep.subr.mxu0 %v1908
      %1943 = vmatpush1.msra.mxu0 %v1907
      %1944 = vmatprep.subr.mxu0 %v1910
      %1945 = vmatpush1.msra.mxu0 %v1909
      %1946 = vmatprep.subr.mxu0 %v1912
      %1947 = vmatpush1.msra.mxu0 %v1911
      %1948 = vmatprep.subr.mxu0 0.0
      %1949 = vmatpush1.msra.mxu0 0.0
      %1950 = vmatprep.subr.mxu0 0.0
      %1951 = vmatpush1.msra.mxu0 0.0
      %1952 = vmatprep.subr.mxu0 0.0
      %1953 = vmatpush1.msra.mxu0 0.0
      %1954 = vmatprep.subr.mxu0 0.0
      %1955 = vmatpush1.msra.mxu0 0.0
      %1956 = vmatprep.subr.mxu0 0.0
      %1957 = vmatpush1.msra.mxu0 0.0
      %1958 = vmatprep.subr.mxu0 0.0
      %1959 = vmatpush1.msra.mxu0 0.0
      %1960 = vmatprep.subr.mxu0 0.0
      %1961 = vmatpush1.msra.mxu0 0.0
      %1962 = vmatprep.subr.mxu0 0.0
      %1963 = vmatpush1.msra.mxu0 0.0
      %1964 = vmatprep.subr.mxu0 0.0
      %1965 = vmatpush1.msra.mxu0 0.0
      %1966 = vmatprep.subr.mxu0 0.0
      %1967 = vmatpush1.msra.mxu0 0.0
      %1968 = vmatprep.subr.mxu0 0.0
      %1969 = vmatpush1.msra.mxu0 0.0
      %1970 = vmatprep.subr.mxu0 0.0
      %1971 = vmatpush1.msra.mxu0 0.0
      %1972 = vmatprep.subr.mxu0 0.0
      %1973 = vmatpush1.msra.mxu0 0.0
      %1974 = vmatprep.subr.mxu0 0.0
      %1975 = vmatpush1.msra.mxu0 0.0
      %1976 = vmatprep.subr.mxu0 0.0
      %1977 = vmatpush1.msra.mxu0 0.0
      %1978 = vmatprep.subr.mxu0 0.0
      %1979 = vmatpush1.msra.mxu0 0.0
      %1980 = vmatprep.subr.mxu0 0.0
      %1981 = vmatpush1.msra.mxu0 0.0
      %1982 = vmatprep.subr.mxu0 0.0
      %1983 = vmatpush1.msra.mxu0 0.0
      %1984 = vmatprep.subr.mxu0 0.0
      %1985 = vmatpush1.msra.mxu0 0.0
      %1986 = vmatprep.subr.mxu0 0.0
      %1987 = vmatpush1.msra.mxu0 0.0
      %1988 = vmatprep.subr.mxu0 0.0
      %1989 = vmatpush1.msra.mxu0 0.0
      %1990 = vmatprep.subr.mxu0 0.0
      %1991 = vmatpush1.msra.mxu0 0.0
      %1992 = vmatprep.subr.mxu0 0.0
      %1993 = vmatpush1.msra.mxu0 0.0
      %1994 = vmatprep.subr.mxu0 0.0
      %1995 = vmatpush1.msra.mxu0 0.0
      %1996 = vmatprep.mubr.f32.mxu0 0.0
      %1997 = vmatmul.mubr.f32.gmra.mrb[0].mxu0 %v1927
      %v1998 = vpop.f32.mrb[0].mxu0
      %v1999 = vadd.f32 %v1918, %v1998
      %v2000 = vpop.f32.mrb[0].mxu0
      %v2001 = vadd.f32 %v1922, %v2000
      %2002 = vmatprep.mubr.f32.mxu0 0.0
      %2003 = vmatmul.mubr.f32.gmra.mrb[0].mxu0 %v1930
      %v2004 = vpop.f32.mrb[0].mxu0
      %v2005 = vadd.f32 %v1918, %v2004
      %v2006 = vpop.f32.mrb[0].mxu0
      %v2007 = vadd.f32 %v1922, %v2006
      %2008 = vdwg.mxu0
      %v2009 = vld [vmem:[%s748] sm:$0xff]
      %v2010 = vld [vmem:[%s21] sm:$0xff]
      %v2011 = vld [vmem:[%s21 + $0x8] sm:$0xff]
      %v2012 = vld [vmem:[%s11] sm:$0xff]
      %v2013 = vld [vmem:[%s11 + $0x8] sm:$0xff]
      %v2014 = vld [vmem:[%s11 + $0x10] sm:$0xff]
      %v2015 = vld [vmem:[%s11 + $0x18] sm:$0xff]
      %v2016 = vld [vmem:[%s11 + $0x20] sm:$0xff]
      %v2017 = vld [vmem:[%s11 + $0x28] sm:$0xff]
      %v2018 = vld [vmem:[%s11 + $0x30] sm:$0xff]
      %v2019 = vld [vmem:[%s11 + $0x38] sm:$0xff]
      %v2020 = vld [vmem:[%s11 + $0x40] sm:$0xff]
      %v2021 = vld [vmem:[%s11 + $0x48] sm:$0xff]
      %v2022 = vld [vmem:[%s11 + $0x50] sm:$0xff]
      %v2023 = vld [vmem:[%s11 + $0x58] sm:$0xff]
      %v2024 = vld [vmem:[%s11 + $0x60] sm:$0xff]
      %v2025 = vld [vmem:[%s11 + $0x68] sm:$0xff]
      %v2026 = vld [vmem:[%s11 + $0x70] sm:$0xff]
      %v2027 = vld [vmem:[%s11 + $0x78] sm:$0xff]
      %v2028 = vld [vmem:[%s12] sm:$0x3]
      %v2030 = vlaneseq
      %v2031 = vshrl.u32 %v2030, 7
      %v2032 = vsub.s32 0, %v2031
      %v2033 = vrot.slane %v2028, %v2032
      %v2034 = vlaneseq
      %v2035 = vshrl.u32 %v2034, 7
      %v2036 = vsub.s32 1, %v2035
      %v2037 = vrot.slane %v2028, %v2036
      %v2041 = vsel %vm1925, %v2009, 0
      %2043 = vmatprep.subr.mxu0 %v2013
      %2044 = vmatpush1.msra.mxu0 %v2012
      %2045 = vmatprep.subr.mxu0 %v2015
      %2046 = vmatpush1.msra.mxu0 %v2014
      %2047 = vmatprep.subr.mxu0 %v2017
      %2048 = vmatpush1.msra.mxu0 %v2016
      %2049 = vmatprep.subr.mxu0 %v2019
      %2050 = vmatpush1.msra.mxu0 %v2018
      %2051 = vmatprep.subr.mxu0 %v2021
      %2052 = vmatpush1.msra.mxu0 %v2020
      %2053 = vmatprep.subr.mxu0 %v2023
      %2054 = vmatpush1.msra.mxu0 %v2022
      %2055 = vmatprep.subr.mxu0 %v2025
      %2056 = vmatpush1.msra.mxu0 %v2024
      %2057 = vmatprep.subr.mxu0 %v2027
      %2058 = vmatpush1.msra.mxu0 %v2026
      %2059 = vmatprep.subr.mxu0 0.0
      %2060 = vmatpush1.msra.mxu0 0.0
      %2061 = vmatprep.subr.mxu0 0.0
      %2062 = vmatpush1.msra.mxu0 0.0
      %2063 = vmatprep.subr.mxu0 0.0
      %2064 = vmatpush1.msra.mxu0 0.0
      %2065 = vmatprep.subr.mxu0 0.0
      %2066 = vmatpush1.msra.mxu0 0.0
      %2067 = vmatprep.subr.mxu0 0.0
      %2068 = vmatpush1.msra.mxu0 0.0
      %2069 = vmatprep.subr.mxu0 0.0
      %2070 = vmatpush1.msra.mxu0 0.0
      %2071 = vmatprep.subr.mxu0 0.0
      %2072 = vmatpush1.msra.mxu0 0.0
      %2073 = vmatprep.subr.mxu0 0.0
      %2074 = vmatpush1.msra.mxu0 0.0
      %2075 = vmatprep.subr.mxu0 0.0
      %2076 = vmatpush1.msra.mxu0 0.0
      %2077 = vmatprep.subr.mxu0 0.0
      %2078 = vmatpush1.msra.mxu0 0.0
      %2079 = vmatprep.subr.mxu0 0.0
      %2080 = vmatpush1.msra.mxu0 0.0
      %2081 = vmatprep.subr.mxu0 0.0
      %2082 = vmatpush1.msra.mxu0 0.0
      %2083 = vmatprep.subr.mxu0 0.0
      %2084 = vmatpush1.msra.mxu0 0.0
      %2085 = vmatprep.subr.mxu0 0.0
      %2086 = vmatpush1.msra.mxu0 0.0
      %2087 = vmatprep.subr.mxu0 0.0
      %2088 = vmatpush1.msra.mxu0 0.0
      %2089 = vmatprep.subr.mxu0 0.0
      %2090 = vmatpush1.msra.mxu0 0.0
      %2091 = vmatprep.subr.mxu0 0.0
      %2092 = vmatpush1.msra.mxu0 0.0
      %2093 = vmatprep.subr.mxu0 0.0
      %2094 = vmatpush1.msra.mxu0 0.0
      %2095 = vmatprep.subr.mxu0 0.0
      %2096 = vmatpush1.msra.mxu0 0.0
      %2097 = vmatprep.subr.mxu0 0.0
      %2098 = vmatpush1.msra.mxu0 0.0
      %2099 = vmatprep.subr.mxu0 0.0
      %2100 = vmatpush1.msra.mxu0 0.0
      %2101 = vmatprep.subr.mxu0 0.0
      %2102 = vmatpush1.msra.mxu0 0.0
      %2103 = vmatprep.subr.mxu0 0.0
      %2104 = vmatpush1.msra.mxu0 0.0
      %2105 = vmatprep.subr.mxu0 0.0
      %2106 = vmatpush1.msra.mxu0 0.0
      %2107 = vmatprep.mubr.f32.mxu0 0.0
      %2108 = vmatmul.mubr.f32.gmra.mrb[0].mxu0 %v2041
      %v2109 = vpop.f32.mrb[0].mxu0
      %v2110 = vadd.f32 %v2033, %v2109
      %v2111 = vpop.f32.mrb[0].mxu0
      %v2112 = vadd.f32 %v2037, %v2111
      %2113 = vdwg.mxu0
      %2115 = vrot.lane.b32.xlu0 %v2110, 112
      %v2116 = vpop.permute.xlu0 %2115
      %2117 = vrot.lane.b32.xlu0 %v2110, 96
      %v2118 = vpop.permute.xlu0 %2117
      %2119 = vrot.lane.b32.xlu0 %v2110, 80
      %v2120 = vpop.permute.xlu0 %2119
      %2122 = vrot.lane.b32.xlu0 %v2112, 112
      %v2123 = vpop.permute.xlu0 %2122
      %2125 = vrot.lane.b32.xlu0 %v2112, 96
      %v2126 = vpop.permute.xlu0 %2125
      %2128 = vrot.lane.b32.xlu0 %v2112, 80
      %v2129 = vpop.permute.xlu0 %2128
      %2131 = vrot.lane.b32.xlu0 %v2110, 64
      %v2132 = vpop.permute.xlu0 %2131
      %2133 = vrot.lane.b32.xlu0 %v2116, 64
      %v2134 = vpop.permute.xlu0 %2133
      %2135 = vrot.lane.b32.xlu0 %v2118, 64
      %v2136 = vpop.permute.xlu0 %2135
      %2137 = vrot.lane.b32.xlu0 %v2120, 64
      %v2138 = vpop.permute.xlu0 %2137
      %vm2139 = vcmask 130048
      %v2140 = vsel %vm2139, %v2110, 0
      %v2142 = vsel %vm2139, %v2116, 0
      %v2144 = vsel %vm2139, %v2118, 0
      %v2146 = vsel %vm2139, %v2120, 0
      %v2148 = vsel %vm2139, %v2132, 0
      %v2150 = vsel %vm2139, %v2134, 0
      %v2152 = vsel %vm2139, %v2136, 0
      %v2154 = vsel %vm2139, %v2138, 0
      %2156 = vmatprep.subr.mxu0 0.0
      %2157 = vmatpush1.xpose.msra.mxu0 %v2148
      %2158 = vmatprep.subr.mxu0 0.0
      %2159 = vmatpush1.xpose.msra.mxu0 %v2150
      %2160 = vmatprep.subr.mxu0 0.0
      %2161 = vmatpush1.xpose.msra.mxu0 %v2152
      %2162 = vmatprep.subr.mxu0 0.0
      %2163 = vmatpush1.xpose.msra.mxu0 %v2154
      %2164 = vmatprep.subr.mxu0 0.0
      %2165 = vmatpush1.xpose.msra.mxu0 0.0
      %2166 = vmatprep.subr.mxu0 0.0
      %2167 = vmatpush1.xpose.msra.mxu0 0.0
      %2168 = vmatprep.subr.mxu0 0.0
      %2169 = vmatpush1.xpose.msra.mxu0 0.0
      %2170 = vmatprep.subr.mxu0 0.0
      %2171 = vmatpush1.xpose.msra.mxu0 0.0
      %2172 = vmatprep.subr.mxu0 0.0
      %2173 = vmatpush1.xpose.msra.mxu0 0.0
      %2174 = vmatprep.subr.mxu0 0.0
      %2175 = vmatpush1.xpose.msra.mxu0 0.0
      %2176 = vmatprep.subr.mxu0 0.0
      %2177 = vmatpush1.xpose.msra.mxu0 0.0
      %2178 = vmatprep.subr.mxu0 0.0
      %2179 = vmatpush1.xpose.msra.mxu0 0.0
      %2180 = vmatprep.subr.mxu0 0.0
      %2181 = vmatpush1.xpose.msra.mxu0 0.0
      %2182 = vmatprep.subr.mxu0 0.0
      %2183 = vmatpush1.xpose.msra.mxu0 0.0
      %2184 = vmatprep.subr.mxu0 0.0
      %2185 = vmatpush1.xpose.msra.mxu0 0.0
      %2186 = vmatprep.subr.mxu0 0.0
      %2187 = vmatpush1.xpose.msra.mxu0 0.0
      %2188 = vmatprep.subr.mxu0 0.0
      %2189 = vmatpush1.xpose.msra.mxu0 0.0
      %2190 = vmatprep.subr.mxu0 0.0
      %2191 = vmatpush1.xpose.msra.mxu0 0.0
      %2192 = vmatprep.subr.mxu0 0.0
      %2193 = vmatpush1.xpose.msra.mxu0 0.0
      %2194 = vmatprep.subr.mxu0 0.0
      %2195 = vmatpush1.xpose.msra.mxu0 0.0
      %2196 = vmatprep.subr.mxu0 0.0
      %2197 = vmatpush1.xpose.msra.mxu0 0.0
      %2198 = vmatprep.subr.mxu0 0.0
      %2199 = vmatpush1.xpose.msra.mxu0 0.0
      %2200 = vmatprep.subr.mxu0 0.0
      %2201 = vmatpush1.xpose.msra.mxu0 0.0
      %2202 = vmatprep.subr.mxu0 0.0
      %2203 = vmatpush1.xpose.msra.mxu0 0.0
      %2204 = vmatprep.subr.mxu0 0.0
      %2205 = vmatpush1.xpose.msra.mxu0 0.0
      %2206 = vmatprep.subr.mxu0 0.0
      %2207 = vmatpush1.xpose.msra.mxu0 0.0
      %2208 = vmatprep.subr.mxu0 0.0
      %2209 = vmatpush1.xpose.msra.mxu0 0.0
      %2210 = vmatprep.subr.mxu0 0.0
      %2211 = vmatpush1.xpose.msra.mxu0 0.0
      %2212 = vmatprep.subr.mxu0 0.0
      %2213 = vmatpush1.xpose.msra.mxu0 0.0
      %2214 = vmatprep.subr.mxu0 0.0
      %2215 = vmatpush1.xpose.msra.mxu0 0.0
      %2216 = vmatprep.subr.mxu0 0.0
      %2217 = vmatpush1.xpose.msra.mxu0 0.0
      %2218 = vmatprep.subr.mxu0 0.0
      %2219 = vmatpush1.xpose.msra.mxu0 0.0
      %2220 = vmatprep.mubr.f32.mxu0 0.0
      %2221 = vmatmul.mubr.f32.gmra.mrb[0].mxu0 %v2140
      %v2222 = vpop.f32.mrb[0].mxu0
      %v2223 = vadd.f32 0.0, %v2222
      %v2224 = vpop.f32.mrb[0].mxu0
      %2225 = vmatprep.mubr.f32.mxu0 0.0
      %2226 = vmatmul.mubr.f32.gmra.mrb[0].mxu0 %v2142
      %v2227 = vpop.f32.mrb[0].mxu0
      %v2228 = vadd.f32 0.0, %v2227
      %v2229 = vpop.f32.mrb[0].mxu0
      %2230 = vmatprep.mubr.f32.mxu0 0.0
      %2231 = vmatmul.mubr.f32.gmra.mrb[0].mxu0 %v2144
      %v2232 = vpop.f32.mrb[0].mxu0
      %v2233 = vadd.f32 0.0, %v2232
      %v2234 = vpop.f32.mrb[0].mxu0
      %2235 = vmatprep.mubr.f32.mxu0 0.0
      %2236 = vmatmul.mubr.f32.gmra.mrb[0].mxu0 %v2146
      %v2237 = vpop.f32.mrb[0].mxu0
      %v2238 = vadd.f32 0.0, %v2237
      %v2239 = vpop.f32.mrb[0].mxu0
      %2240 = vdwg.mxu0
      %v2241 = vmul.f32 %v2223, 0.25
      %v2242 = vmul.f32 %v2228, 0.25
      %v2243 = vmul.f32 %v2233, 0.25
      %v2244 = vmul.f32 %v2238, 0.25
      %v2245 = vadd.f32 %v2241, %v811
      %v2246 = vadd.f32 %v2242, %v812
      %v2247 = vadd.f32 %v2243, %v813
      %v2248 = vadd.f32 %v2244, %v814
      %vm2249 = vcmask 261120
      %v2250 = vsel %vm2249, %v2245, -inf
      %2251 = vmax.xlane.f32.xlu0 %v2250
      %v2252 = vpop.xlane.xlu0 %2251
      %v2253 = vsel %vm2249, %v2246, -inf
      %2254 = vmax.xlane.f32.xlu0 %v2253
      %v2255 = vpop.xlane.xlu0 %2254
      %v2256 = vsel %vm2249, %v2247, -inf
      %2257 = vmax.xlane.f32.xlu0 %v2256
      %v2258 = vpop.xlane.xlu0 %2257
      %v2259 = vsel %vm2249, %v2248, -inf
      %2260 = vmax.xlane.f32.xlu0 %v2259
      %v2261 = vpop.xlane.xlu0 %2260
      %v2262 = vsub.f32 %v2245, %v2252
      %v2263 = vsub.f32 %v2246, %v2255
      %v2264 = vsub.f32 %v2247, %v2258
      %v2265 = vsub.f32 %v2248, %v2261
      %v2266 = vmul.f32 %v2262, 1.442695
      %v2267 = vpow.pop %v2266
      %v2268 = vmul.f32 %v2263, 1.442695
      %v2269 = vpow.pop %v2268
      %v2270 = vmul.f32 %v2264, 1.442695
      %v2271 = vpow.pop %v2270
      %v2272 = vmul.f32 %v2265, 1.442695
      %v2273 = vpow.pop %v2272
      %v2274 = vsel %vm2249, %v2267, 0.0
      %2275 = vadd.xlane.f32.xlu0 %v2274
      %v2276 = vpop.xlane.xlu0 %2275
      %v2277 = vsel %vm2249, %v2269, 0.0
      %2278 = vadd.xlane.f32.xlu0 %v2277
      %v2279 = vpop.xlane.xlu0 %2278
      %v2280 = vsel %vm2249, %v2271, 0.0
      %2281 = vadd.xlane.f32.xlu0 %v2280
      %v2282 = vpop.xlane.xlu0 %2281
      %v2283 = vsel %vm2249, %v2273, 0.0
      %2284 = vadd.xlane.f32.xlu0 %v2283
      %v2285 = vpop.xlane.xlu0 %2284
      %v2286 = vrcp.pop %v2276
      %v2287 = vmul.f32 %v2267, %v2286
      %v2288 = vrcp.pop %v2279
      %v2289 = vmul.f32 %v2269, %v2288
      %v2290 = vrcp.pop %v2282
      %v2291 = vmul.f32 %v2271, %v2290
      %v2292 = vrcp.pop %v2285
      %v2293 = vmul.f32 %v2273, %v2292
      %v2295 = vsel %vm2249, %v2287, 0
      %v2298 = vsel %vm2249, %v2289, 0
      %v2301 = vsel %vm2249, %v2291, 0
      %v2304 = vsel %vm2249, %v2293, 0
      %2306 = vmatprep.subr.mxu0 0.0
      %2307 = vmatpush1.msra.mxu0 %v2112
      %2308 = vmatprep.subr.mxu0 0.0
      %2309 = vmatpush1.msra.mxu0 %v2123
      %2310 = vmatprep.subr.mxu0 0.0
      %2311 = vmatpush1.msra.mxu0 %v2126
      %2312 = vmatprep.subr.mxu0 0.0
      %2313 = vmatpush1.msra.mxu0 %v2129
      %2314 = vmatprep.subr.mxu0 0.0
      %2315 = vmatpush1.msra.mxu0 0.0
      %2316 = vmatprep.subr.mxu0 0.0
      %2317 = vmatpush1.msra.mxu0 0.0
      %2318 = vmatprep.subr.mxu0 0.0
      %2319 = vmatpush1.msra.mxu0 0.0
      %2320 = vmatprep.subr.mxu0 0.0
      %2321 = vmatpush1.msra.mxu0 0.0
      %2322 = vmatprep.subr.mxu0 0.0
      %2323 = vmatpush1.msra.mxu0 0.0
      %2324 = vmatprep.subr.mxu0 0.0
      %2325 = vmatpush1.msra.mxu0 0.0
      %2326 = vmatprep.subr.mxu0 0.0
      %2327 = vmatpush1.msra.mxu0 0.0
      %2328 = vmatprep.subr.mxu0 0.0
      %2329 = vmatpush1.msra.mxu0 0.0
      %2330 = vmatprep.subr.mxu0 0.0
      %2331 = vmatpush1.msra.mxu0 0.0
      %2332 = vmatprep.subr.mxu0 0.0
      %2333 = vmatpush1.msra.mxu0 0.0
      %2334 = vmatprep.subr.mxu0 0.0
      %2335 = vmatpush1.msra.mxu0 0.0
      %2336 = vmatprep.subr.mxu0 0.0
      %2337 = vmatpush1.msra.mxu0 0.0
      %2338 = vmatprep.subr.mxu0 0.0
      %2339 = vmatpush1.msra.mxu0 0.0
      %2340 = vmatprep.subr.mxu0 0.0
      %2341 = vmatpush1.msra.mxu0 0.0
      %2342 = vmatprep.subr.mxu0 0.0
      %2343 = vmatpush1.msra.mxu0 0.0
      %2344 = vmatprep.subr.mxu0 0.0
      %2345 = vmatpush1.msra.mxu0 0.0
      %2346 = vmatprep.subr.mxu0 0.0
      %2347 = vmatpush1.msra.mxu0 0.0
      %2348 = vmatprep.subr.mxu0 0.0
      %2349 = vmatpush1.msra.mxu0 0.0
      %2350 = vmatprep.subr.mxu0 0.0
      %2351 = vmatpush1.msra.mxu0 0.0
      %2352 = vmatprep.subr.mxu0 0.0
      %2353 = vmatpush1.msra.mxu0 0.0
      %2354 = vmatprep.subr.mxu0 0.0
      %2355 = vmatpush1.msra.mxu0 0.0
      %2356 = vmatprep.subr.mxu0 0.0
      %2357 = vmatpush1.msra.mxu0 0.0
      %2358 = vmatprep.subr.mxu0 0.0
      %2359 = vmatpush1.msra.mxu0 0.0
      %2360 = vmatprep.subr.mxu0 0.0
      %2361 = vmatpush1.msra.mxu0 0.0
      %2362 = vmatprep.subr.mxu0 0.0
      %2363 = vmatpush1.msra.mxu0 0.0
      %2364 = vmatprep.subr.mxu0 0.0
      %2365 = vmatpush1.msra.mxu0 0.0
      %2366 = vmatprep.subr.mxu0 0.0
      %2367 = vmatpush1.msra.mxu0 0.0
      %2368 = vmatprep.subr.mxu0 0.0
      %2369 = vmatpush1.msra.mxu0 0.0
      %2370 = vmatprep.mubr.f32.mxu0 0.0
      %2371 = vmatmul.mubr.f32.gmra.mrb[0].mxu0 %v2295
      %v2372 = vpop.f32.mrb[0].mxu0
      %v2373 = vadd.f32 0.0, %v2372
      %v2374 = vpop.f32.mrb[0].mxu0
      %2375 = vmatprep.mubr.f32.mxu0 0.0
      %2376 = vmatmul.mubr.f32.gmra.mrb[0].mxu0 %v2298
      %v2377 = vpop.f32.mrb[0].mxu0
      %v2378 = vadd.f32 0.0, %v2377
      %v2379 = vpop.f32.mrb[0].mxu0
      %2380 = vmatprep.mubr.f32.mxu0 0.0
      %2381 = vmatmul.mubr.f32.gmra.mrb[0].mxu0 %v2301
      %v2382 = vpop.f32.mrb[0].mxu0
      %v2383 = vadd.f32 0.0, %v2382
      %v2384 = vpop.f32.mrb[0].mxu0
      %2385 = vmatprep.mubr.f32.mxu0 0.0
      %2386 = vmatmul.mubr.f32.gmra.mrb[0].mxu0 %v2304
      %v2387 = vpop.f32.mrb[0].mxu0
      %v2388 = vadd.f32 0.0, %v2387
      %v2389 = vpop.f32.mrb[0].mxu0
      %2390 = vdwg.mxu0
      %2392 = vrot.lane.b32.xlu0 %v2378, 16
      %v2393 = vpop.permute.xlu0 %2392
      %2396 = vrot.lane.b32.xlu0 %v2383, 32
      %v2397 = vpop.permute.xlu0 %2396
      %2400 = vrot.lane.b32.xlu0 %v2388, 48
      %v2401 = vpop.permute.xlu0 %2400
      %v2403 = vsel %vm2139, %v2373, %v2393
      %v2404 = vsel %vm2249, %v2403, %v2397
      %vm2405 = vcmask 392192
      %v2406 = vsel %vm2405, %v2404, %v2401
      %v2407 = vld [vmem:[%s13] sm:$0xff]
      %v2408 = vld [vmem:[%s13 + $0x8] sm:$0xff]
      %v2409 = vld [vmem:[%s13 + $0x10] sm:$0xff]
      %v2410 = vld [vmem:[%s13 + $0x18] sm:$0xff]
      %v2411 = vld [vmem:[%s13 + $0x20] sm:$0xff]
      %v2412 = vld [vmem:[%s13 + $0x28] sm:$0xff]
      %v2413 = vld [vmem:[%s13 + $0x30] sm:$0xff]
      %v2414 = vld [vmem:[%s13 + $0x38] sm:$0xff]
      %v2415 = vlaneseq
      %v2416 = vshrl.u32 %v2415, 7
      %v2417 = vsub.s32 0, %v2416
      %v2418 = vrot.slane %v2010, %v2417
      %v2420 = vsel %vm1925, %v2406, 0
      %2422 = vmatprep.subr.mxu0 0.0
      %2423 = vmatpush1.msra.mxu0 %v2407
      %2424 = vmatprep.subr.mxu0 0.0
      %2425 = vmatpush1.msra.mxu0 %v2408
      %2426 = vmatprep.subr.mxu0 0.0
      %2427 = vmatpush1.msra.mxu0 %v2409
      %2428 = vmatprep.subr.mxu0 0.0
      %2429 = vmatpush1.msra.mxu0 %v2410
      %2430 = vmatprep.subr.mxu0 0.0
      %2431 = vmatpush1.msra.mxu0 %v2411
      %2432 = vmatprep.subr.mxu0 0.0
      %2433 = vmatpush1.msra.mxu0 %v2412
      %2434 = vmatprep.subr.mxu0 0.0
      %2435 = vmatpush1.msra.mxu0 %v2413
      %2436 = vmatprep.subr.mxu0 0.0
      %2437 = vmatpush1.msra.mxu0 %v2414
      %2438 = vmatprep.subr.mxu0 0.0
      %2439 = vmatpush1.msra.mxu0 0.0
      %2440 = vmatprep.subr.mxu0 0.0
      %2441 = vmatpush1.msra.mxu0 0.0
      %2442 = vmatprep.subr.mxu0 0.0
      %2443 = vmatpush1.msra.mxu0 0.0
      %2444 = vmatprep.subr.mxu0 0.0
      %2445 = vmatpush1.msra.mxu0 0.0
      %2446 = vmatprep.subr.mxu0 0.0
      %2447 = vmatpush1.msra.mxu0 0.0
      %2448 = vmatprep.subr.mxu0 0.0
      %2449 = vmatpush1.msra.mxu0 0.0
      %2450 = vmatprep.subr.mxu0 0.0
      %2451 = vmatpush1.msra.mxu0 0.0
      %2452 = vmatprep.subr.mxu0 0.0
      %2453 = vmatpush1.msra.mxu0 0.0
      %2454 = vmatprep.subr.mxu0 0.0
      %2455 = vmatpush1.msra.mxu0 0.0
      %2456 = vmatprep.subr.mxu0 0.0
      %2457 = vmatpush1.msra.mxu0 0.0
      %2458 = vmatprep.subr.mxu0 0.0
      %2459 = vmatpush1.msra.mxu0 0.0
      %2460 = vmatprep.subr.mxu0 0.0
      %2461 = vmatpush1.msra.mxu0 0.0
      %2462 = vmatprep.subr.mxu0 0.0
      %2463 = vmatpush1.msra.mxu0 0.0
      %2464 = vmatprep.subr.mxu0 0.0
      %2465 = vmatpush1.msra.mxu0 0.0
      %2466 = vmatprep.subr.mxu0 0.0
      %2467 = vmatpush1.msra.mxu0 0.0
      %2468 = vmatprep.subr.mxu0 0.0
      %2469 = vmatpush1.msra.mxu0 0.0
      %2470 = vmatprep.subr.mxu0 0.0
      %2471 = vmatpush1.msra.mxu0 0.0
      %2472 = vmatprep.subr.mxu0 0.0
      %2473 = vmatpush1.msra.mxu0 0.0
      %2474 = vmatprep.subr.mxu0 0.0
      %2475 = vmatpush1.msra.mxu0 0.0
      %2476 = vmatprep.subr.mxu0 0.0
      %2477 = vmatpush1.msra.mxu0 0.0
      %2478 = vmatprep.subr.mxu0 0.0
      %2479 = vmatpush1.msra.mxu0 0.0
      %2480 = vmatprep.subr.mxu0 0.0
      %2481 = vmatpush1.msra.mxu0 0.0
      %2482 = vmatprep.subr.mxu0 0.0
      %2483 = vmatpush1.msra.mxu0 0.0
      %2484 = vmatprep.subr.mxu0 0.0
      %2485 = vmatpush1.msra.mxu0 0.0
      %2486 = vmatprep.mubr.f32.mxu0 0.0
      %2487 = vmatmul.mubr.f32.gmra.mrb[0].mxu0 %v2420
      %v2488 = vpop.f32.mrb[0].mxu0
      %v2489 = vadd.f32 %v2418, %v2488
      %v2490 = vpop.f32.mrb[0].mxu0
      %2491 = vdwg.mxu0
      %v2492 = vadd.f32 %v2009, %v2489
      %v2493 = vsel %vm1925, %v2492, 0.0
      %2494 = vadd.xlane.f32.xlu0 %v2493
      %v2495 = vpop.xlane.xlu0 %2494
      %v2496 = vrcp.pop 64.0
      %v2497 = vmul.f32 %v2495, %v2496
      %v2498 = vsub.f32 %v2492, %v2497
      %v2499 = vmul.f32 %v2498, %v2498
      %v2500 = vsel %vm1925, %v2499, 0.0
      %2501 = vadd.xlane.f32.xlu0 %v2500
      %v2502 = vpop.xlane.xlu0 %2501
      %v2503 = vmul.f32 %v2502, %v2496
      %v2504 = vadd.f32 %v2503, 1e-05
      %v2505 = vrsqrt.pop %v2504
      %v2506 = vmul.f32 %v2498, %v2505
      %v2507 = vlaneseq
      %v2508 = vshrl.u32 %v2507, 7
      %v2509 = vsub.s32 1, %v2508
      %v2510 = vrot.slane %v2010, %v2509
      %v2511 = vmul.f32 %v2506, %v2510
      %v2512 = vlaneseq
      %v2513 = vshrl.u32 %v2512, 7
      %v2514 = vsub.s32 2, %v2513
      %v2515 = vrot.slane %v2010, %v2514
      %v2516 = vadd.f32 %v2511, %v2515
      %v2517 = vld [vmem:[%s14] sm:$0xff]
      %v2518 = vld [vmem:[%s14 + $0x8] sm:$0xff]
      %v2519 = vld [vmem:[%s14 + $0x10] sm:$0xff]
      %v2520 = vld [vmem:[%s14 + $0x18] sm:$0xff]
      %v2521 = vld [vmem:[%s14 + $0x20] sm:$0xff]
      %v2522 = vld [vmem:[%s14 + $0x28] sm:$0xff]
      %v2523 = vld [vmem:[%s14 + $0x30] sm:$0xff]
      %v2524 = vld [vmem:[%s14 + $0x38] sm:$0xff]
      %v2525 = vlaneseq
      %v2526 = vshrl.u32 %v2525, 7
      %v2527 = vsub.s32 3, %v2526
      %v2528 = vrot.slane %v2010, %v2527
      %v2530 = vsel %vm1925, %v2516, 0
      %2532 = vmatprep.subr.mxu0 0.0
      %2533 = vmatpush1.msra.mxu0 %v2517
      %2534 = vmatprep.subr.mxu0 0.0
      %2535 = vmatpush1.msra.mxu0 %v2518
      %2536 = vmatprep.subr.mxu0 0.0
      %2537 = vmatpush1.msra.mxu0 %v2519
      %2538 = vmatprep.subr.mxu0 0.0
      %2539 = vmatpush1.msra.mxu0 %v2520
      %2540 = vmatprep.subr.mxu0 0.0
      %2541 = vmatpush1.msra.mxu0 %v2521
      %2542 = vmatprep.subr.mxu0 0.0
      %2543 = vmatpush1.msra.mxu0 %v2522
      %2544 = vmatprep.subr.mxu0 0.0
      %2545 = vmatpush1.msra.mxu0 %v2523
      %2546 = vmatprep.subr.mxu0 0.0
      %2547 = vmatpush1.msra.mxu0 %v2524
      %2548 = vmatprep.subr.mxu0 0.0
      %2549 = vmatpush1.msra.mxu0 0.0
      %2550 = vmatprep.subr.mxu0 0.0
      %2551 = vmatpush1.msra.mxu0 0.0
      %2552 = vmatprep.subr.mxu0 0.0
      %2553 = vmatpush1.msra.mxu0 0.0
      %2554 = vmatprep.subr.mxu0 0.0
      %2555 = vmatpush1.msra.mxu0 0.0
      %2556 = vmatprep.subr.mxu0 0.0
      %2557 = vmatpush1.msra.mxu0 0.0
      %2558 = vmatprep.subr.mxu0 0.0
      %2559 = vmatpush1.msra.mxu0 0.0
      %2560 = vmatprep.subr.mxu0 0.0
      %2561 = vmatpush1.msra.mxu0 0.0
      %2562 = vmatprep.subr.mxu0 0.0
      %2563 = vmatpush1.msra.mxu0 0.0
      %2564 = vmatprep.subr.mxu0 0.0
      %2565 = vmatpush1.msra.mxu0 0.0
      %2566 = vmatprep.subr.mxu0 0.0
      %2567 = vmatpush1.msra.mxu0 0.0
      %2568 = vmatprep.subr.mxu0 0.0
      %2569 = vmatpush1.msra.mxu0 0.0
      %2570 = vmatprep.subr.mxu0 0.0
      %2571 = vmatpush1.msra.mxu0 0.0
      %2572 = vmatprep.subr.mxu0 0.0
      %2573 = vmatpush1.msra.mxu0 0.0
      %2574 = vmatprep.subr.mxu0 0.0
      %2575 = vmatpush1.msra.mxu0 0.0
      %2576 = vmatprep.subr.mxu0 0.0
      %2577 = vmatpush1.msra.mxu0 0.0
      %2578 = vmatprep.subr.mxu0 0.0
      %2579 = vmatpush1.msra.mxu0 0.0
      %2580 = vmatprep.subr.mxu0 0.0
      %2581 = vmatpush1.msra.mxu0 0.0
      %2582 = vmatprep.subr.mxu0 0.0
      %2583 = vmatpush1.msra.mxu0 0.0
      %2584 = vmatprep.subr.mxu0 0.0
      %2585 = vmatpush1.msra.mxu0 0.0
      %2586 = vmatprep.subr.mxu0 0.0
      %2587 = vmatpush1.msra.mxu0 0.0
      %2588 = vmatprep.subr.mxu0 0.0
      %2589 = vmatpush1.msra.mxu0 0.0
      %2590 = vmatprep.subr.mxu0 0.0
      %2591 = vmatpush1.msra.mxu0 0.0
      %2592 = vmatprep.subr.mxu0 0.0
      %2593 = vmatpush1.msra.mxu0 0.0
      %2594 = vmatprep.subr.mxu0 0.0
      %2595 = vmatpush1.msra.mxu0 0.0
      %2596 = vmatprep.mubr.f32.mxu0 0.0
      %2597 = vmatmul.mubr.f32.gmra.mrb[0].mxu0 %v2530
      %v2598 = vpop.f32.mrb[0].mxu0
      %v2599 = vadd.f32 %v2528, %v2598
      %v2600 = vpop.f32.mrb[0].mxu0
      %2601 = vdwg.mxu0
      %2603 = vrot.lane.b32.xlu0 %v2599, 112
      %v2604 = vpop.permute.xlu0 %2603
      %2605 = vrot.lane.b32.xlu0 %v2599, 96
      %v2606 = vpop.permute.xlu0 %2605
      %2607 = vrot.lane.b32.xlu0 %v2599, 80
      %v2608 = vpop.permute.xlu0 %2607
      %2611 = vrot.lane.b32.xlu0 %v1999, 112
      %v2612 = vpop.permute.xlu0 %2611
      %2613 = vrot.lane.b32.xlu0 %v2005, 112
      %v2614 = vpop.permute.xlu0 %2613
      %2615 = vrot.lane.b32.xlu0 %v1999, 96
      %v2616 = vpop.permute.xlu0 %2615
      %2617 = vrot.lane.b32.xlu0 %v2005, 96
      %v2618 = vpop.permute.xlu0 %2617
      %2619 = vrot.lane.b32.xlu0 %v1999, 80
      %v2620 = vpop.permute.xlu0 %2619
      %2621 = vrot.lane.b32.xlu0 %v2005, 80
      %v2622 = vpop.permute.xlu0 %2621
      %v2623 = vsel %vm2139, %v2599, 0
      %v2625 = vsel %vm2139, %v2604, 0
      %v2627 = vsel %vm2139, %v2606, 0
      %v2629 = vsel %vm2139, %v2608, 0
      %v2631 = vsel %vm2139, %v1999, 0
      %v2633 = vsel %vm2139, %v2005, 0
      %v2635 = vsel %vm2139, %v2612, 0
      %v2637 = vsel %vm2139, %v2614, 0
      %v2639 = vsel %vm2139, %v2616, 0
      %v2641 = vsel %vm2139, %v2618, 0
      %v2643 = vsel %vm2139, %v2620, 0
      %v2645 = vsel %vm2139, %v2622, 0
      %2647 = vmatprep.subr.mxu0 0.0
      %2648 = vmatpush1.xpose.msra.mxu0 %v2631
      %2649 = vmatprep.subr.mxu0 0.0
      %2650 = vmatpush1.xpose.msra.mxu0 %v2633
      %2651 = vmatprep.subr.mxu0 0.0
      %2652 = vmatpush1.xpose.msra.mxu0 %v2635
      %2653 = vmatprep.subr.mxu0 0.0
      %2654 = vmatpush1.xpose.msra.mxu0 %v2637
      %2655 = vmatprep.subr.mxu0 0.0
      %2656 = vmatpush1.xpose.msra.mxu0 %v2639
      %2657 = vmatprep.subr.mxu0 0.0
      %2658 = vmatpush1.xpose.msra.mxu0 %v2641
      %2659 = vmatprep.subr.mxu0 0.0
      %2660 = vmatpush1.xpose.msra.mxu0 %v2643
      %2661 = vmatprep.subr.mxu0 0.0
      %2662 = vmatpush1.xpose.msra.mxu0 %v2645
      %2663 = vmatprep.subr.mxu0 0.0
      %2664 = vmatpush1.xpose.msra.mxu0 0.0
      %2665 = vmatprep.subr.mxu0 0.0
      %2666 = vmatpush1.xpose.msra.mxu0 0.0
      %2667 = vmatprep.subr.mxu0 0.0
      %2668 = vmatpush1.xpose.msra.mxu0 0.0
      %2669 = vmatprep.subr.mxu0 0.0
      %2670 = vmatpush1.xpose.msra.mxu0 0.0
      %2671 = vmatprep.subr.mxu0 0.0
      %2672 = vmatpush1.xpose.msra.mxu0 0.0
      %2673 = vmatprep.subr.mxu0 0.0
      %2674 = vmatpush1.xpose.msra.mxu0 0.0
      %2675 = vmatprep.subr.mxu0 0.0
      %2676 = vmatpush1.xpose.msra.mxu0 0.0
      %2677 = vmatprep.subr.mxu0 0.0
      %2678 = vmatpush1.xpose.msra.mxu0 0.0
      %2679 = vmatprep.subr.mxu0 0.0
      %2680 = vmatpush1.xpose.msra.mxu0 0.0
      %2681 = vmatprep.subr.mxu0 0.0
      %2682 = vmatpush1.xpose.msra.mxu0 0.0
      %2683 = vmatprep.subr.mxu0 0.0
      %2684 = vmatpush1.xpose.msra.mxu0 0.0
      %2685 = vmatprep.subr.mxu0 0.0
      %2686 = vmatpush1.xpose.msra.mxu0 0.0
      %2687 = vmatprep.subr.mxu0 0.0
      %2688 = vmatpush1.xpose.msra.mxu0 0.0
      %2689 = vmatprep.subr.mxu0 0.0
      %2690 = vmatpush1.xpose.msra.mxu0 0.0
      %2691 = vmatprep.subr.mxu0 0.0
      %2692 = vmatpush1.xpose.msra.mxu0 0.0
      %2693 = vmatprep.subr.mxu0 0.0
      %2694 = vmatpush1.xpose.msra.mxu0 0.0
      %2695 = vmatprep.subr.mxu0 0.0
      %2696 = vmatpush1.xpose.msra.mxu0 0.0
      %2697 = vmatprep.subr.mxu0 0.0
      %2698 = vmatpush1.xpose.msra.mxu0 0.0
      %2699 = vmatprep.subr.mxu0 0.0
      %2700 = vmatpush1.xpose.msra.mxu0 0.0
      %2701 = vmatprep.subr.mxu0 0.0
      %2702 = vmatpush1.xpose.msra.mxu0 0.0
      %2703 = vmatprep.subr.mxu0 0.0
      %2704 = vmatpush1.xpose.msra.mxu0 0.0
      %2705 = vmatprep.subr.mxu0 0.0
      %2706 = vmatpush1.xpose.msra.mxu0 0.0
      %2707 = vmatprep.subr.mxu0 0.0
      %2708 = vmatpush1.xpose.msra.mxu0 0.0
      %2709 = vmatprep.subr.mxu0 0.0
      %2710 = vmatpush1.xpose.msra.mxu0 0.0
      %2711 = vmatprep.mubr.f32.mxu0 0.0
      %2712 = vmatmul.mubr.f32.gmra.mrb[0].mxu0 %v2623
      %v2713 = vpop.f32.mrb[0].mxu0
      %v2714 = vadd.f32 0.0, %v2713
      %v2715 = vpop.f32.mrb[0].mxu0
      %2716 = vmatprep.mubr.f32.mxu0 0.0
      %2717 = vmatmul.mubr.f32.gmra.mrb[0].mxu0 %v2625
      %v2718 = vpop.f32.mrb[0].mxu0
      %v2719 = vadd.f32 0.0, %v2718
      %v2720 = vpop.f32.mrb[0].mxu0
      %2721 = vmatprep.mubr.f32.mxu0 0.0
      %2722 = vmatmul.mubr.f32.gmra.mrb[0].mxu0 %v2627
      %v2723 = vpop.f32.mrb[0].mxu0
      %v2724 = vadd.f32 0.0, %v2723
      %v2725 = vpop.f32.mrb[0].mxu0
      %2726 = vmatprep.mubr.f32.mxu0 0.0
      %2727 = vmatmul.mubr.f32.gmra.mrb[0].mxu0 %v2629
      %v2728 = vpop.f32.mrb[0].mxu0
      %v2729 = vadd.f32 0.0, %v2728
      %v2730 = vpop.f32.mrb[0].mxu0
      %2731 = vdwg.mxu0
      %v2732 = vmul.f32 %v2714, 0.25
      %v2733 = vmul.f32 %v2719, 0.25
      %v2734 = vmul.f32 %v2724, 0.25
      %v2735 = vmul.f32 %v2729, 0.25
      %v2736 = vadd.f32 %v2732, %v819
      %v2737 = vadd.f32 %v2733, %v820
      %v2738 = vadd.f32 %v2734, %v821
      %v2739 = vadd.f32 %v2735, %v822
      %v2740 = vsel %vm1925, %v2736, -inf
      %2741 = vmax.xlane.f32.xlu0 %v2740
      %v2742 = vpop.xlane.xlu0 %2741
      %v2743 = vsel %vm1925, %v2737, -inf
      %2744 = vmax.xlane.f32.xlu0 %v2743
      %v2745 = vpop.xlane.xlu0 %2744
      %v2746 = vsel %vm1925, %v2738, -inf
      %2747 = vmax.xlane.f32.xlu0 %v2746
      %v2748 = vpop.xlane.xlu0 %2747
      %v2749 = vsel %vm1925, %v2739, -inf
      %2750 = vmax.xlane.f32.xlu0 %v2749
      %v2751 = vpop.xlane.xlu0 %2750
      %v2752 = vsub.f32 %v2736, %v2742
      %v2753 = vsub.f32 %v2737, %v2745
      %v2754 = vsub.f32 %v2738, %v2748
      %v2755 = vsub.f32 %v2739, %v2751
      %v2756 = vmul.f32 %v2752, 1.442695
      %v2757 = vpow.pop %v2756
      %v2758 = vmul.f32 %v2753, 1.442695
      %v2759 = vpow.pop %v2758
      %v2760 = vmul.f32 %v2754, 1.442695
      %v2761 = vpow.pop %v2760
      %v2762 = vmul.f32 %v2755, 1.442695
      %v2763 = vpow.pop %v2762
      %v2764 = vsel %vm1925, %v2757, 0.0
      %2765 = vadd.xlane.f32.xlu0 %v2764
      %v2766 = vpop.xlane.xlu0 %2765
      %v2767 = vsel %vm1925, %v2759, 0.0
      %2768 = vadd.xlane.f32.xlu0 %v2767
      %v2769 = vpop.xlane.xlu0 %2768
      %v2770 = vsel %vm1925, %v2761, 0.0
      %2771 = vadd.xlane.f32.xlu0 %v2770
      %v2772 = vpop.xlane.xlu0 %2771
      %v2773 = vsel %vm1925, %v2763, 0.0
      %2774 = vadd.xlane.f32.xlu0 %v2773
      %v2775 = vpop.xlane.xlu0 %2774
      %v2776 = vrcp.pop %v2766
      %v2777 = vmul.f32 %v2757, %v2776
      %v2778 = vrcp.pop %v2769
      %v2779 = vmul.f32 %v2759, %v2778
      %v2780 = vrcp.pop %v2772
      %v2781 = vmul.f32 %v2761, %v2780
      %v2782 = vrcp.pop %v2775
      %v2783 = vmul.f32 %v2763, %v2782
      %2784 = vrot.lane.b32.xlu0 %v1999, 64
      %v2785 = vpop.permute.xlu0 %2784
      %2786 = vrot.lane.b32.xlu0 %v2005, 64
      %v2787 = vpop.permute.xlu0 %2786
      %2788 = vrot.lane.b32.xlu0 %v2612, 64
      %v2789 = vpop.permute.xlu0 %2788
      %2790 = vrot.lane.b32.xlu0 %v2614, 64
      %v2791 = vpop.permute.xlu0 %2790
      %2792 = vrot.lane.b32.xlu0 %v2616, 64
      %v2793 = vpop.permute.xlu0 %2792
      %2794 = vrot.lane.b32.xlu0 %v2618, 64
      %v2795 = vpop.permute.xlu0 %2794
      %2796 = vrot.lane.b32.xlu0 %v2620, 64
      %v2797 = vpop.permute.xlu0 %2796
      %2798 = vrot.lane.b32.xlu0 %v2622, 64
      %v2799 = vpop.permute.xlu0 %2798
      %v2809 = vsel %vm1925, %v2777, 0
      %v2812 = vsel %vm1925, %v2779, 0
      %v2815 = vsel %vm1925, %v2781, 0
      %v2818 = vsel %vm1925, %v2783, 0
      %2820 = vmatprep.subr.mxu0 0.0
      %2821 = vmatpush1.msra.mxu0 %v2785
      %2822 = vmatprep.subr.mxu0 0.0
      %2823 = vmatpush1.msra.mxu0 %v2787
      %2824 = vmatprep.subr.mxu0 0.0
      %2825 = vmatpush1.msra.mxu0 %v2789
      %2826 = vmatprep.subr.mxu0 0.0
      %2827 = vmatpush1.msra.mxu0 %v2791
      %2828 = vmatprep.subr.mxu0 0.0
      %2829 = vmatpush1.msra.mxu0 %v2793
      %2830 = vmatprep.subr.mxu0 0.0
      %2831 = vmatpush1.msra.mxu0 %v2795
      %2832 = vmatprep.subr.mxu0 0.0
      %2833 = vmatpush1.msra.mxu0 %v2797
      %2834 = vmatprep.subr.mxu0 0.0
      %2835 = vmatpush1.msra.mxu0 %v2799
      %2836 = vmatprep.subr.mxu0 0.0
      %2837 = vmatpush1.msra.mxu0 0.0
      %2838 = vmatprep.subr.mxu0 0.0
      %2839 = vmatpush1.msra.mxu0 0.0
      %2840 = vmatprep.subr.mxu0 0.0
      %2841 = vmatpush1.msra.mxu0 0.0
      %2842 = vmatprep.subr.mxu0 0.0
      %2843 = vmatpush1.msra.mxu0 0.0
      %2844 = vmatprep.subr.mxu0 0.0
      %2845 = vmatpush1.msra.mxu0 0.0
      %2846 = vmatprep.subr.mxu0 0.0
      %2847 = vmatpush1.msra.mxu0 0.0
      %2848 = vmatprep.subr.mxu0 0.0
      %2849 = vmatpush1.msra.mxu0 0.0
      %2850 = vmatprep.subr.mxu0 0.0
      %2851 = vmatpush1.msra.mxu0 0.0
      %2852 = vmatprep.subr.mxu0 0.0
      %2853 = vmatpush1.msra.mxu0 0.0
      %2854 = vmatprep.subr.mxu0 0.0
      %2855 = vmatpush1.msra.mxu0 0.0
      %2856 = vmatprep.subr.mxu0 0.0
      %2857 = vmatpush1.msra.mxu0 0.0
      %2858 = vmatprep.subr.mxu0 0.0
      %2859 = vmatpush1.msra.mxu0 0.0
      %2860 = vmatprep.subr.mxu0 0.0
      %2861 = vmatpush1.msra.mxu0 0.0
      %2862 = vmatprep.subr.mxu0 0.0
      %2863 = vmatpush1.msra.mxu0 0.0
      %2864 = vmatprep.subr.mxu0 0.0
      %2865 = vmatpush1.msra.mxu0 0.0
      %2866 = vmatprep.subr.mxu0 0.0
      %2867 = vmatpush1.msra.mxu0 0.0
      %2868 = vmatprep.subr.mxu0 0.0
      %2869 = vmatpush1.msra.mxu0 0.0
      %2870 = vmatprep.subr.mxu0 0.0
      %2871 = vmatpush1.msra.mxu0 0.0
      %2872 = vmatprep.subr.mxu0 0.0
      %2873 = vmatpush1.msra.mxu0 0.0
      %2874 = vmatprep.subr.mxu0 0.0
      %2875 = vmatpush1.msra.mxu0 0.0
      %2876 = vmatprep.subr.mxu0 0.0
      %2877 = vmatpush1.msra.mxu0 0.0
      %2878 = vmatprep.subr.mxu0 0.0
      %2879 = vmatpush1.msra.mxu0 0.0
      %2880 = vmatprep.subr.mxu0 0.0
      %2881 = vmatpush1.msra.mxu0 0.0
      %2882 = vmatprep.subr.mxu0 0.0
      %2883 = vmatpush1.msra.mxu0 0.0
      %2884 = vmatprep.mubr.f32.mxu0 0.0
      %2885 = vmatmul.mubr.f32.gmra.mrb[0].mxu0 %v2809
      %v2886 = vpop.f32.mrb[0].mxu0
      %v2887 = vadd.f32 0.0, %v2886
      %v2888 = vpop.f32.mrb[0].mxu0
      %2889 = vmatprep.mubr.f32.mxu0 0.0
      %2890 = vmatmul.mubr.f32.gmra.mrb[0].mxu0 %v2812
      %v2891 = vpop.f32.mrb[0].mxu0
      %v2892 = vadd.f32 0.0, %v2891
      %v2893 = vpop.f32.mrb[0].mxu0
      %2894 = vmatprep.mubr.f32.mxu0 0.0
      %2895 = vmatmul.mubr.f32.gmra.mrb[0].mxu0 %v2815
      %v2896 = vpop.f32.mrb[0].mxu0
      %v2897 = vadd.f32 0.0, %v2896
      %v2898 = vpop.f32.mrb[0].mxu0
      %2899 = vmatprep.mubr.f32.mxu0 0.0
      %2900 = vmatmul.mubr.f32.gmra.mrb[0].mxu0 %v2818
      %v2901 = vpop.f32.mrb[0].mxu0
      %v2902 = vadd.f32 0.0, %v2901
      %v2903 = vpop.f32.mrb[0].mxu0
      %2904 = vdwg.mxu0
      %2906 = vrot.lane.b32.xlu0 %v2892, 16
      %v2907 = vpop.permute.xlu0 %2906
      %2910 = vrot.lane.b32.xlu0 %v2897, 32
      %v2911 = vpop.permute.xlu0 %2910
      %2914 = vrot.lane.b32.xlu0 %v2902, 48
      %v2915 = vpop.permute.xlu0 %2914
      %v2917 = vsel %vm2139, %v2887, %v2907
      %v2918 = vsel %vm2249, %v2917, %v2911
      %v2919 = vsel %vm2405, %v2918, %v2915
      %v2920 = vld [vmem:[%s17] sm:$0xff]
      %v2921 = vld [vmem:[%s17 + $0x8] sm:$0xff]
      %v2922 = vld [vmem:[%s17 + $0x10] sm:$0xff]
      %v2923 = vld [vmem:[%s17 + $0x18] sm:$0xff]
      %v2924 = vld [vmem:[%s17 + $0x20] sm:$0xff]
      %v2925 = vld [vmem:[%s17 + $0x28] sm:$0xff]
      %v2926 = vld [vmem:[%s17 + $0x30] sm:$0xff]
      %v2927 = vld [vmem:[%s17 + $0x38] sm:$0xff]
      %v2928 = vlaneseq
      %v2929 = vshrl.u32 %v2928, 7
      %v2930 = vsub.s32 4, %v2929
      %v2931 = vrot.slane %v2010, %v2930
      %v2933 = vsel %vm1925, %v2919, 0
      %2935 = vmatprep.subr.mxu0 0.0
      %2936 = vmatpush1.msra.mxu0 %v2920
      %2937 = vmatprep.subr.mxu0 0.0
      %2938 = vmatpush1.msra.mxu0 %v2921
      %2939 = vmatprep.subr.mxu0 0.0
      %2940 = vmatpush1.msra.mxu0 %v2922
      %2941 = vmatprep.subr.mxu0 0.0
      %2942 = vmatpush1.msra.mxu0 %v2923
      %2943 = vmatprep.subr.mxu0 0.0
      %2944 = vmatpush1.msra.mxu0 %v2924
      %2945 = vmatprep.subr.mxu0 0.0
      %2946 = vmatpush1.msra.mxu0 %v2925
      %2947 = vmatprep.subr.mxu0 0.0
      %2948 = vmatpush1.msra.mxu0 %v2926
      %2949 = vmatprep.subr.mxu0 0.0
      %2950 = vmatpush1.msra.mxu0 %v2927
      %2951 = vmatprep.subr.mxu0 0.0
      %2952 = vmatpush1.msra.mxu0 0.0
      %2953 = vmatprep.subr.mxu0 0.0
      %2954 = vmatpush1.msra.mxu0 0.0
      %2955 = vmatprep.subr.mxu0 0.0
      %2956 = vmatpush1.msra.mxu0 0.0
      %2957 = vmatprep.subr.mxu0 0.0
      %2958 = vmatpush1.msra.mxu0 0.0
      %2959 = vmatprep.subr.mxu0 0.0
      %2960 = vmatpush1.msra.mxu0 0.0
      %2961 = vmatprep.subr.mxu0 0.0
      %2962 = vmatpush1.msra.mxu0 0.0
      %2963 = vmatprep.subr.mxu0 0.0
      %2964 = vmatpush1.msra.mxu0 0.0
      %2965 = vmatprep.subr.mxu0 0.0
      %2966 = vmatpush1.msra.mxu0 0.0
      %2967 = vmatprep.subr.mxu0 0.0
      %2968 = vmatpush1.msra.mxu0 0.0
      %2969 = vmatprep.subr.mxu0 0.0
      %2970 = vmatpush1.msra.mxu0 0.0
      %2971 = vmatprep.subr.mxu0 0.0
      %2972 = vmatpush1.msra.mxu0 0.0
      %2973 = vmatprep.subr.mxu0 0.0
      %2974 = vmatpush1.msra.mxu0 0.0
      %2975 = vmatprep.subr.mxu0 0.0
      %2976 = vmatpush1.msra.mxu0 0.0
      %2977 = vmatprep.subr.mxu0 0.0
      %2978 = vmatpush1.msra.mxu0 0.0
      %2979 = vmatprep.subr.mxu0 0.0
      %2980 = vmatpush1.msra.mxu0 0.0
      %2981 = vmatprep.subr.mxu0 0.0
      %2982 = vmatpush1.msra.mxu0 0.0
      %2983 = vmatprep.subr.mxu0 0.0
      %2984 = vmatpush1.msra.mxu0 0.0
      %2985 = vmatprep.subr.mxu0 0.0
      %2986 = vmatpush1.msra.mxu0 0.0
      %2987 = vmatprep.subr.mxu0 0.0
      %2988 = vmatpush1.msra.mxu0 0.0
      %2989 = vmatprep.subr.mxu0 0.0
      %2990 = vmatpush1.msra.mxu0 0.0
      %2991 = vmatprep.subr.mxu0 0.0
      %2992 = vmatpush1.msra.mxu0 0.0
      %2993 = vmatprep.subr.mxu0 0.0
      %2994 = vmatpush1.msra.mxu0 0.0
      %2995 = vmatprep.subr.mxu0 0.0
      %2996 = vmatpush1.msra.mxu0 0.0
      %2997 = vmatprep.subr.mxu0 0.0
      %2998 = vmatpush1.msra.mxu0 0.0
      %2999 = vmatprep.mubr.f32.mxu0 0.0
      %3000 = vmatmul.mubr.f32.gmra.mrb[0].mxu0 %v2933
      %v3001 = vpop.f32.mrb[0].mxu0
      %v3002 = vadd.f32 %v2931, %v3001
      %v3003 = vpop.f32.mrb[0].mxu0
      %3004 = vdwg.mxu0
      %v3005 = vadd.f32 %v2516, %v3002
      %v3006 = vsel %vm1925, %v3005, 0.0
      %3007 = vadd.xlane.f32.xlu0 %v3006
      %v3008 = vpop.xlane.xlu0 %3007
      %v3009 = vmul.f32 %v3008, %v2496
      %v3010 = vsub.f32 %v3005, %v3009
      %v3011 = vmul.f32 %v3010, %v3010
      %v3012 = vsel %vm1925, %v3011, 0.0
      %3013 = vadd.xlane.f32.xlu0 %v3012
      %v3014 = vpop.xlane.xlu0 %3013
      %v3015 = vmul.f32 %v3014, %v2496
      %v3016 = vadd.f32 %v3015, 1e-05
      %v3017 = vrsqrt.pop %v3016
      %v3018 = vmul.f32 %v3010, %v3017
      %v3019 = vlaneseq
      %v3020 = vshrl.u32 %v3019, 7
      %v3021 = vsub.s32 5, %v3020
      %v3022 = vrot.slane %v2010, %v3021
      %v3023 = vmul.f32 %v3018, %v3022
      %v3024 = vlaneseq
      %v3025 = vshrl.u32 %v3024, 7
      %v3026 = vsub.s32 6, %v3025
      %v3027 = vrot.slane %v2010, %v3026
      %v3028 = vadd.f32 %v3023, %v3027
      %v3029 = vld [vmem:[%s18] sm:$0xff]
      %v3030 = vld [vmem:[%s18 + $0x8] sm:$0xff]
      %v3031 = vld [vmem:[%s18 + $0x10] sm:$0xff]
      %v3032 = vld [vmem:[%s18 + $0x18] sm:$0xff]
      %v3033 = vld [vmem:[%s18 + $0x20] sm:$0xff]
      %v3034 = vld [vmem:[%s18 + $0x28] sm:$0xff]
      %v3035 = vld [vmem:[%s18 + $0x30] sm:$0xff]
      %v3036 = vld [vmem:[%s18 + $0x38] sm:$0xff]
      %v3037 = vld [vmem:[%s19] sm:$0x1]
      %v3039 = vlaneseq
      %v3040 = vshrl.u32 %v3039, 7
      %v3041 = vsub.s32 0, %v3040
      %v3042 = vrot.slane %v3037, %v3041
      %v3045 = vsel %vm1925, %v3028, 0
      %3047 = vmatprep.subr.mxu0 0.0
      %3048 = vmatpush1.msra.mxu0 %v3029
      %3049 = vmatprep.subr.mxu0 0.0
      %3050 = vmatpush1.msra.mxu0 %v3030
      %3051 = vmatprep.subr.mxu0 0.0
      %3052 = vmatpush1.msra.mxu0 %v3031
      %3053 = vmatprep.subr.mxu0 0.0
      %3054 = vmatpush1.msra.mxu0 %v3032
      %3055 = vmatprep.subr.mxu0 0.0
      %3056 = vmatpush1.msra.mxu0 %v3033
      %3057 = vmatprep.subr.mxu0 0.0
      %3058 = vmatpush1.msra.mxu0 %v3034
      %3059 = vmatprep.subr.mxu0 0.0
      %3060 = vmatpush1.msra.mxu0 %v3035
      %3061 = vmatprep.subr.mxu0 0.0
      %3062 = vmatpush1.msra.mxu0 %v3036
      %3063 = vmatprep.subr.mxu0 0.0
      %3064 = vmatpush1.msra.mxu0 0.0
      %3065 = vmatprep.subr.mxu0 0.0
      %3066 = vmatpush1.msra.mxu0 0.0
      %3067 = vmatprep.subr.mxu0 0.0
      %3068 = vmatpush1.msra.mxu0 0.0
      %3069 = vmatprep.subr.mxu0 0.0
      %3070 = vmatpush1.msra.mxu0 0.0
      %3071 = vmatprep.subr.mxu0 0.0
      %3072 = vmatpush1.msra.mxu0 0.0
      %3073 = vmatprep.subr.mxu0 0.0
      %3074 = vmatpush1.msra.mxu0 0.0
      %3075 = vmatprep.subr.mxu0 0.0
      %3076 = vmatpush1.msra.mxu0 0.0
      %3077 = vmatprep.subr.mxu0 0.0
      %3078 = vmatpush1.msra.mxu0 0.0
      %3079 = vmatprep.subr.mxu0 0.0
      %3080 = vmatpush1.msra.mxu0 0.0
      %3081 = vmatprep.subr.mxu0 0.0
      %3082 = vmatpush1.msra.mxu0 0.0
      %3083 = vmatprep.subr.mxu0 0.0
      %3084 = vmatpush1.msra.mxu0 0.0
      %3085 = vmatprep.subr.mxu0 0.0
      %3086 = vmatpush1.msra.mxu0 0.0
      %3087 = vmatprep.subr.mxu0 0.0
      %3088 = vmatpush1.msra.mxu0 0.0
      %3089 = vmatprep.subr.mxu0 0.0
      %3090 = vmatpush1.msra.mxu0 0.0
      %3091 = vmatprep.subr.mxu0 0.0
      %3092 = vmatpush1.msra.mxu0 0.0
      %3093 = vmatprep.subr.mxu0 0.0
      %3094 = vmatpush1.msra.mxu0 0.0
      %3095 = vmatprep.subr.mxu0 0.0
      %3096 = vmatpush1.msra.mxu0 0.0
      %3097 = vmatprep.subr.mxu0 0.0
      %3098 = vmatpush1.msra.mxu0 0.0
      %3099 = vmatprep.subr.mxu0 0.0
      %3100 = vmatpush1.msra.mxu0 0.0
      %3101 = vmatprep.subr.mxu0 0.0
      %3102 = vmatpush1.msra.mxu0 0.0
      %3103 = vmatprep.subr.mxu0 0.0
      %3104 = vmatpush1.msra.mxu0 0.0
      %3105 = vmatprep.subr.mxu0 0.0
      %3106 = vmatpush1.msra.mxu0 0.0
      %3107 = vmatprep.subr.mxu0 0.0
      %3108 = vmatpush1.msra.mxu0 0.0
      %3109 = vmatprep.subr.mxu0 0.0
      %3110 = vmatpush1.msra.mxu0 0.0
      %3111 = vmatprep.mubr.f32.mxu0 0.0
      %3112 = vmatmul.mubr.f32.gmra.mrb[0].mxu0 %v3045
      %v3113 = vpop.f32.mrb[0].mxu0
      %v3114 = vadd.f32 %v3042, %v3113
      %v3115 = vpop.f32.mrb[0].mxu0
      %3116 = vdwg.mxu0
      %v3117 = vmax.f32 %v3114, 0.0
      %v3118 = vld [vmem:[%s20] sm:$0xff]
      %v3119 = vld [vmem:[%s20 + $0x8] sm:$0xff]
      %v3120 = vld [vmem:[%s20 + $0x10] sm:$0xff]
      %v3121 = vld [vmem:[%s20 + $0x18] sm:$0xff]
      %v3122 = vld [vmem:[%s20 + $0x20] sm:$0xff]
      %v3123 = vld [vmem:[%s20 + $0x28] sm:$0xff]
      %v3124 = vld [vmem:[%s20 + $0x30] sm:$0xff]
      %v3125 = vld [vmem:[%s20 + $0x38] sm:$0xff]
      %v3126 = vld [vmem:[%s20 + $0x40] sm:$0xff]
      %v3127 = vld [vmem:[%s20 + $0x48] sm:$0xff]
      %v3128 = vld [vmem:[%s20 + $0x50] sm:$0xff]
      %v3129 = vld [vmem:[%s20 + $0x58] sm:$0xff]
      %v3130 = vld [vmem:[%s20 + $0x60] sm:$0xff]
      %v3131 = vld [vmem:[%s20 + $0x68] sm:$0xff]
      %v3132 = vld [vmem:[%s20 + $0x70] sm:$0xff]
      %v3133 = vld [vmem:[%s20 + $0x78] sm:$0xff]
      %v3134 = vlaneseq
      %v3135 = vshrl.u32 %v3134, 7
      %v3136 = vsub.s32 7, %v3135
      %v3137 = vrot.slane %v2010, %v3136
      %3138 = vmatprep.subr.mxu0 0.0
      %3139 = vmatpush1.msra.mxu0 %v3118
      %3140 = vmatprep.subr.mxu0 0.0
      %3141 = vmatpush1.msra.mxu0 %v3119
      %3142 = vmatprep.subr.mxu0 0.0
      %3143 = vmatpush1.msra.mxu0 %v3120
      %3144 = vmatprep.subr.mxu0 0.0
      %3145 = vmatpush1.msra.mxu0 %v3121
      %3146 = vmatprep.subr.mxu0 0.0
      %3147 = vmatpush1.msra.mxu0 %v3122
      %3148 = vmatprep.subr.mxu0 0.0
      %3149 = vmatpush1.msra.mxu0 %v3123
      %3150 = vmatprep.subr.mxu0 0.0
      %3151 = vmatpush1.msra.mxu0 %v3124
      %3152 = vmatprep.subr.mxu0 0.0
      %3153 = vmatpush1.msra.mxu0 %v3125
      %3154 = vmatprep.subr.mxu0 0.0
      %3155 = vmatpush1.msra.mxu0 %v3126
      %3156 = vmatprep.subr.mxu0 0.0
      %3157 = vmatpush1.msra.mxu0 %v3127
      %3158 = vmatprep.subr.mxu0 0.0
      %3159 = vmatpush1.msra.mxu0 %v3128
      %3160 = vmatprep.subr.mxu0 0.0
      %3161 = vmatpush1.msra.mxu0 %v3129
      %3162 = vmatprep.subr.mxu0 0.0
      %3163 = vmatpush1.msra.mxu0 %v3130
      %3164 = vmatprep.subr.mxu0 0.0
      %3165 = vmatpush1.msra.mxu0 %v3131
      %3166 = vmatprep.subr.mxu0 0.0
      %3167 = vmatpush1.msra.mxu0 %v3132
      %3168 = vmatprep.subr.mxu0 0.0
      %3169 = vmatpush1.msra.mxu0 %v3133
      %3170 = vmatprep.subr.mxu0 0.0
      %3171 = vmatpush1.msra.mxu0 0.0
      %3172 = vmatprep.subr.mxu0 0.0
      %3173 = vmatpush1.msra.mxu0 0.0
      %3174 = vmatprep.subr.mxu0 0.0
      %3175 = vmatpush1.msra.mxu0 0.0
      %3176 = vmatprep.subr.mxu0 0.0
      %3177 = vmatpush1.msra.mxu0 0.0
      %3178 = vmatprep.subr.mxu0 0.0
      %3179 = vmatpush1.msra.mxu0 0.0
      %3180 = vmatprep.subr.mxu0 0.0
      %3181 = vmatpush1.msra.mxu0 0.0
      %3182 = vmatprep.subr.mxu0 0.0
      %3183 = vmatpush1.msra.mxu0 0.0
      %3184 = vmatprep.subr.mxu0 0.0
      %3185 = vmatpush1.msra.mxu0 0.0
      %3186 = vmatprep.subr.mxu0 0.0
      %3187 = vmatpush1.msra.mxu0 0.0
      %3188 = vmatprep.subr.mxu0 0.0
      %3189 = vmatpush1.msra.mxu0 0.0
      %3190 = vmatprep.subr.mxu0 0.0
      %3191 = vmatpush1.msra.mxu0 0.0
      %3192 = vmatprep.subr.mxu0 0.0
      %3193 = vmatpush1.msra.mxu0 0.0
      %3194 = vmatprep.subr.mxu0 0.0
      %3195 = vmatpush1.msra.mxu0 0.0
      %3196 = vmatprep.subr.mxu0 0.0
      %3197 = vmatpush1.msra.mxu0 0.0
      %3198 = vmatprep.subr.mxu0 0.0
      %3199 = vmatpush1.msra.mxu0 0.0
      %3200 = vmatprep.subr.mxu0 0.0
      %3201 = vmatpush1.msra.mxu0 0.0
      %3202 = vmatprep.mubr.f32.mxu0 0.0
      %3203 = vmatmul.mubr.f32.gmra.mrb[0].mxu0 %v3117
      %v3204 = vpop.f32.mrb[0].mxu0
      %v3205 = vadd.f32 %v3137, %v3204
      %v3206 = vpop.f32.mrb[0].mxu0
      %3207 = vdwg.mxu0
      %v3208 = vadd.f32 %v3028, %v3205
      %v3209 = vsel %vm1925, %v3208, 0.0
      %3210 = vadd.xlane.f32.xlu0 %v3209
      %v3211 = vpop.xlane.xlu0 %3210
      %v3212 = vmul.f32 %v3211, %v2496
      %v3213 = vsub.f32 %v3208, %v3212
      %v3214 = vmul.f32 %v3213, %v3213
      %v3215 = vsel %vm1925, %v3214, 0.0
      %3216 = vadd.xlane.f32.xlu0 %v3215
      %v3217 = vpop.xlane.xlu0 %3216
      %v3218 = vmul.f32 %v3217, %v2496
      %v3219 = vadd.f32 %v3218, 1e-05
      %v3220 = vrsqrt.pop %v3219
      %v3221 = vmul.f32 %v3213, %v3220
      %v3222 = vlaneseq
      %v3223 = vshrl.u32 %v3222, 7
      %v3224 = vsub.s32 0, %v3223
      %v3225 = vrot.slane %v2011, %v3224
      %v3226 = vmul.f32 %v3221, %v3225
      %v3227 = vlaneseq
      %v3228 = vshrl.u32 %v3227, 7
      %v3229 = vsub.s32 1, %v3228
      %v3230 = vrot.slane %v2011, %v3229
      %v3231 = vadd.f32 %v3226, %v3230
      %s3232 = scalar_lea.vmem %s21, 16
      %v3233 = vld [vmem:[%s3232] sm:$0xff]
      %v3234 = vld [vmem:[%s3232 + $0x8] sm:$0xff]
      %s3235 = scalar_lea.vmem %s11, 128
      %v3236 = vld [vmem:[%s3235] sm:$0xff]
      %v3237 = vld [vmem:[%s3235 + $0x8] sm:$0xff]
      %v3238 = vld [vmem:[%s3235 + $0x10] sm:$0xff]
      %v3239 = vld [vmem:[%s3235 + $0x18] sm:$0xff]
      %v3240 = vld [vmem:[%s3235 + $0x20] sm:$0xff]
      %v3241 = vld [vmem:[%s3235 + $0x28] sm:$0xff]
      %v3242 = vld [vmem:[%s3235 + $0x30] sm:$0xff]
      %v3243 = vld [vmem:[%s3235 + $0x38] sm:$0xff]
      %v3244 = vld [vmem:[%s3235 + $0x40] sm:$0xff]
      %v3245 = vld [vmem:[%s3235 + $0x48] sm:$0xff]
      %v3246 = vld [vmem:[%s3235 + $0x50] sm:$0xff]
      %v3247 = vld [vmem:[%s3235 + $0x58] sm:$0xff]
      %v3248 = vld [vmem:[%s3235 + $0x60] sm:$0xff]
      %v3249 = vld [vmem:[%s3235 + $0x68] sm:$0xff]
      %v3250 = vld [vmem:[%s3235 + $0x70] sm:$0xff]
      %v3251 = vld [vmem:[%s3235 + $0x78] sm:$0xff]
      %s3252 = scalar_lea.vmem %s12, 2
      %v3253 = vld [vmem:[%s3252] sm:$0x3]
      %v3255 = vlaneseq
      %v3256 = vshrl.u32 %v3255, 7
      %v3257 = vsub.s32 0, %v3256
      %v3258 = vrot.slane %v3253, %v3257
      %v3259 = vlaneseq
      %v3260 = vshrl.u32 %v3259, 7
      %v3261 = vsub.s32 1, %v3260
      %v3262 = vrot.slane %v3253, %v3261
      %v3266 = vsel %vm1925, %v3231, 0
      %3268 = vmatprep.subr.mxu0 %v3237
      %3269 = vmatpush1.msra.mxu0 %v3236
      %3270 = vmatprep.subr.mxu0 %v3239
      %3271 = vmatpush1.msra.mxu0 %v3238
      %3272 = vmatprep.subr.mxu0 %v3241
      %3273 = vmatpush1.msra.mxu0 %v3240
      %3274 = vmatprep.subr.mxu0 %v3243
      %3275 = vmatpush1.msra.mxu0 %v3242
      %3276 = vmatprep.subr.mxu0 %v3245
      %3277 = vmatpush1.msra.mxu0 %v3244
      %3278 = vmatprep.subr.mxu0 %v3247
      %3279 = vmatpush1.msra.mxu0 %v3246
      %3280 = vmatprep.subr.mxu0 %v3249
      %3281 = vmatpush1.msra.mxu0 %v3248
      %3282 = vmatprep.subr.mxu0 %v3251
      %3283 = vmatpush1.msra.mxu0 %v3250
      %3284 = vmatprep.subr.mxu0 0.0
      %3285 = vmatpush1.msra.mxu0 0.0
      %3286 = vmatprep.subr.mxu0 0.0
      %3287 = vmatpush1.msra.mxu0 0.0
      %3288 = vmatprep.subr.mxu0 0.0
      %3289 = vmatpush1.msra.mxu0 0.0
      %3290 = vmatprep.subr.mxu0 0.0
      %3291 = vmatpush1.msra.mxu0 0.0
      %3292 = vmatprep.subr.mxu0 0.0
      %3293 = vmatpush1.msra.mxu0 0.0
      %3294 = vmatprep.subr.mxu0 0.0
      %3295 = vmatpush1.msra.mxu0 0.0
      %3296 = vmatprep.subr.mxu0 0.0
      %3297 = vmatpush1.msra.mxu0 0.0
      %3298 = vmatprep.subr.mxu0 0.0
      %3299 = vmatpush1.msra.mxu0 0.0
      %3300 = vmatprep.subr.mxu0 0.0
      %3301 = vmatpush1.msra.mxu0 0.0
      %3302 = vmatprep.subr.mxu0 0.0
      %3303 = vmatpush1.msra.mxu0 0.0
      %3304 = vmatprep.subr.mxu0 0.0
      %3305 = vmatpush1.msra.mxu0 0.0
      %3306 = vmatprep.subr.mxu0 0.0
      %3307 = vmatpush1.msra.mxu0 0.0
      %3308 = vmatprep.subr.mxu0 0.0
      %3309 = vmatpush1.msra.mxu0 0.0
      %3310 = vmatprep.subr.mxu0 0.0
      %3311 = vmatpush1.msra.mxu0 0.0
      %3312 = vmatprep.subr.mxu0 0.0
      %3313 = vmatpush1.msra.mxu0 0.0
      %3314 = vmatprep.subr.mxu0 0.0
      %3315 = vmatpush1.msra.mxu0 0.0
      %3316 = vmatprep.subr.mxu0 0.0
      %3317 = vmatpush1.msra.mxu0 0.0
      %3318 = vmatprep.subr.mxu0 0.0
      %3319 = vmatpush1.msra.mxu0 0.0
      %3320 = vmatprep.subr.mxu0 0.0
      %3321 = vmatpush1.msra.mxu0 0.0
      %3322 = vmatprep.subr.mxu0 0.0
      %3323 = vmatpush1.msra.mxu0 0.0
      %3324 = vmatprep.subr.mxu0 0.0
      %3325 = vmatpush1.msra.mxu0 0.0
      %3326 = vmatprep.subr.mxu0 0.0
      %3327 = vmatpush1.msra.mxu0 0.0
      %3328 = vmatprep.subr.mxu0 0.0
      %3329 = vmatpush1.msra.mxu0 0.0
      %3330 = vmatprep.subr.mxu0 0.0
      %3331 = vmatpush1.msra.mxu0 0.0
      %3332 = vmatprep.mubr.f32.mxu0 0.0
      %3333 = vmatmul.mubr.f32.gmra.mrb[0].mxu0 %v3266
      %v3334 = vpop.f32.mrb[0].mxu0
      %v3335 = vadd.f32 %v3258, %v3334
      %v3336 = vpop.f32.mrb[0].mxu0
      %v3337 = vadd.f32 %v3262, %v3336
      %3338 = vdwg.mxu0
      %3340 = vrot.lane.b32.xlu0 %v3335, 112
      %v3341 = vpop.permute.xlu0 %3340
      %3342 = vrot.lane.b32.xlu0 %v3335, 96
      %v3343 = vpop.permute.xlu0 %3342
      %3344 = vrot.lane.b32.xlu0 %v3335, 80
      %v3345 = vpop.permute.xlu0 %3344
      %3347 = vrot.lane.b32.xlu0 %v3337, 112
      %v3348 = vpop.permute.xlu0 %3347
      %3350 = vrot.lane.b32.xlu0 %v3337, 96
      %v3351 = vpop.permute.xlu0 %3350
      %3353 = vrot.lane.b32.xlu0 %v3337, 80
      %v3354 = vpop.permute.xlu0 %3353
      %3356 = vrot.lane.b32.xlu0 %v3335, 64
      %v3357 = vpop.permute.xlu0 %3356
      %3358 = vrot.lane.b32.xlu0 %v3341, 64
      %v3359 = vpop.permute.xlu0 %3358
      %3360 = vrot.lane.b32.xlu0 %v3343, 64
      %v3361 = vpop.permute.xlu0 %3360
      %3362 = vrot.lane.b32.xlu0 %v3345, 64
      %v3363 = vpop.permute.xlu0 %3362
      %v3364 = vsel %vm2139, %v3335, 0
      %v3366 = vsel %vm2139, %v3341, 0
      %v3368 = vsel %vm2139, %v3343, 0
      %v3370 = vsel %vm2139, %v3345, 0
      %v3372 = vsel %vm2139, %v3357, 0
      %v3374 = vsel %vm2139, %v3359, 0
      %v3376 = vsel %vm2139, %v3361, 0
      %v3378 = vsel %vm2139, %v3363, 0
      %3380 = vmatprep.subr.mxu0 0.0
      %3381 = vmatpush1.xpose.msra.mxu0 %v3372
      %3382 = vmatprep.subr.mxu0 0.0
      %3383 = vmatpush1.xpose.msra.mxu0 %v3374
      %3384 = vmatprep.subr.mxu0 0.0
      %3385 = vmatpush1.xpose.msra.mxu0 %v3376
      %3386 = vmatprep.subr.mxu0 0.0
      %3387 = vmatpush1.xpose.msra.mxu0 %v3378
      %3388 = vmatprep.subr.mxu0 0.0
      %3389 = vmatpush1.xpose.msra.mxu0 0.0
      %3390 = vmatprep.subr.mxu0 0.0
      %3391 = vmatpush1.xpose.msra.mxu0 0.0
      %3392 = vmatprep.subr.mxu0 0.0
      %3393 = vmatpush1.xpose.msra.mxu0 0.0
      %3394 = vmatprep.subr.mxu0 0.0
      %3395 = vmatpush1.xpose.msra.mxu0 0.0
      %3396 = vmatprep.subr.mxu0 0.0
      %3397 = vmatpush1.xpose.msra.mxu0 0.0
      %3398 = vmatprep.subr.mxu0 0.0
      %3399 = vmatpush1.xpose.msra.mxu0 0.0
      %3400 = vmatprep.subr.mxu0 0.0
      %3401 = vmatpush1.xpose.msra.mxu0 0.0
      %3402 = vmatprep.subr.mxu0 0.0
      %3403 = vmatpush1.xpose.msra.mxu0 0.0
      %3404 = vmatprep.subr.mxu0 0.0
      %3405 = vmatpush1.xpose.msra.mxu0 0.0
      %3406 = vmatprep.subr.mxu0 0.0
      %3407 = vmatpush1.xpose.msra.mxu0 0.0
      %3408 = vmatprep.subr.mxu0 0.0
      %3409 = vmatpush1.xpose.msra.mxu0 0.0
      %3410 = vmatprep.subr.mxu0 0.0
      %3411 = vmatpush1.xpose.msra.mxu0 0.0
      %3412 = vmatprep.subr.mxu0 0.0
      %3413 = vmatpush1.xpose.msra.mxu0 0.0
      %3414 = vmatprep.subr.mxu0 0.0
      %3415 = vmatpush1.xpose.msra.mxu0 0.0
      %3416 = vmatprep.subr.mxu0 0.0
      %3417 = vmatpush1.xpose.msra.mxu0 0.0
      %3418 = vmatprep.subr.mxu0 0.0
      %3419 = vmatpush1.xpose.msra.mxu0 0.0
      %3420 = vmatprep.subr.mxu0 0.0
      %3421 = vmatpush1.xpose.msra.mxu0 0.0
      %3422 = vmatprep.subr.mxu0 0.0
      %3423 = vmatpush1.xpose.msra.mxu0 0.0
      %3424 = vmatprep.subr.mxu0 0.0
      %3425 = vmatpush1.xpose.msra.mxu0 0.0
      %3426 = vmatprep.subr.mxu0 0.0
      %3427 = vmatpush1.xpose.msra.mxu0 0.0
      %3428 = vmatprep.subr.mxu0 0.0
      %3429 = vmatpush1.xpose.msra.mxu0 0.0
      %3430 = vmatprep.subr.mxu0 0.0
      %3431 = vmatpush1.xpose.msra.mxu0 0.0
      %3432 = vmatprep.subr.mxu0 0.0
      %3433 = vmatpush1.xpose.msra.mxu0 0.0
      %3434 = vmatprep.subr.mxu0 0.0
      %3435 = vmatpush1.xpose.msra.mxu0 0.0
      %3436 = vmatprep.subr.mxu0 0.0
      %3437 = vmatpush1.xpose.msra.mxu0 0.0
      %3438 = vmatprep.subr.mxu0 0.0
      %3439 = vmatpush1.xpose.msra.mxu0 0.0
      %3440 = vmatprep.subr.mxu0 0.0
      %3441 = vmatpush1.xpose.msra.mxu0 0.0
      %3442 = vmatprep.subr.mxu0 0.0
      %3443 = vmatpush1.xpose.msra.mxu0 0.0
      %3444 = vmatprep.mubr.f32.mxu0 0.0
      %3445 = vmatmul.mubr.f32.gmra.mrb[0].mxu0 %v3364
      %v3446 = vpop.f32.mrb[0].mxu0
      %v3447 = vadd.f32 0.0, %v3446
      %v3448 = vpop.f32.mrb[0].mxu0
      %3449 = vmatprep.mubr.f32.mxu0 0.0
      %3450 = vmatmul.mubr.f32.gmra.mrb[0].mxu0 %v3366
      %v3451 = vpop.f32.mrb[0].mxu0
      %v3452 = vadd.f32 0.0, %v3451
      %v3453 = vpop.f32.mrb[0].mxu0
      %3454 = vmatprep.mubr.f32.mxu0 0.0
      %3455 = vmatmul.mubr.f32.gmra.mrb[0].mxu0 %v3368
      %v3456 = vpop.f32.mrb[0].mxu0
      %v3457 = vadd.f32 0.0, %v3456
      %v3458 = vpop.f32.mrb[0].mxu0
      %3459 = vmatprep.mubr.f32.mxu0 0.0
      %3460 = vmatmul.mubr.f32.gmra.mrb[0].mxu0 %v3370
      %v3461 = vpop.f32.mrb[0].mxu0
      %v3462 = vadd.f32 0.0, %v3461
      %v3463 = vpop.f32.mrb[0].mxu0
      %3464 = vdwg.mxu0
      %v3465 = vmul.f32 %v3447, 0.25
      %v3466 = vmul.f32 %v3452, 0.25
      %v3467 = vmul.f32 %v3457, 0.25
      %v3468 = vmul.f32 %v3462, 0.25
      %v3469 = vadd.f32 %v3465, %v811
      %v3470 = vadd.f32 %v3466, %v812
      %v3471 = vadd.f32 %v3467, %v813
      %v3472 = vadd.f32 %v3468, %v814
      %v3473 = vsel %vm2249, %v3469, -inf
      %3474 = vmax.xlane.f32.xlu0 %v3473
      %v3475 = vpop.xlane.xlu0 %3474
      %v3476 = vsel %vm2249, %v3470, -inf
      %3477 = vmax.xlane.f32.xlu0 %v3476
      %v3478 = vpop.xlane.xlu0 %3477
      %v3479 = vsel %vm2249, %v3471, -inf
      %3480 = vmax.xlane.f32.xlu0 %v3479
      %v3481 = vpop.xlane.xlu0 %3480
      %v3482 = vsel %vm2249, %v3472, -inf
      %3483 = vmax.xlane.f32.xlu0 %v3482
      %v3484 = vpop.xlane.xlu0 %3483
      %v3485 = vsub.f32 %v3469, %v3475
      %v3486 = vsub.f32 %v3470, %v3478
      %v3487 = vsub.f32 %v3471, %v3481
      %v3488 = vsub.f32 %v3472, %v3484
      %v3489 = vmul.f32 %v3485, 1.442695
      %v3490 = vpow.pop %v3489
      %v3491 = vmul.f32 %v3486, 1.442695
      %v3492 = vpow.pop %v3491
      %v3493 = vmul.f32 %v3487, 1.442695
      %v3494 = vpow.pop %v3493
      %v3495 = vmul.f32 %v3488, 1.442695
      %v3496 = vpow.pop %v3495
      %v3497 = vsel %vm2249, %v3490, 0.0
      %3498 = vadd.xlane.f32.xlu0 %v3497
      %v3499 = vpop.xlane.xlu0 %3498
      %v3500 = vsel %vm2249, %v3492, 0.0
      %3501 = vadd.xlane.f32.xlu0 %v3500
      %v3502 = vpop.xlane.xlu0 %3501
      %v3503 = vsel %vm2249, %v3494, 0.0
      %3504 = vadd.xlane.f32.xlu0 %v3503
      %v3505 = vpop.xlane.xlu0 %3504
      %v3506 = vsel %vm2249, %v3496, 0.0
      %3507 = vadd.xlane.f32.xlu0 %v3506
      %v3508 = vpop.xlane.xlu0 %3507
      %v3509 = vrcp.pop %v3499
      %v3510 = vmul.f32 %v3490, %v3509
      %v3511 = vrcp.pop %v3502
      %v3512 = vmul.f32 %v3492, %v3511
      %v3513 = vrcp.pop %v3505
      %v3514 = vmul.f32 %v3494, %v3513
      %v3515 = vrcp.pop %v3508
      %v3516 = vmul.f32 %v3496, %v3515
      %v3518 = vsel %vm2249, %v3510, 0
      %v3521 = vsel %vm2249, %v3512, 0
      %v3524 = vsel %vm2249, %v3514, 0
      %v3527 = vsel %vm2249, %v3516, 0
      %3529 = vmatprep.subr.mxu0 0.0
      %3530 = vmatpush1.msra.mxu0 %v3337
      %3531 = vmatprep.subr.mxu0 0.0
      %3532 = vmatpush1.msra.mxu0 %v3348
      %3533 = vmatprep.subr.mxu0 0.0
      %3534 = vmatpush1.msra.mxu0 %v3351
      %3535 = vmatprep.subr.mxu0 0.0
      %3536 = vmatpush1.msra.mxu0 %v3354
      %3537 = vmatprep.subr.mxu0 0.0
      %3538 = vmatpush1.msra.mxu0 0.0
      %3539 = vmatprep.subr.mxu0 0.0
      %3540 = vmatpush1.msra.mxu0 0.0
      %3541 = vmatprep.subr.mxu0 0.0
      %3542 = vmatpush1.msra.mxu0 0.0
      %3543 = vmatprep.subr.mxu0 0.0
      %3544 = vmatpush1.msra.mxu0 0.0
      %3545 = vmatprep.subr.mxu0 0.0
      %3546 = vmatpush1.msra.mxu0 0.0
      %3547 = vmatprep.subr.mxu0 0.0
      %3548 = vmatpush1.msra.mxu0 0.0
      %3549 = vmatprep.subr.mxu0 0.0
      %3550 = vmatpush1.msra.mxu0 0.0
      %3551 = vmatprep.subr.mxu0 0.0
      %3552 = vmatpush1.msra.mxu0 0.0
      %3553 = vmatprep.subr.mxu0 0.0
      %3554 = vmatpush1.msra.mxu0 0.0
      %3555 = vmatprep.subr.mxu0 0.0
      %3556 = vmatpush1.msra.mxu0 0.0
      %3557 = vmatprep.subr.mxu0 0.0
      %3558 = vmatpush1.msra.mxu0 0.0
      %3559 = vmatprep.subr.mxu0 0.0
      %3560 = vmatpush1.msra.mxu0 0.0
      %3561 = vmatprep.subr.mxu0 0.0
      %3562 = vmatpush1.msra.mxu0 0.0
      %3563 = vmatprep.subr.mxu0 0.0
      %3564 = vmatpush1.msra.mxu0 0.0
      %3565 = vmatprep.subr.mxu0 0.0
      %3566 = vmatpush1.msra.mxu0 0.0
      %3567 = vmatprep.subr.mxu0 0.0
      %3568 = vmatpush1.msra.mxu0 0.0
      %3569 = vmatprep.subr.mxu0 0.0
      %3570 = vmatpush1.msra.mxu0 0.0
      %3571 = vmatprep.subr.mxu0 0.0
      %3572 = vmatpush1.msra.mxu0 0.0
      %3573 = vmatprep.subr.mxu0 0.0
      %3574 = vmatpush1.msra.mxu0 0.0
      %3575 = vmatprep.subr.mxu0 0.0
      %3576 = vmatpush1.msra.mxu0 0.0
      %3577 = vmatprep.subr.mxu0 0.0
      %3578 = vmatpush1.msra.mxu0 0.0
      %3579 = vmatprep.subr.mxu0 0.0
      %3580 = vmatpush1.msra.mxu0 0.0
      %3581 = vmatprep.subr.mxu0 0.0
      %3582 = vmatpush1.msra.mxu0 0.0
      %3583 = vmatprep.subr.mxu0 0.0
      %3584 = vmatpush1.msra.mxu0 0.0
      %3585 = vmatprep.subr.mxu0 0.0
      %3586 = vmatpush1.msra.mxu0 0.0
      %3587 = vmatprep.subr.mxu0 0.0
      %3588 = vmatpush1.msra.mxu0 0.0
      %3589 = vmatprep.subr.mxu0 0.0
      %3590 = vmatpush1.msra.mxu0 0.0
      %3591 = vmatprep.subr.mxu0 0.0
      %3592 = vmatpush1.msra.mxu0 0.0
      %3593 = vmatprep.mubr.f32.mxu0 0.0
      %3594 = vmatmul.mubr.f32.gmra.mrb[0].mxu0 %v3518
      %v3595 = vpop.f32.mrb[0].mxu0
      %v3596 = vadd.f32 0.0, %v3595
      %v3597 = vpop.f32.mrb[0].mxu0
      %3598 = vmatprep.mubr.f32.mxu0 0.0
      %3599 = vmatmul.mubr.f32.gmra.mrb[0].mxu0 %v3521
      %v3600 = vpop.f32.mrb[0].mxu0
      %v3601 = vadd.f32 0.0, %v3600
      %v3602 = vpop.f32.mrb[0].mxu0
      %3603 = vmatprep.mubr.f32.mxu0 0.0
      %3604 = vmatmul.mubr.f32.gmra.mrb[0].mxu0 %v3524
      %v3605 = vpop.f32.mrb[0].mxu0
      %v3606 = vadd.f32 0.0, %v3605
      %v3607 = vpop.f32.mrb[0].mxu0
      %3608 = vmatprep.mubr.f32.mxu0 0.0
      %3609 = vmatmul.mubr.f32.gmra.mrb[0].mxu0 %v3527
      %v3610 = vpop.f32.mrb[0].mxu0
      %v3611 = vadd.f32 0.0, %v3610
      %v3612 = vpop.f32.mrb[0].mxu0
      %3613 = vdwg.mxu0
      %3615 = vrot.lane.b32.xlu0 %v3601, 16
      %v3616 = vpop.permute.xlu0 %3615
      %3619 = vrot.lane.b32.xlu0 %v3606, 32
      %v3620 = vpop.permute.xlu0 %3619
      %3623 = vrot.lane.b32.xlu0 %v3611, 48
      %v3624 = vpop.permute.xlu0 %3623
      %v3626 = vsel %vm2139, %v3596, %v3616
      %v3627 = vsel %vm2249, %v3626, %v3620
      %v3628 = vsel %vm2405, %v3627, %v3624
      %s3629 = scalar_lea.vmem %s13, 64
      %v3630 = vld [vmem:[%s3629] sm:$0xff]
      %v3631 = vld [vmem:[%s3629 + $0x8] sm:$0xff]
      %v3632 = vld [vmem:[%s3629 + $0x10] sm:$0xff]
      %v3633 = vld [vmem:[%s3629 + $0x18] sm:$0xff]
      %v3634 = vld [vmem:[%s3629 + $0x20] sm:$0xff]
      %v3635 = vld [vmem:[%s3629 + $0x28] sm:$0xff]
      %v3636 = vld [vmem:[%s3629 + $0x30] sm:$0xff]
      %v3637 = vld [vmem:[%s3629 + $0x38] sm:$0xff]
      %v3638 = vlaneseq
      %v3639 = vshrl.u32 %v3638, 7
      %v3640 = vsub.s32 0, %v3639
      %v3641 = vrot.slane %v3233, %v3640
      %v3643 = vsel %vm1925, %v3628, 0
      %3645 = vmatprep.subr.mxu0 0.0
      %3646 = vmatpush1.msra.mxu0 %v3630
      %3647 = vmatprep.subr.mxu0 0.0
      %3648 = vmatpush1.msra.mxu0 %v3631
      %3649 = vmatprep.subr.mxu0 0.0
      %3650 = vmatpush1.msra.mxu0 %v3632
      %3651 = vmatprep.subr.mxu0 0.0
      %3652 = vmatpush1.msra.mxu0 %v3633
      %3653 = vmatprep.subr.mxu0 0.0
      %3654 = vmatpush1.msra.mxu0 %v3634
      %3655 = vmatprep.subr.mxu0 0.0
      %3656 = vmatpush1.msra.mxu0 %v3635
      %3657 = vmatprep.subr.mxu0 0.0
      %3658 = vmatpush1.msra.mxu0 %v3636
      %3659 = vmatprep.subr.mxu0 0.0
      %3660 = vmatpush1.msra.mxu0 %v3637
      %3661 = vmatprep.subr.mxu0 0.0
      %3662 = vmatpush1.msra.mxu0 0.0
      %3663 = vmatprep.subr.mxu0 0.0
      %3664 = vmatpush1.msra.mxu0 0.0
      %3665 = vmatprep.subr.mxu0 0.0
      %3666 = vmatpush1.msra.mxu0 0.0
      %3667 = vmatprep.subr.mxu0 0.0
      %3668 = vmatpush1.msra.mxu0 0.0
      %3669 = vmatprep.subr.mxu0 0.0
      %3670 = vmatpush1.msra.mxu0 0.0
      %3671 = vmatprep.subr.mxu0 0.0
      %3672 = vmatpush1.msra.mxu0 0.0
      %3673 = vmatprep.subr.mxu0 0.0
      %3674 = vmatpush1.msra.mxu0 0.0
      %3675 = vmatprep.subr.mxu0 0.0
      %3676 = vmatpush1.msra.mxu0 0.0
      %3677 = vmatprep.subr.mxu0 0.0
      %3678 = vmatpush1.msra.mxu0 0.0
      %3679 = vmatprep.subr.mxu0 0.0
      %3680 = vmatpush1.msra.mxu0 0.0
      %3681 = vmatprep.subr.mxu0 0.0
      %3682 = vmatpush1.msra.mxu0 0.0
      %3683 = vmatprep.subr.mxu0 0.0
      %3684 = vmatpush1.msra.mxu0 0.0
      %3685 = vmatprep.subr.mxu0 0.0
      %3686 = vmatpush1.msra.mxu0 0.0
      %3687 = vmatprep.subr.mxu0 0.0
      %3688 = vmatpush1.msra.mxu0 0.0
      %3689 = vmatprep.subr.mxu0 0.0
      %3690 = vmatpush1.msra.mxu0 0.0
      %3691 = vmatprep.subr.mxu0 0.0
      %3692 = vmatpush1.msra.mxu0 0.0
      %3693 = vmatprep.subr.mxu0 0.0
      %3694 = vmatpush1.msra.mxu0 0.0
      %3695 = vmatprep.subr.mxu0 0.0
      %3696 = vmatpush1.msra.mxu0 0.0
      %3697 = vmatprep.subr.mxu0 0.0
      %3698 = vmatpush1.msra.mxu0 0.0
      %3699 = vmatprep.subr.mxu0 0.0
      %3700 = vmatpush1.msra.mxu0 0.0
      %3701 = vmatprep.subr.mxu0 0.0
      %3702 = vmatpush1.msra.mxu0 0.0
      %3703 = vmatprep.subr.mxu0 0.0
      %3704 = vmatpush1.msra.mxu0 0.0
      %3705 = vmatprep.subr.mxu0 0.0
      %3706 = vmatpush1.msra.mxu0 0.0
      %3707 = vmatprep.subr.mxu0 0.0
      %3708 = vmatpush1.msra.mxu0 0.0
      %3709 = vmatprep.mubr.f32.mxu0 0.0
      %3710 = vmatmul.mubr.f32.gmra.mrb[0].mxu0 %v3643
      %v3711 = vpop.f32.mrb[0].mxu0
      %v3712 = vadd.f32 %v3641, %v3711
      %v3713 = vpop.f32.mrb[0].mxu0
      %3714 = vdwg.mxu0
      %v3715 = vadd.f32 %v3231, %v3712
      %v3716 = vsel %vm1925, %v3715, 0.0
      %3717 = vadd.xlane.f32.xlu0 %v3716
      %v3718 = vpop.xlane.xlu0 %3717
      %v3719 = vmul.f32 %v3718, %v2496
      %v3720 = vsub.f32 %v3715, %v3719
      %v3721 = vmul.f32 %v3720, %v3720
      %v3722 = vsel %vm1925, %v3721, 0.0
      %3723 = vadd.xlane.f32.xlu0 %v3722
      %v3724 = vpop.xlane.xlu0 %3723
      %v3725 = vmul.f32 %v3724, %v2496
      %v3726 = vadd.f32 %v3725, 1e-05
      %v3727 = vrsqrt.pop %v3726
      %v3728 = vmul.f32 %v3720, %v3727
      %v3729 = vlaneseq
      %v3730 = vshrl.u32 %v3729, 7
      %v3731 = vsub.s32 1, %v3730
      %v3732 = vrot.slane %v3233, %v3731
      %v3733 = vmul.f32 %v3728, %v3732
      %v3734 = vlaneseq
      %v3735 = vshrl.u32 %v3734, 7
      %v3736 = vsub.s32 2, %v3735
      %v3737 = vrot.slane %v3233, %v3736
      %v3738 = vadd.f32 %v3733, %v3737
      %s3739 = scalar_lea.vmem %s14, 64
      %v3740 = vld [vmem:[%s3739] sm:$0xff]
      %v3741 = vld [vmem:[%s3739 + $0x8] sm:$0xff]
      %v3742 = vld [vmem:[%s3739 + $0x10] sm:$0xff]
      %v3743 = vld [vmem:[%s3739 + $0x18] sm:$0xff]
      %v3744 = vld [vmem:[%s3739 + $0x20] sm:$0xff]
      %v3745 = vld [vmem:[%s3739 + $0x28] sm:$0xff]
      %v3746 = vld [vmem:[%s3739 + $0x30] sm:$0xff]
      %v3747 = vld [vmem:[%s3739 + $0x38] sm:$0xff]
      %v3748 = vlaneseq
      %v3749 = vshrl.u32 %v3748, 7
      %v3750 = vsub.s32 3, %v3749
      %v3751 = vrot.slane %v3233, %v3750
      %v3753 = vsel %vm1925, %v3738, 0
      %3755 = vmatprep.subr.mxu0 0.0
      %3756 = vmatpush1.msra.mxu0 %v3740
      %3757 = vmatprep.subr.mxu0 0.0
      %3758 = vmatpush1.msra.mxu0 %v3741
      %3759 = vmatprep.subr.mxu0 0.0
      %3760 = vmatpush1.msra.mxu0 %v3742
      %3761 = vmatprep.subr.mxu0 0.0
      %3762 = vmatpush1.msra.mxu0 %v3743
      %3763 = vmatprep.subr.mxu0 0.0
      %3764 = vmatpush1.msra.mxu0 %v3744
      %3765 = vmatprep.subr.mxu0 0.0
      %3766 = vmatpush1.msra.mxu0 %v3745
      %3767 = vmatprep.subr.mxu0 0.0
      %3768 = vmatpush1.msra.mxu0 %v3746
      %3769 = vmatprep.subr.mxu0 0.0
      %3770 = vmatpush1.msra.mxu0 %v3747
      %3771 = vmatprep.subr.mxu0 0.0
      %3772 = vmatpush1.msra.mxu0 0.0
      %3773 = vmatprep.subr.mxu0 0.0
      %3774 = vmatpush1.msra.mxu0 0.0
      %3775 = vmatprep.subr.mxu0 0.0
      %3776 = vmatpush1.msra.mxu0 0.0
      %3777 = vmatprep.subr.mxu0 0.0
      %3778 = vmatpush1.msra.mxu0 0.0
      %3779 = vmatprep.subr.mxu0 0.0
      %3780 = vmatpush1.msra.mxu0 0.0
      %3781 = vmatprep.subr.mxu0 0.0
      %3782 = vmatpush1.msra.mxu0 0.0
      %3783 = vmatprep.subr.mxu0 0.0
      %3784 = vmatpush1.msra.mxu0 0.0
      %3785 = vmatprep.subr.mxu0 0.0
      %3786 = vmatpush1.msra.mxu0 0.0
      %3787 = vmatprep.subr.mxu0 0.0
      %3788 = vmatpush1.msra.mxu0 0.0
      %3789 = vmatprep.subr.mxu0 0.0
      %3790 = vmatpush1.msra.mxu0 0.0
      %3791 = vmatprep.subr.mxu0 0.0
      %3792 = vmatpush1.msra.mxu0 0.0
      %3793 = vmatprep.subr.mxu0 0.0
      %3794 = vmatpush1.msra.mxu0 0.0
      %3795 = vmatprep.subr.mxu0 0.0
      %3796 = vmatpush1.msra.mxu0 0.0
      %3797 = vmatprep.subr.mxu0 0.0
      %3798 = vmatpush1.msra.mxu0 0.0
      %3799 = vmatprep.subr.mxu0 0.0
      %3800 = vmatpush1.msra.mxu0 0.0
      %3801 = vmatprep.subr.mxu0 0.0
      %3802 = vmatpush1.msra.mxu0 0.0
      %3803 = vmatprep.subr.mxu0 0.0
      %3804 = vmatpush1.msra.mxu0 0.0
      %3805 = vmatprep.subr.mxu0 0.0
      %3806 = vmatpush1.msra.mxu0 0.0
      %3807 = vmatprep.subr.mxu0 0.0
      %3808 = vmatpush1.msra.mxu0 0.0
      %3809 = vmatprep.subr.mxu0 0.0
      %3810 = vmatpush1.msra.mxu0 0.0
      %3811 = vmatprep.subr.mxu0 0.0
      %3812 = vmatpush1.msra.mxu0 0.0
      %3813 = vmatprep.subr.mxu0 0.0
      %3814 = vmatpush1.msra.mxu0 0.0
      %3815 = vmatprep.subr.mxu0 0.0
      %3816 = vmatpush1.msra.mxu0 0.0
      %3817 = vmatprep.subr.mxu0 0.0
      %3818 = vmatpush1.msra.mxu0 0.0
      %3819 = vmatprep.mubr.f32.mxu0 0.0
      %3820 = vmatmul.mubr.f32.gmra.mrb[0].mxu0 %v3753
      %v3821 = vpop.f32.mrb[0].mxu0
      %v3822 = vadd.f32 %v3751, %v3821
      %v3823 = vpop.f32.mrb[0].mxu0
      %3824 = vdwg.mxu0
      %3826 = vrot.lane.b32.xlu0 %v3822, 112
      %v3827 = vpop.permute.xlu0 %3826
      %3828 = vrot.lane.b32.xlu0 %v3822, 96
      %v3829 = vpop.permute.xlu0 %3828
      %3830 = vrot.lane.b32.xlu0 %v3822, 80
      %v3831 = vpop.permute.xlu0 %3830
      %3834 = vrot.lane.b32.xlu0 %v2001, 112
      %v3835 = vpop.permute.xlu0 %3834
      %3836 = vrot.lane.b32.xlu0 %v2007, 112
      %v3837 = vpop.permute.xlu0 %3836
      %3838 = vrot.lane.b32.xlu0 %v2001, 96
      %v3839 = vpop.permute.xlu0 %3838
      %3840 = vrot.lane.b32.xlu0 %v2007, 96
      %v3841 = vpop.permute.xlu0 %3840
      %3842 = vrot.lane.b32.xlu0 %v2001, 80
      %v3843 = vpop.permute.xlu0 %3842
      %3844 = vrot.lane.b32.xlu0 %v2007, 80
      %v3845 = vpop.permute.xlu0 %3844
      %v3846 = vsel %vm2139, %v3822, 0
      %v3848 = vsel %vm2139, %v3827, 0
      %v3850 = vsel %vm2139, %v3829, 0
      %v3852 = vsel %vm2139, %v3831, 0
      %v3854 = vsel %vm2139, %v2001, 0
      %v3856 = vsel %vm2139, %v2007, 0
      %v3858 = vsel %vm2139, %v3835, 0
      %v3860 = vsel %vm2139, %v3837, 0
      %v3862 = vsel %vm2139, %v3839, 0
      %v3864 = vsel %vm2139, %v3841, 0
      %v3866 = vsel %vm2139, %v3843, 0
      %v3868 = vsel %vm2139, %v3845, 0
      %3870 = vmatprep.subr.mxu0 0.0
      %3871 = vmatpush1.xpose.msra.mxu0 %v3854
      %3872 = vmatprep.subr.mxu0 0.0
      %3873 = vmatpush1.xpose.msra.mxu0 %v3856
      %3874 = vmatprep.subr.mxu0 0.0
      %3875 = vmatpush1.xpose.msra.mxu0 %v3858
      %3876 = vmatprep.subr.mxu0 0.0
      %3877 = vmatpush1.xpose.msra.mxu0 %v3860
      %3878 = vmatprep.subr.mxu0 0.0
      %3879 = vmatpush1.xpose.msra.mxu0 %v3862
      %3880 = vmatprep.subr.mxu0 0.0
      %3881 = vmatpush1.xpose.msra.mxu0 %v3864
      %3882 = vmatprep.subr.mxu0 0.0
      %3883 = vmatpush1.xpose.msra.mxu0 %v3866
      %3884 = vmatprep.subr.mxu0 0.0
      %3885 = vmatpush1.xpose.msra.mxu0 %v3868
      %3886 = vmatprep.subr.mxu0 0.0
      %3887 = vmatpush1.xpose.msra.mxu0 0.0
      %3888 = vmatprep.subr.mxu0 0.0
      %3889 = vmatpush1.xpose.msra.mxu0 0.0
      %3890 = vmatprep.subr.mxu0 0.0
      %3891 = vmatpush1.xpose.msra.mxu0 0.0
      %3892 = vmatprep.subr.mxu0 0.0
      %3893 = vmatpush1.xpose.msra.mxu0 0.0
      %3894 = vmatprep.subr.mxu0 0.0
      %3895 = vmatpush1.xpose.msra.mxu0 0.0
      %3896 = vmatprep.subr.mxu0 0.0
      %3897 = vmatpush1.xpose.msra.mxu0 0.0
      %3898 = vmatprep.subr.mxu0 0.0
      %3899 = vmatpush1.xpose.msra.mxu0 0.0
      %3900 = vmatprep.subr.mxu0 0.0
      %3901 = vmatpush1.xpose.msra.mxu0 0.0
      %3902 = vmatprep.subr.mxu0 0.0
      %3903 = vmatpush1.xpose.msra.mxu0 0.0
      %3904 = vmatprep.subr.mxu0 0.0
      %3905 = vmatpush1.xpose.msra.mxu0 0.0
      %3906 = vmatprep.subr.mxu0 0.0
      %3907 = vmatpush1.xpose.msra.mxu0 0.0
      %3908 = vmatprep.subr.mxu0 0.0
      %3909 = vmatpush1.xpose.msra.mxu0 0.0
      %3910 = vmatprep.subr.mxu0 0.0
      %3911 = vmatpush1.xpose.msra.mxu0 0.0
      %3912 = vmatprep.subr.mxu0 0.0
      %3913 = vmatpush1.xpose.msra.mxu0 0.0
      %3914 = vmatprep.subr.mxu0 0.0
      %3915 = vmatpush1.xpose.msra.mxu0 0.0
      %3916 = vmatprep.subr.mxu0 0.0
      %3917 = vmatpush1.xpose.msra.mxu0 0.0
      %3918 = vmatprep.subr.mxu0 0.0
      %3919 = vmatpush1.xpose.msra.mxu0 0.0
      %3920 = vmatprep.subr.mxu0 0.0
      %3921 = vmatpush1.xpose.msra.mxu0 0.0
      %3922 = vmatprep.subr.mxu0 0.0
      %3923 = vmatpush1.xpose.msra.mxu0 0.0
      %3924 = vmatprep.subr.mxu0 0.0
      %3925 = vmatpush1.xpose.msra.mxu0 0.0
      %3926 = vmatprep.subr.mxu0 0.0
      %3927 = vmatpush1.xpose.msra.mxu0 0.0
      %3928 = vmatprep.subr.mxu0 0.0
      %3929 = vmatpush1.xpose.msra.mxu0 0.0
      %3930 = vmatprep.subr.mxu0 0.0
      %3931 = vmatpush1.xpose.msra.mxu0 0.0
      %3932 = vmatprep.subr.mxu0 0.0
      %3933 = vmatpush1.xpose.msra.mxu0 0.0
      %3934 = vmatprep.mubr.f32.mxu0 0.0
      %3935 = vmatmul.mubr.f32.gmra.mrb[0].mxu0 %v3846
      %v3936 = vpop.f32.mrb[0].mxu0
      %v3937 = vadd.f32 0.0, %v3936
      %v3938 = vpop.f32.mrb[0].mxu0
      %3939 = vmatprep.mubr.f32.mxu0 0.0
      %3940 = vmatmul.mubr.f32.gmra.mrb[0].mxu0 %v3848
      %v3941 = vpop.f32.mrb[0].mxu0
      %v3942 = vadd.f32 0.0, %v3941
      %v3943 = vpop.f32.mrb[0].mxu0
      %3944 = vmatprep.mubr.f32.mxu0 0.0
      %3945 = vmatmul.mubr.f32.gmra.mrb[0].mxu0 %v3850
      %v3946 = vpop.f32.mrb[0].mxu0
      %v3947 = vadd.f32 0.0, %v3946
      %v3948 = vpop.f32.mrb[0].mxu0
      %3949 = vmatprep.mubr.f32.mxu0 0.0
      %3950 = vmatmul.mubr.f32.gmra.mrb[0].mxu0 %v3852
      %v3951 = vpop.f32.mrb[0].mxu0
      %v3952 = vadd.f32 0.0, %v3951
      %v3953 = vpop.f32.mrb[0].mxu0
      %3954 = vdwg.mxu0
      %v3955 = vmul.f32 %v3937, 0.25
      %v3956 = vmul.f32 %v3942, 0.25
      %v3957 = vmul.f32 %v3947, 0.25
      %v3958 = vmul.f32 %v3952, 0.25
      %v3959 = vadd.f32 %v3955, %v819
      %v3960 = vadd.f32 %v3956, %v820
      %v3961 = vadd.f32 %v3957, %v821
      %v3962 = vadd.f32 %v3958, %v822
      %v3963 = vsel %vm1925, %v3959, -inf
      %3964 = vmax.xlane.f32.xlu0 %v3963
      %v3965 = vpop.xlane.xlu0 %3964
      %v3966 = vsel %vm1925, %v3960, -inf
      %3967 = vmax.xlane.f32.xlu0 %v3966
      %v3968 = vpop.xlane.xlu0 %3967
      %v3969 = vsel %vm1925, %v3961, -inf
      %3970 = vmax.xlane.f32.xlu0 %v3969
      %v3971 = vpop.xlane.xlu0 %3970
      %v3972 = vsel %vm1925, %v3962, -inf
      %3973 = vmax.xlane.f32.xlu0 %v3972
      %v3974 = vpop.xlane.xlu0 %3973
      %v3975 = vsub.f32 %v3959, %v3965
      %v3976 = vsub.f32 %v3960, %v3968
      %v3977 = vsub.f32 %v3961, %v3971
      %v3978 = vsub.f32 %v3962, %v3974
      %v3979 = vmul.f32 %v3975, 1.442695
      %v3980 = vpow.pop %v3979
      %v3981 = vmul.f32 %v3976, 1.442695
      %v3982 = vpow.pop %v3981
      %v3983 = vmul.f32 %v3977, 1.442695
      %v3984 = vpow.pop %v3983
      %v3985 = vmul.f32 %v3978, 1.442695
      %v3986 = vpow.pop %v3985
      %v3987 = vsel %vm1925, %v3980, 0.0
      %3988 = vadd.xlane.f32.xlu0 %v3987
      %v3989 = vpop.xlane.xlu0 %3988
      %v3990 = vsel %vm1925, %v3982, 0.0
      %3991 = vadd.xlane.f32.xlu0 %v3990
      %v3992 = vpop.xlane.xlu0 %3991
      %v3993 = vsel %vm1925, %v3984, 0.0
      %3994 = vadd.xlane.f32.xlu0 %v3993
      %v3995 = vpop.xlane.xlu0 %3994
      %v3996 = vsel %vm1925, %v3986, 0.0
      %3997 = vadd.xlane.f32.xlu0 %v3996
      %v3998 = vpop.xlane.xlu0 %3997
      %v3999 = vrcp.pop %v3989
      %v4000 = vmul.f32 %v3980, %v3999
      %v4001 = vrcp.pop %v3992
      %v4002 = vmul.f32 %v3982, %v4001
      %v4003 = vrcp.pop %v3995
      %v4004 = vmul.f32 %v3984, %v4003
      %v4005 = vrcp.pop %v3998
      %v4006 = vmul.f32 %v3986, %v4005
      %4007 = vrot.lane.b32.xlu0 %v2001, 64
      %v4008 = vpop.permute.xlu0 %4007
      %4009 = vrot.lane.b32.xlu0 %v2007, 64
      %v4010 = vpop.permute.xlu0 %4009
      %4011 = vrot.lane.b32.xlu0 %v3835, 64
      %v4012 = vpop.permute.xlu0 %4011
      %4013 = vrot.lane.b32.xlu0 %v3837, 64
      %v4014 = vpop.permute.xlu0 %4013
      %4015 = vrot.lane.b32.xlu0 %v3839, 64
      %v4016 = vpop.permute.xlu0 %4015
      %4017 = vrot.lane.b32.xlu0 %v3841, 64
      %v4018 = vpop.permute.xlu0 %4017
      %4019 = vrot.lane.b32.xlu0 %v3843, 64
      %v4020 = vpop.permute.xlu0 %4019
      %4021 = vrot.lane.b32.xlu0 %v3845, 64
      %v4022 = vpop.permute.xlu0 %4021
      %v4032 = vsel %vm1925, %v4000, 0
      %v4035 = vsel %vm1925, %v4002, 0
      %v4038 = vsel %vm1925, %v4004, 0
      %v4041 = vsel %vm1925, %v4006, 0
      %4043 = vmatprep.subr.mxu0 0.0
      %4044 = vmatpush1.msra.mxu0 %v4008
      %4045 = vmatprep.subr.mxu0 0.0
      %4046 = vmatpush1.msra.mxu0 %v4010
      %4047 = vmatprep.subr.mxu0 0.0
      %4048 = vmatpush1.msra.mxu0 %v4012
      %4049 = vmatprep.subr.mxu0 0.0
      %4050 = vmatpush1.msra.mxu0 %v4014
      %4051 = vmatprep.subr.mxu0 0.0
      %4052 = vmatpush1.msra.mxu0 %v4016
      %4053 = vmatprep.subr.mxu0 0.0
      %4054 = vmatpush1.msra.mxu0 %v4018
      %4055 = vmatprep.subr.mxu0 0.0
      %4056 = vmatpush1.msra.mxu0 %v4020
      %4057 = vmatprep.subr.mxu0 0.0
      %4058 = vmatpush1.msra.mxu0 %v4022
      %4059 = vmatprep.subr.mxu0 0.0
      %4060 = vmatpush1.msra.mxu0 0.0
      %4061 = vmatprep.subr.mxu0 0.0
      %4062 = vmatpush1.msra.mxu0 0.0
      %4063 = vmatprep.subr.mxu0 0.0
      %4064 = vmatpush1.msra.mxu0 0.0
      %4065 = vmatprep.subr.mxu0 0.0
      %4066 = vmatpush1.msra.mxu0 0.0
      %4067 = vmatprep.subr.mxu0 0.0
      %4068 = vmatpush1.msra.mxu0 0.0
      %4069 = vmatprep.subr.mxu0 0.0
      %4070 = vmatpush1.msra.mxu0 0.0
      %4071 = vmatprep.subr.mxu0 0.0
      %4072 = vmatpush1.msra.mxu0 0.0
      %4073 = vmatprep.subr.mxu0 0.0
      %4074 = vmatpush1.msra.mxu0 0.0
      %4075 = vmatprep.subr.mxu0 0.0
      %4076 = vmatpush1.msra.mxu0 0.0
      %4077 = vmatprep.subr.mxu0 0.0
      %4078 = vmatpush1.msra.mxu0 0.0
      %4079 = vmatprep.subr.mxu0 0.0
      %4080 = vmatpush1.msra.mxu0 0.0
      %4081 = vmatprep.subr.mxu0 0.0
      %4082 = vmatpush1.msra.mxu0 0.0
      %4083 = vmatprep.subr.mxu0 0.0
      %4084 = vmatpush1.msra.mxu0 0.0
      %4085 = vmatprep.subr.mxu0 0.0
      %4086 = vmatpush1.msra.mxu0 0.0
      %4087 = vmatprep.subr.mxu0 0.0
      %4088 = vmatpush1.msra.mxu0 0.0
      %4089 = vmatprep.subr.mxu0 0.0
      %4090 = vmatpush1.msra.mxu0 0.0
      %4091 = vmatprep.subr.mxu0 0.0
      %4092 = vmatpush1.msra.mxu0 0.0
      %4093 = vmatprep.subr.mxu0 0.0
      %4094 = vmatpush1.msra.mxu0 0.0
      %4095 = vmatprep.subr.mxu0 0.0
      %4096 = vmatpush1.msra.mxu0 0.0
      %4097 = vmatprep.subr.mxu0 0.0
      %4098 = vmatpush1.msra.mxu0 0.0
      %4099 = vmatprep.subr.mxu0 0.0
      %4100 = vmatpush1.msra.mxu0 0.0
      %4101 = vmatprep.subr.mxu0 0.0
      %4102 = vmatpush1.msra.mxu0 0.0
      %4103 = vmatprep.subr.mxu0 0.0
      %4104 = vmatpush1.msra.mxu0 0.0
      %4105 = vmatprep.subr.mxu0 0.0
      %4106 = vmatpush1.msra.mxu0 0.0
      %4107 = vmatprep.mubr.f32.mxu0 0.0
      %4108 = vmatmul.mubr.f32.gmra.mrb[0].mxu0 %v4032
      %v4109 = vpop.f32.mrb[0].mxu0
      %v4110 = vadd.f32 0.0, %v4109
      %v4111 = vpop.f32.mrb[0].mxu0
      %4112 = vmatprep.mubr.f32.mxu0 0.0
      %4113 = vmatmul.mubr.f32.gmra.mrb[0].mxu0 %v4035
      %v4114 = vpop.f32.mrb[0].mxu0
      %v4115 = vadd.f32 0.0, %v4114
      %v4116 = vpop.f32.mrb[0].mxu0
      %4117 = vmatprep.mubr.f32.mxu0 0.0
      %4118 = vmatmul.mubr.f32.gmra.mrb[0].mxu0 %v4038
      %v4119 = vpop.f32.mrb[0].mxu0
      %v4120 = vadd.f32 0.0, %v4119
      %v4121 = vpop.f32.mrb[0].mxu0
      %4122 = vmatprep.mubr.f32.mxu0 0.0
      %4123 = vmatmul.mubr.f32.gmra.mrb[0].mxu0 %v4041
      %v4124 = vpop.f32.mrb[0].mxu0
      %v4125 = vadd.f32 0.0, %v4124
      %v4126 = vpop.f32.mrb[0].mxu0
      %4127 = vdwg.mxu0
      %4129 = vrot.lane.b32.xlu0 %v4115, 16
      %v4130 = vpop.permute.xlu0 %4129
      %4133 = vrot.lane.b32.xlu0 %v4120, 32
      %v4134 = vpop.permute.xlu0 %4133
      %4137 = vrot.lane.b32.xlu0 %v4125, 48
      %v4138 = vpop.permute.xlu0 %4137
      %v4140 = vsel %vm2139, %v4110, %v4130
      %v4141 = vsel %vm2249, %v4140, %v4134
      %v4142 = vsel %vm2405, %v4141, %v4138
      %s4143 = scalar_lea.vmem %s17, 64
      %v4144 = vld [vmem:[%s4143] sm:$0xff]
      %v4145 = vld [vmem:[%s4143 + $0x8] sm:$0xff]
      %v4146 = vld [vmem:[%s4143 + $0x10] sm:$0xff]
      %v4147 = vld [vmem:[%s4143 + $0x18] sm:$0xff]
      %v4148 = vld [vmem:[%s4143 + $0x20] sm:$0xff]
      %v4149 = vld [vmem:[%s4143 + $0x28] sm:$0xff]
      %v4150 = vld [vmem:[%s4143 + $0x30] sm:$0xff]
      %v4151 = vld [vmem:[%s4143 + $0x38] sm:$0xff]
      %v4152 = vlaneseq
      %v4153 = vshrl.u32 %v4152, 7
      %v4154 = vsub.s32 4, %v4153
      %v4155 = vrot.slane %v3233, %v4154
      %v4157 = vsel %vm1925, %v4142, 0
      %4159 = vmatprep.subr.mxu0 0.0
      %4160 = vmatpush1.msra.mxu0 %v4144
      %4161 = vmatprep.subr.mxu0 0.0
      %4162 = vmatpush1.msra.mxu0 %v4145
      %4163 = vmatprep.subr.mxu0 0.0
      %4164 = vmatpush1.msra.mxu0 %v4146
      %4165 = vmatprep.subr.mxu0 0.0
      %4166 = vmatpush1.msra.mxu0 %v4147
      %4167 = vmatprep.subr.mxu0 0.0
      %4168 = vmatpush1.msra.mxu0 %v4148
      %4169 = vmatprep.subr.mxu0 0.0
      %4170 = vmatpush1.msra.mxu0 %v4149
      %4171 = vmatprep.subr.mxu0 0.0
      %4172 = vmatpush1.msra.mxu0 %v4150
      %4173 = vmatprep.subr.mxu0 0.0
      %4174 = vmatpush1.msra.mxu0 %v4151
      %4175 = vmatprep.subr.mxu0 0.0
      %4176 = vmatpush1.msra.mxu0 0.0
      %4177 = vmatprep.subr.mxu0 0.0
      %4178 = vmatpush1.msra.mxu0 0.0
      %4179 = vmatprep.subr.mxu0 0.0
      %4180 = vmatpush1.msra.mxu0 0.0
      %4181 = vmatprep.subr.mxu0 0.0
      %4182 = vmatpush1.msra.mxu0 0.0
      %4183 = vmatprep.subr.mxu0 0.0
      %4184 = vmatpush1.msra.mxu0 0.0
      %4185 = vmatprep.subr.mxu0 0.0
      %4186 = vmatpush1.msra.mxu0 0.0
      %4187 = vmatprep.subr.mxu0 0.0
      %4188 = vmatpush1.msra.mxu0 0.0
      %4189 = vmatprep.subr.mxu0 0.0
      %4190 = vmatpush1.msra.mxu0 0.0
      %4191 = vmatprep.subr.mxu0 0.0
      %4192 = vmatpush1.msra.mxu0 0.0
      %4193 = vmatprep.subr.mxu0 0.0
      %4194 = vmatpush1.msra.mxu0 0.0
      %4195 = vmatprep.subr.mxu0 0.0
      %4196 = vmatpush1.msra.mxu0 0.0
      %4197 = vmatprep.subr.mxu0 0.0
      %4198 = vmatpush1.msra.mxu0 0.0
      %4199 = vmatprep.subr.mxu0 0.0
      %4200 = vmatpush1.msra.mxu0 0.0
      %4201 = vmatprep.subr.mxu0 0.0
      %4202 = vmatpush1.msra.mxu0 0.0
      %4203 = vmatprep.subr.mxu0 0.0
      %4204 = vmatpush1.msra.mxu0 0.0
      %4205 = vmatprep.subr.mxu0 0.0
      %4206 = vmatpush1.msra.mxu0 0.0
      %4207 = vmatprep.subr.mxu0 0.0
      %4208 = vmatpush1.msra.mxu0 0.0
      %4209 = vmatprep.subr.mxu0 0.0
      %4210 = vmatpush1.msra.mxu0 0.0
      %4211 = vmatprep.subr.mxu0 0.0
      %4212 = vmatpush1.msra.mxu0 0.0
      %4213 = vmatprep.subr.mxu0 0.0
      %4214 = vmatpush1.msra.mxu0 0.0
      %4215 = vmatprep.subr.mxu0 0.0
      %4216 = vmatpush1.msra.mxu0 0.0
      %4217 = vmatprep.subr.mxu0 0.0
      %4218 = vmatpush1.msra.mxu0 0.0
      %4219 = vmatprep.subr.mxu0 0.0
      %4220 = vmatpush1.msra.mxu0 0.0
      %4221 = vmatprep.subr.mxu0 0.0
      %4222 = vmatpush1.msra.mxu0 0.0
      %4223 = vmatprep.mubr.f32.mxu0 0.0
      %4224 = vmatmul.mubr.f32.gmra.mrb[0].mxu0 %v4157
      %v4225 = vpop.f32.mrb[0].mxu0
      %v4226 = vadd.f32 %v4155, %v4225
      %v4227 = vpop.f32.mrb[0].mxu0
      %4228 = vdwg.mxu0
      %v4229 = vadd.f32 %v3738, %v4226
      %v4230 = vsel %vm1925, %v4229, 0.0
      %4231 = vadd.xlane.f32.xlu0 %v4230
      %v4232 = vpop.xlane.xlu0 %4231
      %v4233 = vmul.f32 %v4232, %v2496
      %v4234 = vsub.f32 %v4229, %v4233
      %v4235 = vmul.f32 %v4234, %v4234
      %v4236 = vsel %vm1925, %v4235, 0.0
      %4237 = vadd.xlane.f32.xlu0 %v4236
      %v4238 = vpop.xlane.xlu0 %4237
      %v4239 = vmul.f32 %v4238, %v2496
      %v4240 = vadd.f32 %v4239, 1e-05
      %v4241 = vrsqrt.pop %v4240
      %v4242 = vmul.f32 %v4234, %v4241
      %v4243 = vlaneseq
      %v4244 = vshrl.u32 %v4243, 7
      %v4245 = vsub.s32 5, %v4244
      %v4246 = vrot.slane %v3233, %v4245
      %v4247 = vmul.f32 %v4242, %v4246
      %v4248 = vlaneseq
      %v4249 = vshrl.u32 %v4248, 7
      %v4250 = vsub.s32 6, %v4249
      %v4251 = vrot.slane %v3233, %v4250
      %v4252 = vadd.f32 %v4247, %v4251
      %s4253 = scalar_lea.vmem %s18, 64
      %v4254 = vld [vmem:[%s4253] sm:$0xff]
      %v4255 = vld [vmem:[%s4253 + $0x8] sm:$0xff]
      %v4256 = vld [vmem:[%s4253 + $0x10] sm:$0xff]
      %v4257 = vld [vmem:[%s4253 + $0x18] sm:$0xff]
      %v4258 = vld [vmem:[%s4253 + $0x20] sm:$0xff]
      %v4259 = vld [vmem:[%s4253 + $0x28] sm:$0xff]
      %v4260 = vld [vmem:[%s4253 + $0x30] sm:$0xff]
      %v4261 = vld [vmem:[%s4253 + $0x38] sm:$0xff]
      %s4262 = scalar_lea.vmem %s19, 1
      %v4263 = vld [vmem:[%s4262] sm:$0x1]
      %v4265 = vlaneseq
      %v4266 = vshrl.u32 %v4265, 7
      %v4267 = vsub.s32 0, %v4266
      %v4268 = vrot.slane %v4263, %v4267
      %v4271 = vsel %vm1925, %v4252, 0
      %4273 = vmatprep.subr.mxu0 0.0
      %4274 = vmatpush1.msra.mxu0 %v4254
      %4275 = vmatprep.subr.mxu0 0.0
      %4276 = vmatpush1.msra.mxu0 %v4255
      %4277 = vmatprep.subr.mxu0 0.0
      %4278 = vmatpush1.msra.mxu0 %v4256
      %4279 = vmatprep.subr.mxu0 0.0
      %4280 = vmatpush1.msra.mxu0 %v4257
      %4281 = vmatprep.subr.mxu0 0.0
      %4282 = vmatpush1.msra.mxu0 %v4258
      %4283 = vmatprep.subr.mxu0 0.0
      %4284 = vmatpush1.msra.mxu0 %v4259
      %4285 = vmatprep.subr.mxu0 0.0
      %4286 = vmatpush1.msra.mxu0 %v4260
      %4287 = vmatprep.subr.mxu0 0.0
      %4288 = vmatpush1.msra.mxu0 %v4261
      %4289 = vmatprep.subr.mxu0 0.0
      %4290 = vmatpush1.msra.mxu0 0.0
      %4291 = vmatprep.subr.mxu0 0.0
      %4292 = vmatpush1.msra.mxu0 0.0
      %4293 = vmatprep.subr.mxu0 0.0
      %4294 = vmatpush1.msra.mxu0 0.0
      %4295 = vmatprep.subr.mxu0 0.0
      %4296 = vmatpush1.msra.mxu0 0.0
      %4297 = vmatprep.subr.mxu0 0.0
      %4298 = vmatpush1.msra.mxu0 0.0
      %4299 = vmatprep.subr.mxu0 0.0
      %4300 = vmatpush1.msra.mxu0 0.0
      %4301 = vmatprep.subr.mxu0 0.0
      %4302 = vmatpush1.msra.mxu0 0.0
      %4303 = vmatprep.subr.mxu0 0.0
      %4304 = vmatpush1.msra.mxu0 0.0
      %4305 = vmatprep.subr.mxu0 0.0
      %4306 = vmatpush1.msra.mxu0 0.0
      %4307 = vmatprep.subr.mxu0 0.0
      %4308 = vmatpush1.msra.mxu0 0.0
      %4309 = vmatprep.subr.mxu0 0.0
      %4310 = vmatpush1.msra.mxu0 0.0
      %4311 = vmatprep.subr.mxu0 0.0
      %4312 = vmatpush1.msra.mxu0 0.0
      %4313 = vmatprep.subr.mxu0 0.0
      %4314 = vmatpush1.msra.mxu0 0.0
      %4315 = vmatprep.subr.mxu0 0.0
      %4316 = vmatpush1.msra.mxu0 0.0
      %4317 = vmatprep.subr.mxu0 0.0
      %4318 = vmatpush1.msra.mxu0 0.0
      %4319 = vmatprep.subr.mxu0 0.0
      %4320 = vmatpush1.msra.mxu0 0.0
      %4321 = vmatprep.subr.mxu0 0.0
      %4322 = vmatpush1.msra.mxu0 0.0
      %4323 = vmatprep.subr.mxu0 0.0
      %4324 = vmatpush1.msra.mxu0 0.0
      %4325 = vmatprep.subr.mxu0 0.0
      %4326 = vmatpush1.msra.mxu0 0.0
      %4327 = vmatprep.subr.mxu0 0.0
      %4328 = vmatpush1.msra.mxu0 0.0
      %4329 = vmatprep.subr.mxu0 0.0
      %4330 = vmatpush1.msra.mxu0 0.0
      %4331 = vmatprep.subr.mxu0 0.0
      %4332 = vmatpush1.msra.mxu0 0.0
      %4333 = vmatprep.subr.mxu0 0.0
      %4334 = vmatpush1.msra.mxu0 0.0
      %4335 = vmatprep.subr.mxu0 0.0
      %4336 = vmatpush1.msra.mxu0 0.0
      %4337 = vmatprep.mubr.f32.mxu0 0.0
      %4338 = vmatmul.mubr.f32.gmra.mrb[0].mxu0 %v4271
      %v4339 = vpop.f32.mrb[0].mxu0
      %v4340 = vadd.f32 %v4268, %v4339
      %v4341 = vpop.f32.mrb[0].mxu0
      %4342 = vdwg.mxu0
      %v4343 = vmax.f32 %v4340, 0.0
      %s4344 = scalar_lea.vmem %s20, 128
      %v4345 = vld [vmem:[%s4344] sm:$0xff]
      %v4346 = vld [vmem:[%s4344 + $0x8] sm:$0xff]
      %v4347 = vld [vmem:[%s4344 + $0x10] sm:$0xff]
      %v4348 = vld [vmem:[%s4344 + $0x18] sm:$0xff]
      %v4349 = vld [vmem:[%s4344 + $0x20] sm:$0xff]
      %v4350 = vld [vmem:[%s4344 + $0x28] sm:$0xff]
      %v4351 = vld [vmem:[%s4344 + $0x30] sm:$0xff]
      %v4352 = vld [vmem:[%s4344 + $0x38] sm:$0xff]
      %v4353 = vld [vmem:[%s4344 + $0x40] sm:$0xff]
      %v4354 = vld [vmem:[%s4344 + $0x48] sm:$0xff]
      %v4355 = vld [vmem:[%s4344 + $0x50] sm:$0xff]
      %v4356 = vld [vmem:[%s4344 + $0x58] sm:$0xff]
      %v4357 = vld [vmem:[%s4344 + $0x60] sm:$0xff]
      %v4358 = vld [vmem:[%s4344 + $0x68] sm:$0xff]
      %v4359 = vld [vmem:[%s4344 + $0x70] sm:$0xff]
      %v4360 = vld [vmem:[%s4344 + $0x78] sm:$0xff]
      %v4361 = vlaneseq
      %v4362 = vshrl.u32 %v4361, 7
      %v4363 = vsub.s32 7, %v4362
      %v4364 = vrot.slane %v3233, %v4363
      %4365 = vmatprep.subr.mxu0 0.0
      %4366 = vmatpush1.msra.mxu0 %v4345
      %4367 = vmatprep.subr.mxu0 0.0
      %4368 = vmatpush1.msra.mxu0 %v4346
      %4369 = vmatprep.subr.mxu0 0.0
      %4370 = vmatpush1.msra.mxu0 %v4347
      %4371 = vmatprep.subr.mxu0 0.0
      %4372 = vmatpush1.msra.mxu0 %v4348
      %4373 = vmatprep.subr.mxu0 0.0
      %4374 = vmatpush1.msra.mxu0 %v4349
      %4375 = vmatprep.subr.mxu0 0.0
      %4376 = vmatpush1.msra.mxu0 %v4350
      %4377 = vmatprep.subr.mxu0 0.0
      %4378 = vmatpush1.msra.mxu0 %v4351
      %4379 = vmatprep.subr.mxu0 0.0
      %4380 = vmatpush1.msra.mxu0 %v4352
      %4381 = vmatprep.subr.mxu0 0.0
      %4382 = vmatpush1.msra.mxu0 %v4353
      %4383 = vmatprep.subr.mxu0 0.0
      %4384 = vmatpush1.msra.mxu0 %v4354
      %4385 = vmatprep.subr.mxu0 0.0
      %4386 = vmatpush1.msra.mxu0 %v4355
      %4387 = vmatprep.subr.mxu0 0.0
      %4388 = vmatpush1.msra.mxu0 %v4356
      %4389 = vmatprep.subr.mxu0 0.0
      %4390 = vmatpush1.msra.mxu0 %v4357
      %4391 = vmatprep.subr.mxu0 0.0
      %4392 = vmatpush1.msra.mxu0 %v4358
      %4393 = vmatprep.subr.mxu0 0.0
      %4394 = vmatpush1.msra.mxu0 %v4359
      %4395 = vmatprep.subr.mxu0 0.0
      %4396 = vmatpush1.msra.mxu0 %v4360
      %4397 = vmatprep.subr.mxu0 0.0
      %4398 = vmatpush1.msra.mxu0 0.0
      %4399 = vmatprep.subr.mxu0 0.0
      %4400 = vmatpush1.msra.mxu0 0.0
      %4401 = vmatprep.subr.mxu0 0.0
      %4402 = vmatpush1.msra.mxu0 0.0
      %4403 = vmatprep.subr.mxu0 0.0
      %4404 = vmatpush1.msra.mxu0 0.0
      %4405 = vmatprep.subr.mxu0 0.0
      %4406 = vmatpush1.msra.mxu0 0.0
      %4407 = vmatprep.subr.mxu0 0.0
      %4408 = vmatpush1.msra.mxu0 0.0
      %4409 = vmatprep.subr.mxu0 0.0
      %4410 = vmatpush1.msra.mxu0 0.0
      %4411 = vmatprep.subr.mxu0 0.0
      %4412 = vmatpush1.msra.mxu0 0.0
      %4413 = vmatprep.subr.mxu0 0.0
      %4414 = vmatpush1.msra.mxu0 0.0
      %4415 = vmatprep.subr.mxu0 0.0
      %4416 = vmatpush1.msra.mxu0 0.0
      %4417 = vmatprep.subr.mxu0 0.0
      %4418 = vmatpush1.msra.mxu0 0.0
      %4419 = vmatprep.subr.mxu0 0.0
      %4420 = vmatpush1.msra.mxu0 0.0
      %4421 = vmatprep.subr.mxu0 0.0
      %4422 = vmatpush1.msra.mxu0 0.0
      %4423 = vmatprep.subr.mxu0 0.0
      %4424 = vmatpush1.msra.mxu0 0.0
      %4425 = vmatprep.subr.mxu0 0.0
      %4426 = vmatpush1.msra.mxu0 0.0
      %4427 = vmatprep.subr.mxu0 0.0
      %4428 = vmatpush1.msra.mxu0 0.0
      %4429 = vmatprep.mubr.f32.mxu0 0.0
      %4430 = vmatmul.mubr.f32.gmra.mrb[0].mxu0 %v4343
      %v4431 = vpop.f32.mrb[0].mxu0
      %v4432 = vadd.f32 %v4364, %v4431
      %v4433 = vpop.f32.mrb[0].mxu0
      %4434 = vdwg.mxu0
      %v4435 = vadd.f32 %v4252, %v4432
      %v4436 = vsel %vm1925, %v4435, 0.0
      %4437 = vadd.xlane.f32.xlu0 %v4436
      %v4438 = vpop.xlane.xlu0 %4437
      %v4439 = vmul.f32 %v4438, %v2496
      %v4440 = vsub.f32 %v4435, %v4439
      %v4441 = vmul.f32 %v4440, %v4440
      %v4442 = vsel %vm1925, %v4441, 0.0
      %4443 = vadd.xlane.f32.xlu0 %v4442
      %v4444 = vpop.xlane.xlu0 %4443
      %v4445 = vmul.f32 %v4444, %v2496
      %v4446 = vadd.f32 %v4445, 1e-05
      %v4447 = vrsqrt.pop %v4446
      %v4448 = vmul.f32 %v4440, %v4447
      %v4449 = vlaneseq
      %v4450 = vshrl.u32 %v4449, 7
      %v4451 = vsub.s32 0, %v4450
      %v4452 = vrot.slane %v3234, %v4451
      %v4453 = vmul.f32 %v4448, %v4452
      %v4454 = vlaneseq
      %v4455 = vshrl.u32 %v4454, 7
      %v4456 = vsub.s32 1, %v4455
      %v4457 = vrot.slane %v3234, %v4456
      %v4458 = vadd.f32 %v4453, %v4457
      %v4459 = vld [vmem:[%s22] sm:$0xff]
      %v4460 = vld [vmem:[%s22 + $0x8] sm:$0xff]
      %v4461 = vld [vmem:[%s22 + $0x10] sm:$0xff]
      %v4462 = vld [vmem:[%s22 + $0x18] sm:$0xff]
      %v4463 = vld [vmem:[%s22 + $0x20] sm:$0xff]
      %v4464 = vld [vmem:[%s22 + $0x28] sm:$0xff]
      %v4465 = vld [vmem:[%s22 + $0x30] sm:$0xff]
      %v4466 = vld [vmem:[%s22 + $0x38] sm:$0xff]
      %v4467 = vld [vmem:[%s23] sm:$0x1]
      %v4469 = vlaneseq
      %v4470 = vshrl.u32 %v4469, 7
      %v4471 = vsub.s32 0, %v4470
      %v4472 = vrot.slane %v4467, %v4471
      %v4475 = vsel %vm1925, %v4458, 0
      %4477 = vmatprep.subr.mxu0 0.0
      %4478 = vmatpush1.msra.mxu0 %v4459
      %4479 = vmatprep.subr.mxu0 0.0
      %4480 = vmatpush1.msra.mxu0 %v4460
      %4481 = vmatprep.subr.mxu0 0.0
      %4482 = vmatpush1.msra.mxu0 %v4461
      %4483 = vmatprep.subr.mxu0 0.0
      %4484 = vmatpush1.msra.mxu0 %v4462
      %4485 = vmatprep.subr.mxu0 0.0
      %4486 = vmatpush1.msra.mxu0 %v4463
      %4487 = vmatprep.subr.mxu0 0.0
      %4488 = vmatpush1.msra.mxu0 %v4464
      %4489 = vmatprep.subr.mxu0 0.0
      %4490 = vmatpush1.msra.mxu0 %v4465
      %4491 = vmatprep.subr.mxu0 0.0
      %4492 = vmatpush1.msra.mxu0 %v4466
      %4493 = vmatprep.subr.mxu0 0.0
      %4494 = vmatpush1.msra.mxu0 0.0
      %4495 = vmatprep.subr.mxu0 0.0
      %4496 = vmatpush1.msra.mxu0 0.0
      %4497 = vmatprep.subr.mxu0 0.0
      %4498 = vmatpush1.msra.mxu0 0.0
      %4499 = vmatprep.subr.mxu0 0.0
      %4500 = vmatpush1.msra.mxu0 0.0
      %4501 = vmatprep.subr.mxu0 0.0
      %4502 = vmatpush1.msra.mxu0 0.0
      %4503 = vmatprep.subr.mxu0 0.0
      %4504 = vmatpush1.msra.mxu0 0.0
      %4505 = vmatprep.subr.mxu0 0.0
      %4506 = vmatpush1.msra.mxu0 0.0
      %4507 = vmatprep.subr.mxu0 0.0
      %4508 = vmatpush1.msra.mxu0 0.0
      %4509 = vmatprep.subr.mxu0 0.0
      %4510 = vmatpush1.msra.mxu0 0.0
      %4511 = vmatprep.subr.mxu0 0.0
      %4512 = vmatpush1.msra.mxu0 0.0
      %4513 = vmatprep.subr.mxu0 0.0
      %4514 = vmatpush1.msra.mxu0 0.0
      %4515 = vmatprep.subr.mxu0 0.0
      %4516 = vmatpush1.msra.mxu0 0.0
      %4517 = vmatprep.subr.mxu0 0.0
      %4518 = vmatpush1.msra.mxu0 0.0
      %4519 = vmatprep.subr.mxu0 0.0
      %4520 = vmatpush1.msra.mxu0 0.0
      %4521 = vmatprep.subr.mxu0 0.0
      %4522 = vmatpush1.msra.mxu0 0.0
      %4523 = vmatprep.subr.mxu0 0.0
      %4524 = vmatpush1.msra.mxu0 0.0
      %4525 = vmatprep.subr.mxu0 0.0
      %4526 = vmatpush1.msra.mxu0 0.0
      %4527 = vmatprep.subr.mxu0 0.0
      %4528 = vmatpush1.msra.mxu0 0.0
      %4529 = vmatprep.subr.mxu0 0.0
      %4530 = vmatpush1.msra.mxu0 0.0
      %4531 = vmatprep.subr.mxu0 0.0
      %4532 = vmatpush1.msra.mxu0 0.0
      %4533 = vmatprep.subr.mxu0 0.0
      %4534 = vmatpush1.msra.mxu0 0.0
      %4535 = vmatprep.subr.mxu0 0.0
      %4536 = vmatpush1.msra.mxu0 0.0
      %4537 = vmatprep.subr.mxu0 0.0
      %4538 = vmatpush1.msra.mxu0 0.0
      %4539 = vmatprep.subr.mxu0 0.0
      %4540 = vmatpush1.msra.mxu0 0.0
      %4541 = vmatprep.mubr.f32.mxu0 0.0
      %4542 = vmatmul.mubr.f32.gmra.mrb[0].mxu0 %v4475
      %v4543 = vpop.f32.mrb[0].mxu0
      %v4544 = vadd.f32 %v4472, %v4543
      %v4545 = vpop.f32.mrb[0].mxu0
      %4546 = vdwg.mxu0
      %4547 = vst [vmem:[%s752] sm:$0xff] %v4544
      %p4548 = scmp.lt.s32.totalorder %s35, 1
      %s4549 = scalar_select %p4548, %s35, 1
      %s4550 = smul.addr %s4549, 8
      %s4551 = scalar_lea.vmem %s24, %s4550
      // Predicated region
      $region124: #{forward.1} parent=115 // pred_check
        %p4552 = pneg %p567
      $region125: #{forward.1} parent=115 // pred_check_branch
        %4554 = sbr.rel (%p4552) target = $region127
      $region126: #{forward.1} parent=115 // pred_region
        _
      $region127: #{forward.1} parent=115 // pred_fallthru
        _
    $region116: #{forward.1} parent=5 // pred_fallthru
      _
    %p4555 = scmp.le.s32.totalorder 2, %s30
    // Predicated region
    $region128: #{forward.1} parent=5 // pred_check
      %p4556 = pneg %p4555
    $region129: #{forward.1} parent=5 // pred_check_branch
      %4558 = sbr.rel (%p4556) target = $region131
    $region130: #{forward.1} parent=5 // pred_region
      %s4559 = ssub.s32 %s30, 2
      // Predicated region
      $region132: #{forward.1} parent=130 // pred_check
        %p4560 = pneg %p573
      $region133: #{forward.1} parent=130 // pred_check_branch
        %4562 = sbr.rel (%p4560) target = $region135
      $region134: #{forward.1} parent=130 // pred_region
        %p4563 = scmp.lt.s32.totalorder %s36, 1
        %s4564 = scalar_select %p4563, %s36, 1
        %s4565 = smul.addr %s4564, 8
        %s4566 = scalar_lea.vmem %s24, %s4565
      $region135: #{forward.1} parent=130 // pred_fallthru
        _
    $region131: #{forward.1} parent=5 // pred_fallthru
      _
  $region6: #{forward.1} parent=0 // loop_footer
    %s34 = sadd.s32 1, %s30
  $region7: #{forward.1} parent=0 // loop_footer_branch
    %29 = sbr.rel target = $region3
  $region8: #{forward.1} parent=0 // loop_exit
    _

</llo_original>
